<compile_context>
chip_gen: v5e
topology: v5e:2x2
jax: 0.10.0
libtpu: 0.0.40
codegen_flags: <defaults>
</compile_context>

<pallas_src>
import functools

import jax
import jax.numpy as jnp
import numpy as np
from jax.experimental import pallas as pl
from jax.experimental.pallas import tpu as pltpu


def _round_up(x, m):
    return (x + m - 1) // m * m


# ----------------------------------------------------------------------------
# Pallas kernel: one grid step == tt timesteps of the LSTM over one batch block.
# h/c live in the (time-invariant block index) h_n / c_n output refs, which stay
# resident in VMEM across the sequential time axis; within a chunk they are
# carried as values.  Pre-gates gx = x @ W_ih^T + b are precomputed outside.
# ----------------------------------------------------------------------------
def _lstm_chunk_kernel(maxlen_ref, len_ref, gx_ref, whh_hbm_ref,
                       out_ref, hn_ref, cn_ref, whh_vmem, whh_sem, *, tt, hp):
    b = pl.program_id(0)
    c = pl.program_id(1)
    t0 = c * tt

    @pl.when(c == 0)
    def _():
        # First chunk of this batch block: zero the resident state and pull the
        # recurrent weights from HBM into a single-buffered VMEM scratch.
        hn_ref[...] = jnp.zeros_like(hn_ref)
        cn_ref[...] = jnp.zeros_like(cn_ref)
        cp = pltpu.make_async_copy(whh_hbm_ref, whh_vmem, whh_sem)
        cp.start()
        cp.wait()

    # Skip chunks that start past every sequence in this batch block.
    chunk_live = t0 < maxlen_ref[b]

    @pl.when(chunk_live)
    def _():
        lens = len_ref[...]            # (tb, 1) int32, loaded once per chunk
        whh = whh_vmem[...]            # (Hp, 4*Hp) recurrent weights (bf16 by default)
        tb = hn_ref.shape[0]
        h = hn_ref[...]                # carried as values across the unrolled steps
        cs = cn_ref[...]

        for s in range(tt):            # static unroll (tt is a compile-time constant)
            # gates, PyTorch order [i, f, g, o]; each gate is a 128-lane-aligned block.
            gates = gx_ref[s].astype(jnp.float32) + jnp.dot(
                h.astype(whh.dtype), whh, preferred_element_type=jnp.float32)

            i_g = jax.nn.sigmoid(gates[:, 0 * hp:1 * hp])
            f_g = jax.nn.sigmoid(gates[:, 1 * hp:2 * hp])
            g_g = jnp.tanh(gates[:, 2 * hp:3 * hp])
            o_g = jax.nn.sigmoid(gates[:, 3 * hp:4 * hp])

            c_new = f_g * cs + i_g * g_g
            h_new = o_g * jnp.tanh(c_new)

            # Packed-sequence semantics: state advances only while t < length[b];
            # padded positions in the output are exactly zero.
            valid = jnp.broadcast_to((t0 + s) < lens, (tb, hp))
            out_ref[s] = jnp.where(valid, h_new, 0.0).astype(out_ref.dtype)
            h = jnp.where(valid, h_new, h)
            cs = jnp.where(valid, c_new, cs)

        hn_ref[...] = h
        cn_ref[...] = cs

    @pl.when(jnp.logical_not(chunk_live))
    def _():
        out_ref[...] = jnp.zeros_like(out_ref)


def _lstm_pallas(maxlen, len_p, gx, w_hh_t, *, Bp, T_pad, Hp, tt, tb, matmul_dtype):
    """maxlen: (n_b,) i32, len_p: (Bp,1) i32, gx: (T_pad,Bp,4*Hp), w_hh_t: (Hp,4*Hp)."""
    assert Bp % tb == 0, "batch block must divide padded batch"
    assert T_pad % tt == 0, "time chunk must divide padded time"
    n_b = Bp // tb
    n_t = T_pad // tt

    kernel = functools.partial(_lstm_chunk_kernel, tt=tt, hp=Hp)
    out_shapes = (
        jax.ShapeDtypeStruct((T_pad, Bp, Hp), jnp.float32),   # per-step outputs (time-major)
        jax.ShapeDtypeStruct((Bp, Hp), jnp.float32),          # h_n
        jax.ShapeDtypeStruct((Bp, Hp), jnp.float32),          # c_n
    )

    # Explicit VMEM budget (v7x only has 64 MiB of VMEM per TensorCore).
    gx_bytes = np.dtype(gx.dtype).itemsize
    w_bytes = np.dtype(matmul_dtype).itemsize
    vmem_needed = (2 * tt * tb * 4 * Hp * gx_bytes      # gx blocks (double-buffered)
                   + 2 * tt * tb * Hp * 4               # out blocks (double-buffered)
                   + Hp * 4 * Hp * w_bytes              # W_hh scratch (single buffer)
                   + 2 * 2 * tb * Hp * 4                # h_n / c_n
                   + 2 * tb * 4)                        # lengths
    vmem_limit = int(min(64 * 2**20, vmem_needed + 16 * 2**20))

    return pl.pallas_call(
        kernel,
        out_shape=out_shapes,
        grid_spec=pltpu.PrefetchScalarGridSpec(
            num_scalar_prefetch=1,                      # per-batch-block max lengths (SMEM)
            grid=(n_b, n_t),
            in_specs=[
                pl.BlockSpec((tb, 1), lambda b, c, ml: (b, 0)),               # lengths
                pl.BlockSpec((tt, tb, 4 * Hp), lambda b, c, ml: (c, b, 0)),   # pre-gates
                pl.BlockSpec(memory_space=pl.ANY),                            # W_hh (HBM)
            ],
            out_specs=[
                pl.BlockSpec((tt, tb, Hp), lambda b, c, ml: (c, b, 0)),       # output
                pl.BlockSpec((tb, Hp), lambda b, c, ml: (b, 0)),              # h_n (resident)
                pl.BlockSpec((tb, Hp), lambda b, c, ml: (b, 0)),              # c_n (resident)
            ],
            scratch_shapes=[
                pltpu.VMEM((Hp, 4 * Hp), matmul_dtype),   # resident W_hh, single buffer
                pltpu.SemaphoreType.DMA(()),              # its DMA semaphore
            ],
        ),
        compiler_params=pltpu.CompilerParams(
            # batch blocks are independent (v7x megacore); time is a recurrence
            dimension_semantics=("parallel", "arbitrary"),
            vmem_limit_bytes=vmem_limit),
    )(maxlen, len_p, gx, w_hh_t)


# ----------------------------------------------------------------------------
# Parameter init (deterministic, matches the module's __init__ shapes)
# ----------------------------------------------------------------------------
def init_params(key, hidden_size, num_embeddings, embedding_dim,
                num_pos_embedding, pos_embedding_dim):
    ks = jax.random.split(key, 7)
    in_dim = embedding_dim + 2 * pos_embedding_dim
    k = 1.0 / np.sqrt(hidden_size)
    return {
        # nn.Embedding default init: N(0, 1)
        "word_emb": jax.random.normal(ks[0], (num_embeddings, embedding_dim), jnp.float32),
        "pos1_emb": jax.random.normal(ks[1], (num_pos_embedding, pos_embedding_dim), jnp.float32),
        "pos2_emb": jax.random.normal(ks[2], (num_pos_embedding, pos_embedding_dim), jnp.float32),
        # nn.LSTM default init: U(-1/sqrt(H), 1/sqrt(H)); gate order [i, f, g, o]
        "w_ih": jax.random.uniform(ks[3], (4 * hidden_size, in_dim), jnp.float32, -k, k),
        "w_hh": jax.random.uniform(ks[4], (4 * hidden_size, hidden_size), jnp.float32, -k, k),
        "b_ih": jax.random.uniform(ks[5], (4 * hidden_size,), jnp.float32, -k, k),
        "b_hh": jax.random.uniform(ks[6], (4 * hidden_size,), jnp.float32, -k, k),
    }


# ----------------------------------------------------------------------------
# Full forward: embeddings + hoisted input projection (XLA) + Pallas recurrence
# ----------------------------------------------------------------------------
def lstm_encoder_forward(params, word, pos1, pos2, mask, hidden_size,
                         *, tt=16, tb=None, matmul_dtype=jnp.bfloat16):
    """
    word, pos1, pos2, mask: (B, T) int arrays (mask is 0/1, prefix-valid).
    Returns ((output, lengths), (h_n, c_n)) mirroring the PyTorch module.
    Output is padded to full T (positions >= length[b] are exactly 0).
    matmul_dtype: dtype of W_hh / h / streamed pre-gates (bf16 default = full-rate MXU
    and half the HBM traffic for the dominant gx stream; pass jnp.float32 for exactness).
    """
    B, T = word.shape
    H = hidden_size
    Hp = _round_up(H, 128)                 # lane-aligned gate blocks / lane-dense stores

    # Batch padding / sharding.  With B >= 16 the batch splits into two blocks so the
    # "parallel" grid axis lands on both v7x TensorCores.
    if tb is None:
        if B >= 16:
            Bp = _round_up(B, 16)
            tb = Bp // 2
        else:
            Bp = _round_up(B, 8)
            tb = Bp
    else:
        tb = _round_up(tb, 8)
        Bp = _round_up(B, tb)
    assert Bp % tb == 0
    n_b = Bp // tb

    tt = max(1, min(tt, T))                # time chunk (leading block dim: no 8-multiple rule)
    T_pad = _round_up(T, tt)

    # ---- embeddings ----
    w = jnp.take(params["word_emb"], word, axis=0)      # (B, T, E)
    p1 = jnp.take(params["pos1_emb"], pos1, axis=0)     # (B, T, P)
    p2 = jnp.take(params["pos2_emb"], pos2, axis=0)     # (B, T, P)
    emb = jnp.concatenate([w, p1, p2], axis=-1).astype(jnp.float32)   # (B, T, D)
    D = emb.shape[-1]

    # ---- weight layout: each gate occupies its own 128-lane-aligned Hp-wide block ----
    w_ih_g = params["w_ih"].reshape(4, H, D)
    w_ih_g = jnp.pad(w_ih_g, ((0, 0), (0, Hp - H), (0, 0)))
    w_ih_t = jnp.transpose(w_ih_g, (2, 0, 1)).reshape(D, 4 * Hp)

    w_hh_g = params["w_hh"].reshape(4, H, H)
    w_hh_g = jnp.pad(w_hh_g, ((0, 0), (0, Hp - H), (0, 0)))
    w_hh_t = jnp.transpose(w_hh_g, (2, 0, 1)).reshape(H, 4 * Hp)
    w_hh_t = jnp.pad(w_hh_t, ((0, Hp - H), (0, 0))).astype(matmul_dtype)   # (Hp, 4*Hp)

    bias = (params["b_ih"] + params["b_hh"]).reshape(4, H)
    bias = jnp.pad(bias, ((0, 0), (0, Hp - H))).reshape(1, 1, 4 * Hp)

    # ---- hoisted input projection: ONE big (B*T, D) x (D, 4*Hp) matmul outside the loop.
    # Bias is added in f32, then the stream is cast to matmul_dtype (bf16 halves HBM bytes).
    # TODO(synk): on v5e, if the gx stream is still HBM-bound, fuse this projection back
    # into the kernel per chunk (stream emb (tt,tb,D) instead of gx (tt,tb,4*Hp)).
    gx = jnp.dot(emb.reshape(B * T, D).astype(matmul_dtype),
                 w_ih_t.astype(matmul_dtype),
                 preferred_element_type=jnp.float32,
                 precision=jax.lax.Precision.HIGHEST).reshape(B, T, 4 * Hp)
    gx = (gx + bias).astype(matmul_dtype)
    gx = jnp.transpose(gx, (1, 0, 2))                              # time-major (T, B, 4*Hp)
    gx = jnp.pad(gx, ((0, T_pad - T), (0, Bp - B), (0, 0)))        # (T_pad, Bp, 4*Hp)

    # Lengths (prefix-valid mask assumed: packed-sequence semantics).
    lengths = jnp.sum(mask, axis=-1).astype(jnp.int32)             # (B,)
    len_p = jnp.pad(lengths, (0, Bp - B)).reshape(Bp, 1)           # padded rows: len 0
    maxlen = jnp.max(len_p.reshape(n_b, tb), axis=1)               # (n_b,) per-block max

    out_p, hn_p, cn_p = _lstm_pallas(maxlen, len_p, gx, w_hh_t,
                                     Bp=Bp, T_pad=T_pad, Hp=Hp, tt=tt, tb=tb,
                                     matmul_dtype=matmul_dtype)

    output = jnp.transpose(out_p[:T, :B, :H], (1, 0, 2))           # (B, T, H), batch-first
    h_n = hn_p[:B, :H]
    c_n = cn_p[:B, :H]
    # TODO(synk): pad_packed_sequence trims the output to max(lengths); trimming here would
    # need a host sync or a static max_len argument, so the full-T zero-padded output is returned.
    return (output, lengths), (h_n, c_n)


# ----------------------------------------------------------------------------
# Pure-JAX reference (lax.scan) for the correctness check
# ----------------------------------------------------------------------------
def _reference_forward(params, word, pos1, pos2, mask, hidden_size):
    H = hidden_size
    w = jnp.take(params["word_emb"], word, axis=0)
    p1 = jnp.take(params["pos1_emb"], pos1, axis=0)
    p2 = jnp.take(params["pos2_emb"], pos2, axis=0)
    emb = jnp.concatenate([w, p1, p2], axis=-1)                    # (B, T, D)
    x_t = jnp.transpose(emb, (1, 0, 2))                            # (T, B, D)
    m_t = jnp.transpose(mask.astype(jnp.float32), (1, 0))[:, :, None]

    w_ih_t = params["w_ih"].T
    w_hh_t = params["w_hh"].T
    bias = params["b_ih"] + params["b_hh"]
    B = word.shape[0]
    hi = jax.lax.Precision.HIGHEST

    def step(carry, xm):
        h, c = carry
        x, m = xm
        gates = (jnp.dot(x, w_ih_t, precision=hi)
                 + jnp.dot(h, w_hh_t, precision=hi) + bias)
        i = jax.nn.sigmoid(gates[:, 0 * H:1 * H])
        f = jax.nn.sigmoid(gates[:, 1 * H:2 * H])
        g = jnp.tanh(gates[:, 2 * H:3 * H])
        o = jax.nn.sigmoid(gates[:, 3 * H:4 * H])
        c_new = f * c + i * g
        h_new = o * jnp.tanh(c_new)
        h_upd = m * h_new + (1.0 - m) * h
        c_upd = m * c_new + (1.0 - m) * c
        return (h_upd, c_upd), m * h_new

    init = (jnp.zeros((B, H), jnp.float32), jnp.zeros((B, H), jnp.float32))
    (h_n, c_n), out_t = jax.lax.scan(step, init, (x_t, m_t))
    return jnp.transpose(out_t, (1, 0, 2)), h_n, c_n


if __name__ == "__main__":
    # Small shapes consistent with the module's forward.
    B, T = 2, 24
    hidden_size = 32
    num_embeddings = 100
    embedding_dim = 16
    num_pos_embedding = 128 * 2
    pos_embedding_dim = 10

    params = init_params(jax.random.PRNGKey(0), hidden_size, num_embeddings,
                         embedding_dim, num_pos_embedding, pos_embedding_dim)

    dk = jax.random.split(jax.random.PRNGKey(0), 4)
    word = jax.random.randint(dk[0], (B, T), 0, num_embeddings, jnp.int32)
    pos1 = jax.random.randint(dk[1], (B, T), 0, num_pos_embedding, jnp.int32)
    pos2 = jax.random.randint(dk[2], (B, T), 0, num_pos_embedding, jnp.int32)
    # Lengths sorted descending (pack_padded_sequence, enforce_sorted=True); shorter than T
    # so the "skip finished chunk" path is exercised.
    lengths_in = jnp.array([10, 6], dtype=jnp.int32)
    mask = (jnp.arange(T)[None, :] < lengths_in[:, None]).astype(jnp.int32)

    # Default (bf16 matmul / bf16 gx stream) path.
    fwd = jax.jit(functools.partial(lstm_encoder_forward, hidden_size=hidden_size))
    (output, lens), (h_n, c_n) = fwd(params, word, pos1, pos2, mask)
    jax.block_until_ready((output, lens, h_n, c_n))

    # Exact-dtype (f32) path.
    fwd32 = jax.jit(functools.partial(lstm_encoder_forward, hidden_size=hidden_size,
                                      matmul_dtype=jnp.float32))
    (out32, lens32), (hn32, cn32) = fwd32(params, word, pos1, pos2, mask)
    jax.block_until_ready((out32, lens32, hn32, cn32))

    # Correctness checks against the pure-JAX reference.
    ref_out, ref_hn, ref_cn = _reference_forward(params, word, pos1, pos2, mask, hidden_size)
    # f32 path: tight-ish (MXU f32 path may still be multi-pass bf16 internally).
    np.testing.assert_allclose(np.asarray(out32), np.asarray(ref_out), rtol=1e-2, atol=1e-2)
    np.testing.assert_allclose(np.asarray(hn32), np.asarray(ref_hn), rtol=1e-2, atol=1e-2)
    np.testing.assert_allclose(np.asarray(cn32), np.asarray(ref_cn), rtol=1e-2, atol=1e-2)
    # bf16 default path: looser tolerance (bf16 gx stream + bf16 recurrent matmul).
    np.testing.assert_allclose(np.asarray(output), np.asarray(ref_out), rtol=4e-2, atol=4e-2)
    np.testing.assert_allclose(np.asarray(h_n), np.asarray(ref_hn), rtol=4e-2, atol=4e-2)
    np.testing.assert_allclose(np.asarray(c_n), np.asarray(ref_cn), rtol=4e-2, atol=4e-2)
    np.testing.assert_array_equal(np.asarray(lens), np.asarray(lengths_in))
    # Packed-sequence padding must be exactly zero (also covers the skipped-chunk path).
    np.testing.assert_array_equal(np.asarray(output)[0, 10:, :], 0.0)
    np.testing.assert_array_equal(np.asarray(output)[1, 6:, :], 0.0)

    print("KERNEL_OK")
</pallas_src>

<mosaic_0001>
module attributes {stable_mosaic.version = 11 : i64} {
  func.func @_lstm_chunk_kernel(%arg0: i32, %arg1: i32, %arg2: memref<1xi32, #tpu.memory_space<smem>>, %arg3: memref<8x1xi32, #tpu.memory_space<vmem>>, %arg4: memref<16x8x512xbf16, #tpu.memory_space<vmem>>, %arg5: memref<128x512xbf16, #tpu.memory_space<any>>, %arg6: memref<16x8x128xf32, #tpu.memory_space<vmem>>, %arg7: memref<8x128xf32, #tpu.memory_space<vmem>>, %arg8: memref<8x128xf32, #tpu.memory_space<vmem>>, %arg9: memref<128x512xbf16, #tpu.memory_space<vmem>>, %arg10: memref<!tpu.dma_semaphore, #tpu.memory_space<semaphore_mem>>) attributes {dimension_semantics = [#tpu.dimension_semantics<parallel>, #tpu.dimension_semantics<arbitrary>], iteration_bounds = array<i64: 1, 2>, scalar_prefetch = 1 : i64, scratch_operands = 2 : i64, tpu.core_type = #tpu.core_type<tc>, window_params = [{transform_indices = @transform_0, window_bounds = array<i64: 8, 1>}, {transform_indices = @transform_1, window_bounds = array<i64: 16, 8, 512>}, {}, {transform_indices = @transform_3, window_bounds = array<i64: 16, 8, 128>}, {transform_indices = @transform_4, window_bounds = array<i64: 8, 128>}, {transform_indices = @transform_5, window_bounds = array<i64: 8, 128>}]} {
    %c16_i32 = arith.constant 16 : i32
    %0 = arith.muli %arg1, %c16_i32 : i32
    %c0_i32 = arith.constant 0 : i32
    %1 = arith.cmpi eq, %arg1, %c0_i32 : i32
    %2 = arith.extui %1 : i1 to i32
    %c0_i32_0 = arith.constant 0 : i32
    %3 = arith.cmpi ne, %2, %c0_i32_0 : i32
    scf.if %3 {
      %cst = arith.constant 0.000000e+00 : f32
      %12 = vector.broadcast %cst : f32 to vector<8x128xf32>
      %c0 = arith.constant 0 : index
      %c0_3 = arith.constant 0 : index
      %13 = vector.load %arg7[%c0, %c0_3] : memref<8x128xf32, #tpu.memory_space<vmem>>, vector<8x128xf32>
      tpu.vector_store %arg7[%c0, %c0_3], %12 {strides = array<i32>} : memref<8x128xf32, #tpu.memory_space<vmem>>, vector<8x128xf32>,
      %cst_4 = arith.constant 0.000000e+00 : f32
      %14 = vector.broadcast %cst_4 : f32 to vector<8x128xf32>
      %c0_5 = arith.constant 0 : index
      %c0_6 = arith.constant 0 : index
      %15 = vector.load %arg8[%c0_5, %c0_6] : memref<8x128xf32, #tpu.memory_space<vmem>>, vector<8x128xf32>
      tpu.vector_store %arg8[%c0_5, %c0_6], %14 {strides = array<i32>} : memref<8x128xf32, #tpu.memory_space<vmem>>, vector<8x128xf32>,
      tpu.enqueue_dma source(%arg5 : memref<128x512xbf16, #tpu.memory_space<any>>) target(%arg9 : memref<128x512xbf16, #tpu.memory_space<vmem>>) target_semaphore(%arg10 : memref<!tpu.dma_semaphore, #tpu.memory_space<semaphore_mem>>)
      tpu.wait_dma2 semaphore(%arg10 : memref<!tpu.dma_semaphore, #tpu.memory_space<semaphore_mem>>) src(%arg5 : memref<128x512xbf16, #tpu.memory_space<any>>) dst(%arg9 : memref<128x512xbf16, #tpu.memory_space<vmem>>)
    } else {
    }
    %4 = arith.index_cast %arg0 : i32 to index
    %5 = memref.load %arg2[%4] : memref<1xi32, #tpu.memory_space<smem>>
    %6 = arith.cmpi slt, %0, %5 : i32
    %7 = arith.extui %6 : i1 to i32
    %c0_i32_1 = arith.constant 0 : i32
    %8 = arith.cmpi ne, %7, %c0_i32_1 : i32
    scf.if %8 {
      %c0 = arith.constant 0 : index
      %c0_3 = arith.constant 0 : index
      %12 = vector.load %arg3[%c0, %c0_3] : memref<8x1xi32, #tpu.memory_space<vmem>>, vector<8x1xi32>
      %c0_4 = arith.constant 0 : index
      %c0_5 = arith.constant 0 : index
      %13 = vector.load %arg9[%c0_4, %c0_5] : memref<128x512xbf16, #tpu.memory_space<vmem>>, vector<128x512xbf16>
      %c0_6 = arith.constant 0 : index
      %c0_7 = arith.constant 0 : index
      %14 = vector.load %arg7[%c0_6, %c0_7] : memref<8x128xf32, #tpu.memory_space<vmem>>, vector<8x128xf32>
      %c0_8 = arith.constant 0 : index
      %c0_9 = arith.constant 0 : index
      %15 = vector.load %arg8[%c0_8, %c0_9] : memref<8x128xf32, #tpu.memory_space<vmem>>, vector<8x128xf32>
      %c0_10 = arith.constant 0 : index
      %c0_11 = arith.constant 0 : index
      %c0_12 = arith.constant 0 : index
      %16 = vector.load %arg4[%c0_10, %c0_11, %c0_12] : memref<16x8x512xbf16, #tpu.memory_space<vmem>>, vector<1x8x512xbf16>
      %17 = vector.shape_cast %16 : vector<1x8x512xbf16> to vector<8x512xbf16>
      %18 = arith.extf %17 : vector<8x512xbf16> to vector<8x512xf32>
      %19 = arith.truncf %14 : vector<8x128xf32> to vector<8x128xbf16>
      %cst = arith.constant dense<0.000000e+00> : vector<8x512xf32>
      %20 = tpu.matmul %19, %13, %cst {dimension_numbers = #tpu.dot_dimension_numbers<[1], [0], [0], [1], [0, 0, 1, 1], [], []>} : vector<8x128xbf16>, vector<128x512xbf16>, vector<8x512xf32> -> vector<8x512xf32>
      %21 = arith.addf %18, %20 : vector<8x512xf32>
      %22 = vector.extract_strided_slice %21 {offsets = [0, 0], sizes = [8, 128], strides = [1, 1]} : vector<8x512xf32> to vector<8x128xf32>
      %23 = arith.negf %22 : vector<8x128xf32>
      %24 = math.exp %23 : vector<8x128xf32>
      %cst_13 = arith.constant 1.000000e+00 : f32
      %25 = vector.broadcast %cst_13 : f32 to vector<8x128xf32>
      %26 = arith.addf %25, %24 : vector<8x128xf32>
      %27 = arith.divf %25, %26 : vector<8x128xf32>
      %28 = vector.extract_strided_slice %21 {offsets = [0, 128], sizes = [8, 128], strides = [1, 1]} : vector<8x512xf32> to vector<8x128xf32>
      %29 = arith.negf %28 : vector<8x128xf32>
      %30 = math.exp %29 : vector<8x128xf32>
      %cst_14 = arith.constant 1.000000e+00 : f32
      %31 = vector.broadcast %cst_14 : f32 to vector<8x128xf32>
      %32 = arith.addf %31, %30 : vector<8x128xf32>
      %33 = arith.divf %31, %32 : vector<8x128xf32>
      %34 = vector.extract_strided_slice %21 {offsets = [0, 256], sizes = [8, 128], strides = [1, 1]} : vector<8x512xf32> to vector<8x128xf32>
      %35 = math.tanh %34 : vector<8x128xf32>
      %36 = vector.extract_strided_slice %21 {offsets = [0, 384], sizes = [8, 128], strides = [1, 1]} : vector<8x512xf32> to vector<8x128xf32>
      %37 = arith.negf %36 : vector<8x128xf32>
      %38 = math.exp %37 : vector<8x128xf32>
      %cst_15 = arith.constant 1.000000e+00 : f32
      %39 = vector.broadcast %cst_15 : f32 to vector<8x128xf32>
      %40 = arith.addf %39, %38 : vector<8x128xf32>
      %41 = arith.divf %39, %40 : vector<8x128xf32>
      %42 = arith.mulf %33, %15 : vector<8x128xf32>
      %43 = arith.mulf %27, %35 : vector<8x128xf32>
      %44 = arith.addf %42, %43 : vector<8x128xf32>
      %45 = math.tanh %44 : vector<8x128xf32>
      %46 = arith.mulf %41, %45 : vector<8x128xf32>
      %c0_i32_16 = arith.constant 0 : i32
      %47 = arith.addi %0, %c0_i32_16 : i32
      %48 = vector.broadcast %47 : i32 to vector<8x1xi32>
      %49 = arith.cmpi slt, %48, %12 : vector<8x1xi32>
      %50 = vector.shape_cast %49 : vector<8x1xi1> to vector<8x1xi1>
      %51 = vector.broadcast %50 : vector<8x1xi1> to vector<8x128xi1>
      %cst_17 = arith.constant 0.000000e+00 : f32
      %52 = vector.broadcast %cst_17 : f32 to vector<8x128xf32>
      %53 = arith.select %51, %46, %52 : vector<8x128xi1>, vector<8x128xf32>
      %c0_18 = arith.constant 0 : index
      %c0_19 = arith.constant 0 : index
      %c0_20 = arith.constant 0 : index
      %54 = vector.load %arg6[%c0_18, %c0_19, %c0_20] : memref<16x8x128xf32, #tpu.memory_space<vmem>>, vector<1x8x128xf32>
      %55 = vector.shape_cast %54 : vector<1x8x128xf32> to vector<8x128xf32>
      %56 = vector.shape_cast %53 : vector<8x128xf32> to vector<1x8x128xf32>
      tpu.vector_store %arg6[%c0_18, %c0_19, %c0_20], %56 {strides = array<i32>} : memref<16x8x128xf32, #tpu.memory_space<vmem>>, vector<1x8x128xf32>,
      %57 = arith.select %51, %46, %14 : vector<8x128xi1>, vector<8x128xf32>
      %58 = arith.select %51, %44, %15 : vector<8x128xi1>, vector<8x128xf32>
      %c1 = arith.constant 1 : index
      %c0_21 = arith.constant 0 : index
      %c0_22 = arith.constant 0 : index
      %59 = vector.load %arg4[%c1, %c0_21, %c0_22] : memref<16x8x512xbf16, #tpu.memory_space<vmem>>, vector<1x8x512xbf16>
      %60 = vector.shape_cast %59 : vector<1x8x512xbf16> to vector<8x512xbf16>
      %61 = arith.extf %60 : vector<8x512xbf16> to vector<8x512xf32>
      %62 = arith.truncf %57 : vector<8x128xf32> to vector<8x128xbf16>
      %cst_23 = arith.constant dense<0.000000e+00> : vector<8x512xf32>
      %63 = tpu.matmul %62, %13, %cst_23 {dimension_numbers = #tpu.dot_dimension_numbers<[1], [0], [0], [1], [0, 0, 1, 1], [], []>} : vector<8x128xbf16>, vector<128x512xbf16>, vector<8x512xf32> -> vector<8x512xf32>
      %64 = arith.addf %61, %63 : vector<8x512xf32>
      %65 = vector.extract_strided_slice %64 {offsets = [0, 0], sizes = [8, 128], strides = [1, 1]} : vector<8x512xf32> to vector<8x128xf32>
      %66 = arith.negf %65 : vector<8x128xf32>
      %67 = math.exp %66 : vector<8x128xf32>
      %cst_24 = arith.constant 1.000000e+00 : f32
      %68 = vector.broadcast %cst_24 : f32 to vector<8x128xf32>
      %69 = arith.addf %68, %67 : vector<8x128xf32>
      %70 = arith.divf %68, %69 : vector<8x128xf32>
      %71 = vector.extract_strided_slice %64 {offsets = [0, 128], sizes = [8, 128], strides = [1, 1]} : vector<8x512xf32> to vector<8x128xf32>
      %72 = arith.negf %71 : vector<8x128xf32>
      %73 = math.exp %72 : vector<8x128xf32>
      %cst_25 = arith.constant 1.000000e+00 : f32
      %74 = vector.broadcast %cst_25 : f32 to vector<8x128xf32>
      %75 = arith.addf %74, %73 : vector<8x128xf32>
      %76 = arith.divf %74, %75 : vector<8x128xf32>
      %77 = vector.extract_strided_slice %64 {offsets = [0, 256], sizes = [8, 128], strides = [1, 1]} : vector<8x512xf32> to vector<8x128xf32>
      %78 = math.tanh %77 : vector<8x128xf32>
      %79 = vector.extract_strided_slice %64 {offsets = [0, 384], sizes = [8, 128], strides = [1, 1]} : vector<8x512xf32> to vector<8x128xf32>
      %80 = arith.negf %79 : vector<8x128xf32>
      %81 = math.exp %80 : vector<8x128xf32>
      %cst_26 = arith.constant 1.000000e+00 : f32
      %82 = vector.broadcast %cst_26 : f32 to vector<8x128xf32>
      %83 = arith.addf %82, %81 : vector<8x128xf32>
      %84 = arith.divf %82, %83 : vector<8x128xf32>
      %85 = arith.mulf %76, %58 : vector<8x128xf32>
      %86 = arith.mulf %70, %78 : vector<8x128xf32>
      %87 = arith.addf %85, %86 : vector<8x128xf32>
      %88 = math.tanh %87 : vector<8x128xf32>
      %89 = arith.mulf %84, %88 : vector<8x128xf32>
      %c1_i32 = arith.constant 1 : i32
      %90 = arith.addi %0, %c1_i32 : i32
      %91 = vector.broadcast %90 : i32 to vector<8x1xi32>
      %92 = arith.cmpi slt, %91, %12 : vector<8x1xi32>
      %93 = vector.shape_cast %92 : vector<8x1xi1> to vector<8x1xi1>
      %94 = vector.broadcast %93 : vector<8x1xi1> to vector<8x128xi1>
      %cst_27 = arith.constant 0.000000e+00 : f32
      %95 = vector.broadcast %cst_27 : f32 to vector<8x128xf32>
      %96 = arith.select %94, %89, %95 : vector<8x128xi1>, vector<8x128xf32>
      %c1_28 = arith.constant 1 : index
      %c0_29 = arith.constant 0 : index
      %c0_30 = arith.constant 0 : index
      %97 = vector.load %arg6[%c1_28, %c0_29, %c0_30] : memref<16x8x128xf32, #tpu.memory_space<vmem>>, vector<1x8x128xf32>
      %98 = vector.shape_cast %97 : vector<1x8x128xf32> to vector<8x128xf32>
      %99 = vector.shape_cast %96 : vector<8x128xf32> to vector<1x8x128xf32>
      tpu.vector_store %arg6[%c1_28, %c0_29, %c0_30], %99 {strides = array<i32>} : memref<16x8x128xf32, #tpu.memory_space<vmem>>, vector<1x8x128xf32>,
      %100 = arith.select %94, %89, %57 : vector<8x128xi1>, vector<8x128xf32>
      %101 = arith.select %94, %87, %58 : vector<8x128xi1>, vector<8x128xf32>
      %c2 = arith.constant 2 : index
      %c0_31 = arith.constant 0 : index
      %c0_32 = arith.constant 0 : index
      %102 = vector.load %arg4[%c2, %c0_31, %c0_32] : memref<16x8x512xbf16, #tpu.memory_space<vmem>>, vector<1x8x512xbf16>
      %103 = vector.shape_cast %102 : vector<1x8x512xbf16> to vector<8x512xbf16>
      %104 = arith.extf %103 : vector<8x512xbf16> to vector<8x512xf32>
      %105 = arith.truncf %100 : vector<8x128xf32> to vector<8x128xbf16>
      %cst_33 = arith.constant dense<0.000000e+00> : vector<8x512xf32>
      %106 = tpu.matmul %105, %13, %cst_33 {dimension_numbers = #tpu.dot_dimension_numbers<[1], [0], [0], [1], [0, 0, 1, 1], [], []>} : vector<8x128xbf16>, vector<128x512xbf16>, vector<8x512xf32> -> vector<8x512xf32>
      %107 = arith.addf %104, %106 : vector<8x512xf32>
      %108 = vector.extract_strided_slice %107 {offsets = [0, 0], sizes = [8, 128], strides = [1, 1]} : vector<8x512xf32> to vector<8x128xf32>
      %109 = arith.negf %108 : vector<8x128xf32>
      %110 = math.exp %109 : vector<8x128xf32>
      %cst_34 = arith.constant 1.000000e+00 : f32
      %111 = vector.broadcast %cst_34 : f32 to vector<8x128xf32>
      %112 = arith.addf %111, %110 : vector<8x128xf32>
      %113 = arith.divf %111, %112 : vector<8x128xf32>
      %114 = vector.extract_strided_slice %107 {offsets = [0, 128], sizes = [8, 128], strides = [1, 1]} : vector<8x512xf32> to vector<8x128xf32>
      %115 = arith.negf %114 : vector<8x128xf32>
      %116 = math.exp %115 : vector<8x128xf32>
      %cst_35 = arith.constant 1.000000e+00 : f32
      %117 = vector.broadcast %cst_35 : f32 to vector<8x128xf32>
      %118 = arith.addf %117, %116 : vector<8x128xf32>
      %119 = arith.divf %117, %118 : vector<8x128xf32>
      %120 = vector.extract_strided_slice %107 {offsets = [0, 256], sizes = [8, 128], strides = [1, 1]} : vector<8x512xf32> to vector<8x128xf32>
      %121 = math.tanh %120 : vector<8x128xf32>
      %122 = vector.extract_strided_slice %107 {offsets = [0, 384], sizes = [8, 128], strides = [1, 1]} : vector<8x512xf32> to vector<8x128xf32>
      %123 = arith.negf %122 : vector<8x128xf32>
      %124 = math.exp %123 : vector<8x128xf32>
      %cst_36 = arith.constant 1.000000e+00 : f32
      %125 = vector.broadcast %cst_36 : f32 to vector<8x128xf32>
      %126 = arith.addf %125, %124 : vector<8x128xf32>
      %127 = arith.divf %125, %126 : vector<8x128xf32>
      %128 = arith.mulf %119, %101 : vector<8x128xf32>
      %129 = arith.mulf %113, %121 : vector<8x128xf32>
      %130 = arith.addf %128, %129 : vector<8x128xf32>
      %131 = math.tanh %130 : vector<8x128xf32>
      %132 = arith.mulf %127, %131 : vector<8x128xf32>
      %c2_i32 = arith.constant 2 : i32
      %133 = arith.addi %0, %c2_i32 : i32
      %134 = vector.broadcast %133 : i32 to vector<8x1xi32>
      %135 = arith.cmpi slt, %134, %12 : vector<8x1xi32>
      %136 = vector.shape_cast %135 : vector<8x1xi1> to vector<8x1xi1>
      %137 = vector.broadcast %136 : vector<8x1xi1> to vector<8x128xi1>
      %cst_37 = arith.constant 0.000000e+00 : f32
      %138 = vector.broadcast %cst_37 : f32 to vector<8x128xf32>
      %139 = arith.select %137, %132, %138 : vector<8x128xi1>, vector<8x128xf32>
      %c2_38 = arith.constant 2 : index
      %c0_39 = arith.constant 0 : index
      %c0_40 = arith.constant 0 : index
      %140 = vector.load %arg6[%c2_38, %c0_39, %c0_40] : memref<16x8x128xf32, #tpu.memory_space<vmem>>, vector<1x8x128xf32>
      %141 = vector.shape_cast %140 : vector<1x8x128xf32> to vector<8x128xf32>
      %142 = vector.shape_cast %139 : vector<8x128xf32> to vector<1x8x128xf32>
      tpu.vector_store %arg6[%c2_38, %c0_39, %c0_40], %142 {strides = array<i32>} : memref<16x8x128xf32, #tpu.memory_space<vmem>>, vector<1x8x128xf32>,
      %143 = arith.select %137, %132, %100 : vector<8x128xi1>, vector<8x128xf32>
      %144 = arith.select %137, %130, %101 : vector<8x128xi1>, vector<8x128xf32>
      %c3 = arith.constant 3 : index
      %c0_41 = arith.constant 0 : index
      %c0_42 = arith.constant 0 : index
      %145 = vector.load %arg4[%c3, %c0_41, %c0_42] : memref<16x8x512xbf16, #tpu.memory_space<vmem>>, vector<1x8x512xbf16>
      %146 = vector.shape_cast %145 : vector<1x8x512xbf16> to vector<8x512xbf16>
      %147 = arith.extf %146 : vector<8x512xbf16> to vector<8x512xf32>
      %148 = arith.truncf %143 : vector<8x128xf32> to vector<8x128xbf16>
      %cst_43 = arith.constant dense<0.000000e+00> : vector<8x512xf32>
      %149 = tpu.matmul %148, %13, %cst_43 {dimension_numbers = #tpu.dot_dimension_numbers<[1], [0], [0], [1], [0, 0, 1, 1], [], []>} : vector<8x128xbf16>, vector<128x512xbf16>, vector<8x512xf32> -> vector<8x512xf32>
      %150 = arith.addf %147, %149 : vector<8x512xf32>
      %151 = vector.extract_strided_slice %150 {offsets = [0, 0], sizes = [8, 128], strides = [1, 1]} : vector<8x512xf32> to vector<8x128xf32>
      %152 = arith.negf %151 : vector<8x128xf32>
      %153 = math.exp %152 : vector<8x128xf32>
      %cst_44 = arith.constant 1.000000e+00 : f32
      %154 = vector.broadcast %cst_44 : f32 to vector<8x128xf32>
      %155 = arith.addf %154, %153 : vector<8x128xf32>
      %156 = arith.divf %154, %155 : vector<8x128xf32>
      %157 = vector.extract_strided_slice %150 {offsets = [0, 128], sizes = [8, 128], strides = [1, 1]} : vector<8x512xf32> to vector<8x128xf32>
      %158 = arith.negf %157 : vector<8x128xf32>
      %159 = math.exp %158 : vector<8x128xf32>
      %cst_45 = arith.constant 1.000000e+00 : f32
      %160 = vector.broadcast %cst_45 : f32 to vector<8x128xf32>
      %161 = arith.addf %160, %159 : vector<8x128xf32>
      %162 = arith.divf %160, %161 : vector<8x128xf32>
      %163 = vector.extract_strided_slice %150 {offsets = [0, 256], sizes = [8, 128], strides = [1, 1]} : vector<8x512xf32> to vector<8x128xf32>
      %164 = math.tanh %163 : vector<8x128xf32>
      %165 = vector.extract_strided_slice %150 {offsets = [0, 384], sizes = [8, 128], strides = [1, 1]} : vector<8x512xf32> to vector<8x128xf32>
      %166 = arith.negf %165 : vector<8x128xf32>
      %167 = math.exp %166 : vector<8x128xf32>
      %cst_46 = arith.constant 1.000000e+00 : f32
      %168 = vector.broadcast %cst_46 : f32 to vector<8x128xf32>
      %169 = arith.addf %168, %167 : vector<8x128xf32>
      %170 = arith.divf %168, %169 : vector<8x128xf32>
      %171 = arith.mulf %162, %144 : vector<8x128xf32>
      %172 = arith.mulf %156, %164 : vector<8x128xf32>
      %173 = arith.addf %171, %172 : vector<8x128xf32>
      %174 = math.tanh %173 : vector<8x128xf32>
      %175 = arith.mulf %170, %174 : vector<8x128xf32>
      %c3_i32 = arith.constant 3 : i32
      %176 = arith.addi %0, %c3_i32 : i32
      %177 = vector.broadcast %176 : i32 to vector<8x1xi32>
      %178 = arith.cmpi slt, %177, %12 : vector<8x1xi32>
      %179 = vector.shape_cast %178 : vector<8x1xi1> to vector<8x1xi1>
      %180 = vector.broadcast %179 : vector<8x1xi1> to vector<8x128xi1>
      %cst_47 = arith.constant 0.000000e+00 : f32
      %181 = vector.broadcast %cst_47 : f32 to vector<8x128xf32>
      %182 = arith.select %180, %175, %181 : vector<8x128xi1>, vector<8x128xf32>
      %c3_48 = arith.constant 3 : index
      %c0_49 = arith.constant 0 : index
      %c0_50 = arith.constant 0 : index
      %183 = vector.load %arg6[%c3_48, %c0_49, %c0_50] : memref<16x8x128xf32, #tpu.memory_space<vmem>>, vector<1x8x128xf32>
      %184 = vector.shape_cast %183 : vector<1x8x128xf32> to vector<8x128xf32>
      %185 = vector.shape_cast %182 : vector<8x128xf32> to vector<1x8x128xf32>
      tpu.vector_store %arg6[%c3_48, %c0_49, %c0_50], %185 {strides = array<i32>} : memref<16x8x128xf32, #tpu.memory_space<vmem>>, vector<1x8x128xf32>,
      %186 = arith.select %180, %175, %143 : vector<8x128xi1>, vector<8x128xf32>
      %187 = arith.select %180, %173, %144 : vector<8x128xi1>, vector<8x128xf32>
      %c4 = arith.constant 4 : index
      %c0_51 = arith.constant 0 : index
      %c0_52 = arith.constant 0 : index
      %188 = vector.load %arg4[%c4, %c0_51, %c0_52] : memref<16x8x512xbf16, #tpu.memory_space<vmem>>, vector<1x8x512xbf16>
      %189 = vector.shape_cast %188 : vector<1x8x512xbf16> to vector<8x512xbf16>
      %190 = arith.extf %189 : vector<8x512xbf16> to vector<8x512xf32>
      %191 = arith.truncf %186 : vector<8x128xf32> to vector<8x128xbf16>
      %cst_53 = arith.constant dense<0.000000e+00> : vector<8x512xf32>
      %192 = tpu.matmul %191, %13, %cst_53 {dimension_numbers = #tpu.dot_dimension_numbers<[1], [0], [0], [1], [0, 0, 1, 1], [], []>} : vector<8x128xbf16>, vector<128x512xbf16>, vector<8x512xf32> -> vector<8x512xf32>
      %193 = arith.addf %190, %192 : vector<8x512xf32>
      %194 = vector.extract_strided_slice %193 {offsets = [0, 0], sizes = [8, 128], strides = [1, 1]} : vector<8x512xf32> to vector<8x128xf32>
      %195 = arith.negf %194 : vector<8x128xf32>
      %196 = math.exp %195 : vector<8x128xf32>
      %cst_54 = arith.constant 1.000000e+00 : f32
      %197 = vector.broadcast %cst_54 : f32 to vector<8x128xf32>
      %198 = arith.addf %197, %196 : vector<8x128xf32>
      %199 = arith.divf %197, %198 : vector<8x128xf32>
      %200 = vector.extract_strided_slice %193 {offsets = [0, 128], sizes = [8, 128], strides = [1, 1]} : vector<8x512xf32> to vector<8x128xf32>
      %201 = arith.negf %200 : vector<8x128xf32>
      %202 = math.exp %201 : vector<8x128xf32>
      %cst_55 = arith.constant 1.000000e+00 : f32
      %203 = vector.broadcast %cst_55 : f32 to vector<8x128xf32>
      %204 = arith.addf %203, %202 : vector<8x128xf32>
      %205 = arith.divf %203, %204 : vector<8x128xf32>
      %206 = vector.extract_strided_slice %193 {offsets = [0, 256], sizes = [8, 128], strides = [1, 1]} : vector<8x512xf32> to vector<8x128xf32>
      %207 = math.tanh %206 : vector<8x128xf32>
      %208 = vector.extract_strided_slice %193 {offsets = [0, 384], sizes = [8, 128], strides = [1, 1]} : vector<8x512xf32> to vector<8x128xf32>
      %209 = arith.negf %208 : vector<8x128xf32>
      %210 = math.exp %209 : vector<8x128xf32>
      %cst_56 = arith.constant 1.000000e+00 : f32
      %211 = vector.broadcast %cst_56 : f32 to vector<8x128xf32>
      %212 = arith.addf %211, %210 : vector<8x128xf32>
      %213 = arith.divf %211, %212 : vector<8x128xf32>
      %214 = arith.mulf %205, %187 : vector<8x128xf32>
      %215 = arith.mulf %199, %207 : vector<8x128xf32>
      %216 = arith.addf %214, %215 : vector<8x128xf32>
      %217 = math.tanh %216 : vector<8x128xf32>
      %218 = arith.mulf %213, %217 : vector<8x128xf32>
      %c4_i32 = arith.constant 4 : i32
      %219 = arith.addi %0, %c4_i32 : i32
      %220 = vector.broadcast %219 : i32 to vector<8x1xi32>
      %221 = arith.cmpi slt, %220, %12 : vector<8x1xi32>
      %222 = vector.shape_cast %221 : vector<8x1xi1> to vector<8x1xi1>
      %223 = vector.broadcast %222 : vector<8x1xi1> to vector<8x128xi1>
      %cst_57 = arith.constant 0.000000e+00 : f32
      %224 = vector.broadcast %cst_57 : f32 to vector<8x128xf32>
      %225 = arith.select %223, %218, %224 : vector<8x128xi1>, vector<8x128xf32>
      %c4_58 = arith.constant 4 : index
      %c0_59 = arith.constant 0 : index
      %c0_60 = arith.constant 0 : index
      %226 = vector.load %arg6[%c4_58, %c0_59, %c0_60] : memref<16x8x128xf32, #tpu.memory_space<vmem>>, vector<1x8x128xf32>
      %227 = vector.shape_cast %226 : vector<1x8x128xf32> to vector<8x128xf32>
      %228 = vector.shape_cast %225 : vector<8x128xf32> to vector<1x8x128xf32>
      tpu.vector_store %arg6[%c4_58, %c0_59, %c0_60], %228 {strides = array<i32>} : memref<16x8x128xf32, #tpu.memory_space<vmem>>, vector<1x8x128xf32>,
      %229 = arith.select %223, %218, %186 : vector<8x128xi1>, vector<8x128xf32>
      %230 = arith.select %223, %216, %187 : vector<8x128xi1>, vector<8x128xf32>
      %c5 = arith.constant 5 : index
      %c0_61 = arith.constant 0 : index
      %c0_62 = arith.constant 0 : index
      %231 = vector.load %arg4[%c5, %c0_61, %c0_62] : memref<16x8x512xbf16, #tpu.memory_space<vmem>>, vector<1x8x512xbf16>
      %232 = vector.shape_cast %231 : vector<1x8x512xbf16> to vector<8x512xbf16>
      %233 = arith.extf %232 : vector<8x512xbf16> to vector<8x512xf32>
      %234 = arith.truncf %229 : vector<8x128xf32> to vector<8x128xbf16>
      %cst_63 = arith.constant dense<0.000000e+00> : vector<8x512xf32>
      %235 = tpu.matmul %234, %13, %cst_63 {dimension_numbers = #tpu.dot_dimension_numbers<[1], [0], [0], [1], [0, 0, 1, 1], [], []>} : vector<8x128xbf16>, vector<128x512xbf16>, vector<8x512xf32> -> vector<8x512xf32>
      %236 = arith.addf %233, %235 : vector<8x512xf32>
      %237 = vector.extract_strided_slice %236 {offsets = [0, 0], sizes = [8, 128], strides = [1, 1]} : vector<8x512xf32> to vector<8x128xf32>
      %238 = arith.negf %237 : vector<8x128xf32>
      %239 = math.exp %238 : vector<8x128xf32>
      %cst_64 = arith.constant 1.000000e+00 : f32
      %240 = vector.broadcast %cst_64 : f32 to vector<8x128xf32>
      %241 = arith.addf %240, %239 : vector<8x128xf32>
      %242 = arith.divf %240, %241 : vector<8x128xf32>
      %243 = vector.extract_strided_slice %236 {offsets = [0, 128], sizes = [8, 128], strides = [1, 1]} : vector<8x512xf32> to vector<8x128xf32>
      %244 = arith.negf %243 : vector<8x128xf32>
      %245 = math.exp %244 : vector<8x128xf32>
      %cst_65 = arith.constant 1.000000e+00 : f32
      %246 = vector.broadcast %cst_65 : f32 to vector<8x128xf32>
      %247 = arith.addf %246, %245 : vector<8x128xf32>
      %248 = arith.divf %246, %247 : vector<8x128xf32>
      %249 = vector.extract_strided_slice %236 {offsets = [0, 256], sizes = [8, 128], strides = [1, 1]} : vector<8x512xf32> to vector<8x128xf32>
      %250 = math.tanh %249 : vector<8x128xf32>
      %251 = vector.extract_strided_slice %236 {offsets = [0, 384], sizes = [8, 128], strides = [1, 1]} : vector<8x512xf32> to vector<8x128xf32>
      %252 = arith.negf %251 : vector<8x128xf32>
      %253 = math.exp %252 : vector<8x128xf32>
      %cst_66 = arith.constant 1.000000e+00 : f32
      %254 = vector.broadcast %cst_66 : f32 to vector<8x128xf32>
      %255 = arith.addf %254, %253 : vector<8x128xf32>
      %256 = arith.divf %254, %255 : vector<8x128xf32>
      %257 = arith.mulf %248, %230 : vector<8x128xf32>
      %258 = arith.mulf %242, %250 : vector<8x128xf32>
      %259 = arith.addf %257, %258 : vector<8x128xf32>
      %260 = math.tanh %259 : vector<8x128xf32>
      %261 = arith.mulf %256, %260 : vector<8x128xf32>
      %c5_i32 = arith.constant 5 : i32
      %262 = arith.addi %0, %c5_i32 : i32
      %263 = vector.broadcast %262 : i32 to vector<8x1xi32>
      %264 = arith.cmpi slt, %263, %12 : vector<8x1xi32>
      %265 = vector.shape_cast %264 : vector<8x1xi1> to vector<8x1xi1>
      %266 = vector.broadcast %265 : vector<8x1xi1> to vector<8x128xi1>
      %cst_67 = arith.constant 0.000000e+00 : f32
      %267 = vector.broadcast %cst_67 : f32 to vector<8x128xf32>
      %268 = arith.select %266, %261, %267 : vector<8x128xi1>, vector<8x128xf32>
      %c5_68 = arith.constant 5 : index
      %c0_69 = arith.constant 0 : index
      %c0_70 = arith.constant 0 : index
      %269 = vector.load %arg6[%c5_68, %c0_69, %c0_70] : memref<16x8x128xf32, #tpu.memory_space<vmem>>, vector<1x8x128xf32>
      %270 = vector.shape_cast %269 : vector<1x8x128xf32> to vector<8x128xf32>
      %271 = vector.shape_cast %268 : vector<8x128xf32> to vector<1x8x128xf32>
      tpu.vector_store %arg6[%c5_68, %c0_69, %c0_70], %271 {strides = array<i32>} : memref<16x8x128xf32, #tpu.memory_space<vmem>>, vector<1x8x128xf32>,
      %272 = arith.select %266, %261, %229 : vector<8x128xi1>, vector<8x128xf32>
      %273 = arith.select %266, %259, %230 : vector<8x128xi1>, vector<8x128xf32>
      %c6 = arith.constant 6 : index
      %c0_71 = arith.constant 0 : index
      %c0_72 = arith.constant 0 : index
      %274 = vector.load %arg4[%c6, %c0_71, %c0_72] : memref<16x8x512xbf16, #tpu.memory_space<vmem>>, vector<1x8x512xbf16>
      %275 = vector.shape_cast %274 : vector<1x8x512xbf16> to vector<8x512xbf16>
      %276 = arith.extf %275 : vector<8x512xbf16> to vector<8x512xf32>
      %277 = arith.truncf %272 : vector<8x128xf32> to vector<8x128xbf16>
      %cst_73 = arith.constant dense<0.000000e+00> : vector<8x512xf32>
      %278 = tpu.matmul %277, %13, %cst_73 {dimension_numbers = #tpu.dot_dimension_numbers<[1], [0], [0], [1], [0, 0, 1, 1], [], []>} : vector<8x128xbf16>, vector<128x512xbf16>, vector<8x512xf32> -> vector<8x512xf32>
      %279 = arith.addf %276, %278 : vector<8x512xf32>
      %280 = vector.extract_strided_slice %279 {offsets = [0, 0], sizes = [8, 128], strides = [1, 1]} : vector<8x512xf32> to vector<8x128xf32>
      %281 = arith.negf %280 : vector<8x128xf32>
      %282 = math.exp %281 : vector<8x128xf32>
      %cst_74 = arith.constant 1.000000e+00 : f32
      %283 = vector.broadcast %cst_74 : f32 to vector<8x128xf32>
      %284 = arith.addf %283, %282 : vector<8x128xf32>
      %285 = arith.divf %283, %284 : vector<8x128xf32>
      %286 = vector.extract_strided_slice %279 {offsets = [0, 128], sizes = [8, 128], strides = [1, 1]} : vector<8x512xf32> to vector<8x128xf32>
      %287 = arith.negf %286 : vector<8x128xf32>
      %288 = math.exp %287 : vector<8x128xf32>
      %cst_75 = arith.constant 1.000000e+00 : f32
      %289 = vector.broadcast %cst_75 : f32 to vector<8x128xf32>
      %290 = arith.addf %289, %288 : vector<8x128xf32>
      %291 = arith.divf %289, %290 : vector<8x128xf32>
      %292 = vector.extract_strided_slice %279 {offsets = [0, 256], sizes = [8, 128], strides = [1, 1]} : vector<8x512xf32> to vector<8x128xf32>
      %293 = math.tanh %292 : vector<8x128xf32>
      %294 = vector.extract_strided_slice %279 {offsets = [0, 384], sizes = [8, 128], strides = [1, 1]} : vector<8x512xf32> to vector<8x128xf32>
      %295 = arith.negf %294 : vector<8x128xf32>
      %296 = math.exp %295 : vector<8x128xf32>
      %cst_76 = arith.constant 1.000000e+00 : f32
      %297 = vector.broadcast %cst_76 : f32 to vector<8x128xf32>
      %298 = arith.addf %297, %296 : vector<8x128xf32>
      %299 = arith.divf %297, %298 : vector<8x128xf32>
      %300 = arith.mulf %291, %273 : vector<8x128xf32>
      %301 = arith.mulf %285, %293 : vector<8x128xf32>
      %302 = arith.addf %300, %301 : vector<8x128xf32>
      %303 = math.tanh %302 : vector<8x128xf32>
      %304 = arith.mulf %299, %303 : vector<8x128xf32>
      %c6_i32 = arith.constant 6 : i32
      %305 = arith.addi %0, %c6_i32 : i32
      %306 = vector.broadcast %305 : i32 to vector<8x1xi32>
      %307 = arith.cmpi slt, %306, %12 : vector<8x1xi32>
      %308 = vector.shape_cast %307 : vector<8x1xi1> to vector<8x1xi1>
      %309 = vector.broadcast %308 : vector<8x1xi1> to vector<8x128xi1>
      %cst_77 = arith.constant 0.000000e+00 : f32
      %310 = vector.broadcast %cst_77 : f32 to vector<8x128xf32>
      %311 = arith.select %309, %304, %310 : vector<8x128xi1>, vector<8x128xf32>
      %c6_78 = arith.constant 6 : index
      %c0_79 = arith.constant 0 : index
      %c0_80 = arith.constant 0 : index
      %312 = vector.load %arg6[%c6_78, %c0_79, %c0_80] : memref<16x8x128xf32, #tpu.memory_space<vmem>>, vector<1x8x128xf32>
      %313 = vector.shape_cast %312 : vector<1x8x128xf32> to vector<8x128xf32>
      %314 = vector.shape_cast %311 : vector<8x128xf32> to vector<1x8x128xf32>
      tpu.vector_store %arg6[%c6_78, %c0_79, %c0_80], %314 {strides = array<i32>} : memref<16x8x128xf32, #tpu.memory_space<vmem>>, vector<1x8x128xf32>,
      %315 = arith.select %309, %304, %272 : vector<8x128xi1>, vector<8x128xf32>
      %316 = arith.select %309, %302, %273 : vector<8x128xi1>, vector<8x128xf32>
      %c7 = arith.constant 7 : index
      %c0_81 = arith.constant 0 : index
      %c0_82 = arith.constant 0 : index
      %317 = vector.load %arg4[%c7, %c0_81, %c0_82] : memref<16x8x512xbf16, #tpu.memory_space<vmem>>, vector<1x8x512xbf16>
      %318 = vector.shape_cast %317 : vector<1x8x512xbf16> to vector<8x512xbf16>
      %319 = arith.extf %318 : vector<8x512xbf16> to vector<8x512xf32>
      %320 = arith.truncf %315 : vector<8x128xf32> to vector<8x128xbf16>
      %cst_83 = arith.constant dense<0.000000e+00> : vector<8x512xf32>
      %321 = tpu.matmul %320, %13, %cst_83 {dimension_numbers = #tpu.dot_dimension_numbers<[1], [0], [0], [1], [0, 0, 1, 1], [], []>} : vector<8x128xbf16>, vector<128x512xbf16>, vector<8x512xf32> -> vector<8x512xf32>
      %322 = arith.addf %319, %321 : vector<8x512xf32>
      %323 = vector.extract_strided_slice %322 {offsets = [0, 0], sizes = [8, 128], strides = [1, 1]} : vector<8x512xf32> to vector<8x128xf32>
      %324 = arith.negf %323 : vector<8x128xf32>
      %325 = math.exp %324 : vector<8x128xf32>
      %cst_84 = arith.constant 1.000000e+00 : f32
      %326 = vector.broadcast %cst_84 : f32 to vector<8x128xf32>
      %327 = arith.addf %326, %325 : vector<8x128xf32>
      %328 = arith.divf %326, %327 : vector<8x128xf32>
      %329 = vector.extract_strided_slice %322 {offsets = [0, 128], sizes = [8, 128], strides = [1, 1]} : vector<8x512xf32> to vector<8x128xf32>
      %330 = arith.negf %329 : vector<8x128xf32>
      %331 = math.exp %330 : vector<8x128xf32>
      %cst_85 = arith.constant 1.000000e+00 : f32
      %332 = vector.broadcast %cst_85 : f32 to vector<8x128xf32>
      %333 = arith.addf %332, %331 : vector<8x128xf32>
      %334 = arith.divf %332, %333 : vector<8x128xf32>
      %335 = vector.extract_strided_slice %322 {offsets = [0, 256], sizes = [8, 128], strides = [1, 1]} : vector<8x512xf32> to vector<8x128xf32>
      %336 = math.tanh %335 : vector<8x128xf32>
      %337 = vector.extract_strided_slice %322 {offsets = [0, 384], sizes = [8, 128], strides = [1, 1]} : vector<8x512xf32> to vector<8x128xf32>
      %338 = arith.negf %337 : vector<8x128xf32>
      %339 = math.exp %338 : vector<8x128xf32>
      %cst_86 = arith.constant 1.000000e+00 : f32
      %340 = vector.broadcast %cst_86 : f32 to vector<8x128xf32>
      %341 = arith.addf %340, %339 : vector<8x128xf32>
      %342 = arith.divf %340, %341 : vector<8x128xf32>
      %343 = arith.mulf %334, %316 : vector<8x128xf32>
      %344 = arith.mulf %328, %336 : vector<8x128xf32>
      %345 = arith.addf %343, %344 : vector<8x128xf32>
      %346 = math.tanh %345 : vector<8x128xf32>
      %347 = arith.mulf %342, %346 : vector<8x128xf32>
      %c7_i32 = arith.constant 7 : i32
      %348 = arith.addi %0, %c7_i32 : i32
      %349 = vector.broadcast %348 : i32 to vector<8x1xi32>
      %350 = arith.cmpi slt, %349, %12 : vector<8x1xi32>
      %351 = vector.shape_cast %350 : vector<8x1xi1> to vector<8x1xi1>
      %352 = vector.broadcast %351 : vector<8x1xi1> to vector<8x128xi1>
      %cst_87 = arith.constant 0.000000e+00 : f32
      %353 = vector.broadcast %cst_87 : f32 to vector<8x128xf32>
      %354 = arith.select %352, %347, %353 : vector<8x128xi1>, vector<8x128xf32>
      %c7_88 = arith.constant 7 : index
      %c0_89 = arith.constant 0 : index
      %c0_90 = arith.constant 0 : index
      %355 = vector.load %arg6[%c7_88, %c0_89, %c0_90] : memref<16x8x128xf32, #tpu.memory_space<vmem>>, vector<1x8x128xf32>
      %356 = vector.shape_cast %355 : vector<1x8x128xf32> to vector<8x128xf32>
      %357 = vector.shape_cast %354 : vector<8x128xf32> to vector<1x8x128xf32>
      tpu.vector_store %arg6[%c7_88, %c0_89, %c0_90], %357 {strides = array<i32>} : memref<16x8x128xf32, #tpu.memory_space<vmem>>, vector<1x8x128xf32>,
      %358 = arith.select %352, %347, %315 : vector<8x128xi1>, vector<8x128xf32>
      %359 = arith.select %352, %345, %316 : vector<8x128xi1>, vector<8x128xf32>
      %c8 = arith.constant 8 : index
      %c0_91 = arith.constant 0 : index
      %c0_92 = arith.constant 0 : index
      %360 = vector.load %arg4[%c8, %c0_91, %c0_92] : memref<16x8x512xbf16, #tpu.memory_space<vmem>>, vector<1x8x512xbf16>
      %361 = vector.shape_cast %360 : vector<1x8x512xbf16> to vector<8x512xbf16>
      %362 = arith.extf %361 : vector<8x512xbf16> to vector<8x512xf32>
      %363 = arith.truncf %358 : vector<8x128xf32> to vector<8x128xbf16>
      %cst_93 = arith.constant dense<0.000000e+00> : vector<8x512xf32>
      %364 = tpu.matmul %363, %13, %cst_93 {dimension_numbers = #tpu.dot_dimension_numbers<[1], [0], [0], [1], [0, 0, 1, 1], [], []>} : vector<8x128xbf16>, vector<128x512xbf16>, vector<8x512xf32> -> vector<8x512xf32>
      %365 = arith.addf %362, %364 : vector<8x512xf32>
      %366 = vector.extract_strided_slice %365 {offsets = [0, 0], sizes = [8, 128], strides = [1, 1]} : vector<8x512xf32> to vector<8x128xf32>
      %367 = arith.negf %366 : vector<8x128xf32>
      %368 = math.exp %367 : vector<8x128xf32>
      %cst_94 = arith.constant 1.000000e+00 : f32
      %369 = vector.broadcast %cst_94 : f32 to vector<8x128xf32>
      %370 = arith.addf %369, %368 : vector<8x128xf32>
      %371 = arith.divf %369, %370 : vector<8x128xf32>
      %372 = vector.extract_strided_slice %365 {offsets = [0, 128], sizes = [8, 128], strides = [1, 1]} : vector<8x512xf32> to vector<8x128xf32>
      %373 = arith.negf %372 : vector<8x128xf32>
      %374 = math.exp %373 : vector<8x128xf32>
      %cst_95 = arith.constant 1.000000e+00 : f32
      %375 = vector.broadcast %cst_95 : f32 to vector<8x128xf32>
      %376 = arith.addf %375, %374 : vector<8x128xf32>
      %377 = arith.divf %375, %376 : vector<8x128xf32>
      %378 = vector.extract_strided_slice %365 {offsets = [0, 256], sizes = [8, 128], strides = [1, 1]} : vector<8x512xf32> to vector<8x128xf32>
      %379 = math.tanh %378 : vector<8x128xf32>
      %380 = vector.extract_strided_slice %365 {offsets = [0, 384], sizes = [8, 128], strides = [1, 1]} : vector<8x512xf32> to vector<8x128xf32>
      %381 = arith.negf %380 : vector<8x128xf32>
      %382 = math.exp %381 : vector<8x128xf32>
      %cst_96 = arith.constant 1.000000e+00 : f32
      %383 = vector.broadcast %cst_96 : f32 to vector<8x128xf32>
      %384 = arith.addf %383, %382 : vector<8x128xf32>
      %385 = arith.divf %383, %384 : vector<8x128xf32>
      %386 = arith.mulf %377, %359 : vector<8x128xf32>
      %387 = arith.mulf %371, %379 : vector<8x128xf32>
      %388 = arith.addf %386, %387 : vector<8x128xf32>
      %389 = math.tanh %388 : vector<8x128xf32>
      %390 = arith.mulf %385, %389 : vector<8x128xf32>
      %c8_i32 = arith.constant 8 : i32
      %391 = arith.addi %0, %c8_i32 : i32
      %392 = vector.broadcast %391 : i32 to vector<8x1xi32>
      %393 = arith.cmpi slt, %392, %12 : vector<8x1xi32>
      %394 = vector.shape_cast %393 : vector<8x1xi1> to vector<8x1xi1>
      %395 = vector.broadcast %394 : vector<8x1xi1> to vector<8x128xi1>
      %cst_97 = arith.constant 0.000000e+00 : f32
      %396 = vector.broadcast %cst_97 : f32 to vector<8x128xf32>
      %397 = arith.select %395, %390, %396 : vector<8x128xi1>, vector<8x128xf32>
      %c8_98 = arith.constant 8 : index
      %c0_99 = arith.constant 0 : index
      %c0_100 = arith.constant 0 : index
      %398 = vector.load %arg6[%c8_98, %c0_99, %c0_100] : memref<16x8x128xf32, #tpu.memory_space<vmem>>, vector<1x8x128xf32>
      %399 = vector.shape_cast %398 : vector<1x8x128xf32> to vector<8x128xf32>
      %400 = vector.shape_cast %397 : vector<8x128xf32> to vector<1x8x128xf32>
      tpu.vector_store %arg6[%c8_98, %c0_99, %c0_100], %400 {strides = array<i32>} : memref<16x8x128xf32, #tpu.memory_space<vmem>>, vector<1x8x128xf32>,
      %401 = arith.select %395, %390, %358 : vector<8x128xi1>, vector<8x128xf32>
      %402 = arith.select %395, %388, %359 : vector<8x128xi1>, vector<8x128xf32>
      %c9 = arith.constant 9 : index
      %c0_101 = arith.constant 0 : index
      %c0_102 = arith.constant 0 : index
      %403 = vector.load %arg4[%c9, %c0_101, %c0_102] : memref<16x8x512xbf16, #tpu.memory_space<vmem>>, vector<1x8x512xbf16>
      %404 = vector.shape_cast %403 : vector<1x8x512xbf16> to vector<8x512xbf16>
      %405 = arith.extf %404 : vector<8x512xbf16> to vector<8x512xf32>
      %406 = arith.truncf %401 : vector<8x128xf32> to vector<8x128xbf16>
      %cst_103 = arith.constant dense<0.000000e+00> : vector<8x512xf32>
      %407 = tpu.matmul %406, %13, %cst_103 {dimension_numbers = #tpu.dot_dimension_numbers<[1], [0], [0], [1], [0, 0, 1, 1], [], []>} : vector<8x128xbf16>, vector<128x512xbf16>, vector<8x512xf32> -> vector<8x512xf32>
      %408 = arith.addf %405, %407 : vector<8x512xf32>
      %409 = vector.extract_strided_slice %408 {offsets = [0, 0], sizes = [8, 128], strides = [1, 1]} : vector<8x512xf32> to vector<8x128xf32>
      %410 = arith.negf %409 : vector<8x128xf32>
      %411 = math.exp %410 : vector<8x128xf32>
      %cst_104 = arith.constant 1.000000e+00 : f32
      %412 = vector.broadcast %cst_104 : f32 to vector<8x128xf32>
      %413 = arith.addf %412, %411 : vector<8x128xf32>
      %414 = arith.divf %412, %413 : vector<8x128xf32>
      %415 = vector.extract_strided_slice %408 {offsets = [0, 128], sizes = [8, 128], strides = [1, 1]} : vector<8x512xf32> to vector<8x128xf32>
      %416 = arith.negf %415 : vector<8x128xf32>
      %417 = math.exp %416 : vector<8x128xf32>
      %cst_105 = arith.constant 1.000000e+00 : f32
      %418 = vector.broadcast %cst_105 : f32 to vector<8x128xf32>
      %419 = arith.addf %418, %417 : vector<8x128xf32>
      %420 = arith.divf %418, %419 : vector<8x128xf32>
      %421 = vector.extract_strided_slice %408 {offsets = [0, 256], sizes = [8, 128], strides = [1, 1]} : vector<8x512xf32> to vector<8x128xf32>
      %422 = math.tanh %421 : vector<8x128xf32>
      %423 = vector.extract_strided_slice %408 {offsets = [0, 384], sizes = [8, 128], strides = [1, 1]} : vector<8x512xf32> to vector<8x128xf32>
      %424 = arith.negf %423 : vector<8x128xf32>
      %425 = math.exp %424 : vector<8x128xf32>
      %cst_106 = arith.constant 1.000000e+00 : f32
      %426 = vector.broadcast %cst_106 : f32 to vector<8x128xf32>
      %427 = arith.addf %426, %425 : vector<8x128xf32>
      %428 = arith.divf %426, %427 : vector<8x128xf32>
      %429 = arith.mulf %420, %402 : vector<8x128xf32>
      %430 = arith.mulf %414, %422 : vector<8x128xf32>
      %431 = arith.addf %429, %430 : vector<8x128xf32>
      %432 = math.tanh %431 : vector<8x128xf32>
      %433 = arith.mulf %428, %432 : vector<8x128xf32>
      %c9_i32 = arith.constant 9 : i32
      %434 = arith.addi %0, %c9_i32 : i32
      %435 = vector.broadcast %434 : i32 to vector<8x1xi32>
      %436 = arith.cmpi slt, %435, %12 : vector<8x1xi32>
      %437 = vector.shape_cast %436 : vector<8x1xi1> to vector<8x1xi1>
      %438 = vector.broadcast %437 : vector<8x1xi1> to vector<8x128xi1>
      %cst_107 = arith.constant 0.000000e+00 : f32
      %439 = vector.broadcast %cst_107 : f32 to vector<8x128xf32>
      %440 = arith.select %438, %433, %439 : vector<8x128xi1>, vector<8x128xf32>
      %c9_108 = arith.constant 9 : index
      %c0_109 = arith.constant 0 : index
      %c0_110 = arith.constant 0 : index
      %441 = vector.load %arg6[%c9_108, %c0_109, %c0_110] : memref<16x8x128xf32, #tpu.memory_space<vmem>>, vector<1x8x128xf32>
      %442 = vector.shape_cast %441 : vector<1x8x128xf32> to vector<8x128xf32>
      %443 = vector.shape_cast %440 : vector<8x128xf32> to vector<1x8x128xf32>
      tpu.vector_store %arg6[%c9_108, %c0_109, %c0_110], %443 {strides = array<i32>} : memref<16x8x128xf32, #tpu.memory_space<vmem>>, vector<1x8x128xf32>,
      %444 = arith.select %438, %433, %401 : vector<8x128xi1>, vector<8x128xf32>
      %445 = arith.select %438, %431, %402 : vector<8x128xi1>, vector<8x128xf32>
      %c10 = arith.constant 10 : index
      %c0_111 = arith.constant 0 : index
      %c0_112 = arith.constant 0 : index
      %446 = vector.load %arg4[%c10, %c0_111, %c0_112] : memref<16x8x512xbf16, #tpu.memory_space<vmem>>, vector<1x8x512xbf16>
      %447 = vector.shape_cast %446 : vector<1x8x512xbf16> to vector<8x512xbf16>
      %448 = arith.extf %447 : vector<8x512xbf16> to vector<8x512xf32>
      %449 = arith.truncf %444 : vector<8x128xf32> to vector<8x128xbf16>
      %cst_113 = arith.constant dense<0.000000e+00> : vector<8x512xf32>
      %450 = tpu.matmul %449, %13, %cst_113 {dimension_numbers = #tpu.dot_dimension_numbers<[1], [0], [0], [1], [0, 0, 1, 1], [], []>} : vector<8x128xbf16>, vector<128x512xbf16>, vector<8x512xf32> -> vector<8x512xf32>
      %451 = arith.addf %448, %450 : vector<8x512xf32>
      %452 = vector.extract_strided_slice %451 {offsets = [0, 0], sizes = [8, 128], strides = [1, 1]} : vector<8x512xf32> to vector<8x128xf32>
      %453 = arith.negf %452 : vector<8x128xf32>
      %454 = math.exp %453 : vector<8x128xf32>
      %cst_114 = arith.constant 1.000000e+00 : f32
      %455 = vector.broadcast %cst_114 : f32 to vector<8x128xf32>
      %456 = arith.addf %455, %454 : vector<8x128xf32>
      %457 = arith.divf %455, %456 : vector<8x128xf32>
      %458 = vector.extract_strided_slice %451 {offsets = [0, 128], sizes = [8, 128], strides = [1, 1]} : vector<8x512xf32> to vector<8x128xf32>
      %459 = arith.negf %458 : vector<8x128xf32>
      %460 = math.exp %459 : vector<8x128xf32>
      %cst_115 = arith.constant 1.000000e+00 : f32
      %461 = vector.broadcast %cst_115 : f32 to vector<8x128xf32>
      %462 = arith.addf %461, %460 : vector<8x128xf32>
      %463 = arith.divf %461, %462 : vector<8x128xf32>
      %464 = vector.extract_strided_slice %451 {offsets = [0, 256], sizes = [8, 128], strides = [1, 1]} : vector<8x512xf32> to vector<8x128xf32>
      %465 = math.tanh %464 : vector<8x128xf32>
      %466 = vector.extract_strided_slice %451 {offsets = [0, 384], sizes = [8, 128], strides = [1, 1]} : vector<8x512xf32> to vector<8x128xf32>
      %467 = arith.negf %466 : vector<8x128xf32>
      %468 = math.exp %467 : vector<8x128xf32>
      %cst_116 = arith.constant 1.000000e+00 : f32
      %469 = vector.broadcast %cst_116 : f32 to vector<8x128xf32>
      %470 = arith.addf %469, %468 : vector<8x128xf32>
      %471 = arith.divf %469, %470 : vector<8x128xf32>
      %472 = arith.mulf %463, %445 : vector<8x128xf32>
      %473 = arith.mulf %457, %465 : vector<8x128xf32>
      %474 = arith.addf %472, %473 : vector<8x128xf32>
      %475 = math.tanh %474 : vector<8x128xf32>
      %476 = arith.mulf %471, %475 : vector<8x128xf32>
      %c10_i32 = arith.constant 10 : i32
      %477 = arith.addi %0, %c10_i32 : i32
      %478 = vector.broadcast %477 : i32 to vector<8x1xi32>
      %479 = arith.cmpi slt, %478, %12 : vector<8x1xi32>
      %480 = vector.shape_cast %479 : vector<8x1xi1> to vector<8x1xi1>
      %481 = vector.broadcast %480 : vector<8x1xi1> to vector<8x128xi1>
      %cst_117 = arith.constant 0.000000e+00 : f32
      %482 = vector.broadcast %cst_117 : f32 to vector<8x128xf32>
      %483 = arith.select %481, %476, %482 : vector<8x128xi1>, vector<8x128xf32>
      %c10_118 = arith.constant 10 : index
      %c0_119 = arith.constant 0 : index
      %c0_120 = arith.constant 0 : index
      %484 = vector.load %arg6[%c10_118, %c0_119, %c0_120] : memref<16x8x128xf32, #tpu.memory_space<vmem>>, vector<1x8x128xf32>
      %485 = vector.shape_cast %484 : vector<1x8x128xf32> to vector<8x128xf32>
      %486 = vector.shape_cast %483 : vector<8x128xf32> to vector<1x8x128xf32>
      tpu.vector_store %arg6[%c10_118, %c0_119, %c0_120], %486 {strides = array<i32>} : memref<16x8x128xf32, #tpu.memory_space<vmem>>, vector<1x8x128xf32>,
      %487 = arith.select %481, %476, %444 : vector<8x128xi1>, vector<8x128xf32>
      %488 = arith.select %481, %474, %445 : vector<8x128xi1>, vector<8x128xf32>
      %c11 = arith.constant 11 : index
      %c0_121 = arith.constant 0 : index
      %c0_122 = arith.constant 0 : index
      %489 = vector.load %arg4[%c11, %c0_121, %c0_122] : memref<16x8x512xbf16, #tpu.memory_space<vmem>>, vector<1x8x512xbf16>
      %490 = vector.shape_cast %489 : vector<1x8x512xbf16> to vector<8x512xbf16>
      %491 = arith.extf %490 : vector<8x512xbf16> to vector<8x512xf32>
      %492 = arith.truncf %487 : vector<8x128xf32> to vector<8x128xbf16>
      %cst_123 = arith.constant dense<0.000000e+00> : vector<8x512xf32>
      %493 = tpu.matmul %492, %13, %cst_123 {dimension_numbers = #tpu.dot_dimension_numbers<[1], [0], [0], [1], [0, 0, 1, 1], [], []>} : vector<8x128xbf16>, vector<128x512xbf16>, vector<8x512xf32> -> vector<8x512xf32>
      %494 = arith.addf %491, %493 : vector<8x512xf32>
      %495 = vector.extract_strided_slice %494 {offsets = [0, 0], sizes = [8, 128], strides = [1, 1]} : vector<8x512xf32> to vector<8x128xf32>
      %496 = arith.negf %495 : vector<8x128xf32>
      %497 = math.exp %496 : vector<8x128xf32>
      %cst_124 = arith.constant 1.000000e+00 : f32
      %498 = vector.broadcast %cst_124 : f32 to vector<8x128xf32>
      %499 = arith.addf %498, %497 : vector<8x128xf32>
      %500 = arith.divf %498, %499 : vector<8x128xf32>
      %501 = vector.extract_strided_slice %494 {offsets = [0, 128], sizes = [8, 128], strides = [1, 1]} : vector<8x512xf32> to vector<8x128xf32>
      %502 = arith.negf %501 : vector<8x128xf32>
      %503 = math.exp %502 : vector<8x128xf32>
      %cst_125 = arith.constant 1.000000e+00 : f32
      %504 = vector.broadcast %cst_125 : f32 to vector<8x128xf32>
      %505 = arith.addf %504, %503 : vector<8x128xf32>
      %506 = arith.divf %504, %505 : vector<8x128xf32>
      %507 = vector.extract_strided_slice %494 {offsets = [0, 256], sizes = [8, 128], strides = [1, 1]} : vector<8x512xf32> to vector<8x128xf32>
      %508 = math.tanh %507 : vector<8x128xf32>
      %509 = vector.extract_strided_slice %494 {offsets = [0, 384], sizes = [8, 128], strides = [1, 1]} : vector<8x512xf32> to vector<8x128xf32>
      %510 = arith.negf %509 : vector<8x128xf32>
      %511 = math.exp %510 : vector<8x128xf32>
      %cst_126 = arith.constant 1.000000e+00 : f32
      %512 = vector.broadcast %cst_126 : f32 to vector<8x128xf32>
      %513 = arith.addf %512, %511 : vector<8x128xf32>
      %514 = arith.divf %512, %513 : vector<8x128xf32>
      %515 = arith.mulf %506, %488 : vector<8x128xf32>
      %516 = arith.mulf %500, %508 : vector<8x128xf32>
      %517 = arith.addf %515, %516 : vector<8x128xf32>
      %518 = math.tanh %517 : vector<8x128xf32>
      %519 = arith.mulf %514, %518 : vector<8x128xf32>
      %c11_i32 = arith.constant 11 : i32
      %520 = arith.addi %0, %c11_i32 : i32
      %521 = vector.broadcast %520 : i32 to vector<8x1xi32>
      %522 = arith.cmpi slt, %521, %12 : vector<8x1xi32>
      %523 = vector.shape_cast %522 : vector<8x1xi1> to vector<8x1xi1>
      %524 = vector.broadcast %523 : vector<8x1xi1> to vector<8x128xi1>
      %cst_127 = arith.constant 0.000000e+00 : f32
      %525 = vector.broadcast %cst_127 : f32 to vector<8x128xf32>
      %526 = arith.select %524, %519, %525 : vector<8x128xi1>, vector<8x128xf32>
      %c11_128 = arith.constant 11 : index
      %c0_129 = arith.constant 0 : index
      %c0_130 = arith.constant 0 : index
      %527 = vector.load %arg6[%c11_128, %c0_129, %c0_130] : memref<16x8x128xf32, #tpu.memory_space<vmem>>, vector<1x8x128xf32>
      %528 = vector.shape_cast %527 : vector<1x8x128xf32> to vector<8x128xf32>
      %529 = vector.shape_cast %526 : vector<8x128xf32> to vector<1x8x128xf32>
      tpu.vector_store %arg6[%c11_128, %c0_129, %c0_130], %529 {strides = array<i32>} : memref<16x8x128xf32, #tpu.memory_space<vmem>>, vector<1x8x128xf32>,
      %530 = arith.select %524, %519, %487 : vector<8x128xi1>, vector<8x128xf32>
      %531 = arith.select %524, %517, %488 : vector<8x128xi1>, vector<8x128xf32>
      %c12 = arith.constant 12 : index
      %c0_131 = arith.constant 0 : index
      %c0_132 = arith.constant 0 : index
      %532 = vector.load %arg4[%c12, %c0_131, %c0_132] : memref<16x8x512xbf16, #tpu.memory_space<vmem>>, vector<1x8x512xbf16>
      %533 = vector.shape_cast %532 : vector<1x8x512xbf16> to vector<8x512xbf16>
      %534 = arith.extf %533 : vector<8x512xbf16> to vector<8x512xf32>
      %535 = arith.truncf %530 : vector<8x128xf32> to vector<8x128xbf16>
      %cst_133 = arith.constant dense<0.000000e+00> : vector<8x512xf32>
      %536 = tpu.matmul %535, %13, %cst_133 {dimension_numbers = #tpu.dot_dimension_numbers<[1], [0], [0], [1], [0, 0, 1, 1], [], []>} : vector<8x128xbf16>, vector<128x512xbf16>, vector<8x512xf32> -> vector<8x512xf32>
      %537 = arith.addf %534, %536 : vector<8x512xf32>
      %538 = vector.extract_strided_slice %537 {offsets = [0, 0], sizes = [8, 128], strides = [1, 1]} : vector<8x512xf32> to vector<8x128xf32>
      %539 = arith.negf %538 : vector<8x128xf32>
      %540 = math.exp %539 : vector<8x128xf32>
      %cst_134 = arith.constant 1.000000e+00 : f32
      %541 = vector.broadcast %cst_134 : f32 to vector<8x128xf32>
      %542 = arith.addf %541, %540 : vector<8x128xf32>
      %543 = arith.divf %541, %542 : vector<8x128xf32>
      %544 = vector.extract_strided_slice %537 {offsets = [0, 128], sizes = [8, 128], strides = [1, 1]} : vector<8x512xf32> to vector<8x128xf32>
      %545 = arith.negf %544 : vector<8x128xf32>
      %546 = math.exp %545 : vector<8x128xf32>
      %cst_135 = arith.constant 1.000000e+00 : f32
      %547 = vector.broadcast %cst_135 : f32 to vector<8x128xf32>
      %548 = arith.addf %547, %546 : vector<8x128xf32>
      %549 = arith.divf %547, %548 : vector<8x128xf32>
      %550 = vector.extract_strided_slice %537 {offsets = [0, 256], sizes = [8, 128], strides = [1, 1]} : vector<8x512xf32> to vector<8x128xf32>
      %551 = math.tanh %550 : vector<8x128xf32>
      %552 = vector.extract_strided_slice %537 {offsets = [0, 384], sizes = [8, 128], strides = [1, 1]} : vector<8x512xf32> to vector<8x128xf32>
      %553 = arith.negf %552 : vector<8x128xf32>
      %554 = math.exp %553 : vector<8x128xf32>
      %cst_136 = arith.constant 1.000000e+00 : f32
      %555 = vector.broadcast %cst_136 : f32 to vector<8x128xf32>
      %556 = arith.addf %555, %554 : vector<8x128xf32>
      %557 = arith.divf %555, %556 : vector<8x128xf32>
      %558 = arith.mulf %549, %531 : vector<8x128xf32>
      %559 = arith.mulf %543, %551 : vector<8x128xf32>
      %560 = arith.addf %558, %559 : vector<8x128xf32>
      %561 = math.tanh %560 : vector<8x128xf32>
      %562 = arith.mulf %557, %561 : vector<8x128xf32>
      %c12_i32 = arith.constant 12 : i32
      %563 = arith.addi %0, %c12_i32 : i32
      %564 = vector.broadcast %563 : i32 to vector<8x1xi32>
      %565 = arith.cmpi slt, %564, %12 : vector<8x1xi32>
      %566 = vector.shape_cast %565 : vector<8x1xi1> to vector<8x1xi1>
      %567 = vector.broadcast %566 : vector<8x1xi1> to vector<8x128xi1>
      %cst_137 = arith.constant 0.000000e+00 : f32
      %568 = vector.broadcast %cst_137 : f32 to vector<8x128xf32>
      %569 = arith.select %567, %562, %568 : vector<8x128xi1>, vector<8x128xf32>
      %c12_138 = arith.constant 12 : index
      %c0_139 = arith.constant 0 : index
      %c0_140 = arith.constant 0 : index
      %570 = vector.load %arg6[%c12_138, %c0_139, %c0_140] : memref<16x8x128xf32, #tpu.memory_space<vmem>>, vector<1x8x128xf32>
      %571 = vector.shape_cast %570 : vector<1x8x128xf32> to vector<8x128xf32>
      %572 = vector.shape_cast %569 : vector<8x128xf32> to vector<1x8x128xf32>
      tpu.vector_store %arg6[%c12_138, %c0_139, %c0_140], %572 {strides = array<i32>} : memref<16x8x128xf32, #tpu.memory_space<vmem>>, vector<1x8x128xf32>,
      %573 = arith.select %567, %562, %530 : vector<8x128xi1>, vector<8x128xf32>
      %574 = arith.select %567, %560, %531 : vector<8x128xi1>, vector<8x128xf32>
      %c13 = arith.constant 13 : index
      %c0_141 = arith.constant 0 : index
      %c0_142 = arith.constant 0 : index
      %575 = vector.load %arg4[%c13, %c0_141, %c0_142] : memref<16x8x512xbf16, #tpu.memory_space<vmem>>, vector<1x8x512xbf16>
      %576 = vector.shape_cast %575 : vector<1x8x512xbf16> to vector<8x512xbf16>
      %577 = arith.extf %576 : vector<8x512xbf16> to vector<8x512xf32>
      %578 = arith.truncf %573 : vector<8x128xf32> to vector<8x128xbf16>
      %cst_143 = arith.constant dense<0.000000e+00> : vector<8x512xf32>
      %579 = tpu.matmul %578, %13, %cst_143 {dimension_numbers = #tpu.dot_dimension_numbers<[1], [0], [0], [1], [0, 0, 1, 1], [], []>} : vector<8x128xbf16>, vector<128x512xbf16>, vector<8x512xf32> -> vector<8x512xf32>
      %580 = arith.addf %577, %579 : vector<8x512xf32>
      %581 = vector.extract_strided_slice %580 {offsets = [0, 0], sizes = [8, 128], strides = [1, 1]} : vector<8x512xf32> to vector<8x128xf32>
      %582 = arith.negf %581 : vector<8x128xf32>
      %583 = math.exp %582 : vector<8x128xf32>
      %cst_144 = arith.constant 1.000000e+00 : f32
      %584 = vector.broadcast %cst_144 : f32 to vector<8x128xf32>
      %585 = arith.addf %584, %583 : vector<8x128xf32>
      %586 = arith.divf %584, %585 : vector<8x128xf32>
      %587 = vector.extract_strided_slice %580 {offsets = [0, 128], sizes = [8, 128], strides = [1, 1]} : vector<8x512xf32> to vector<8x128xf32>
      %588 = arith.negf %587 : vector<8x128xf32>
      %589 = math.exp %588 : vector<8x128xf32>
      %cst_145 = arith.constant 1.000000e+00 : f32
      %590 = vector.broadcast %cst_145 : f32 to vector<8x128xf32>
      %591 = arith.addf %590, %589 : vector<8x128xf32>
      %592 = arith.divf %590, %591 : vector<8x128xf32>
      %593 = vector.extract_strided_slice %580 {offsets = [0, 256], sizes = [8, 128], strides = [1, 1]} : vector<8x512xf32> to vector<8x128xf32>
      %594 = math.tanh %593 : vector<8x128xf32>
      %595 = vector.extract_strided_slice %580 {offsets = [0, 384], sizes = [8, 128], strides = [1, 1]} : vector<8x512xf32> to vector<8x128xf32>
      %596 = arith.negf %595 : vector<8x128xf32>
      %597 = math.exp %596 : vector<8x128xf32>
      %cst_146 = arith.constant 1.000000e+00 : f32
      %598 = vector.broadcast %cst_146 : f32 to vector<8x128xf32>
      %599 = arith.addf %598, %597 : vector<8x128xf32>
      %600 = arith.divf %598, %599 : vector<8x128xf32>
      %601 = arith.mulf %592, %574 : vector<8x128xf32>
      %602 = arith.mulf %586, %594 : vector<8x128xf32>
      %603 = arith.addf %601, %602 : vector<8x128xf32>
      %604 = math.tanh %603 : vector<8x128xf32>
      %605 = arith.mulf %600, %604 : vector<8x128xf32>
      %c13_i32 = arith.constant 13 : i32
      %606 = arith.addi %0, %c13_i32 : i32
      %607 = vector.broadcast %606 : i32 to vector<8x1xi32>
      %608 = arith.cmpi slt, %607, %12 : vector<8x1xi32>
      %609 = vector.shape_cast %608 : vector<8x1xi1> to vector<8x1xi1>
      %610 = vector.broadcast %609 : vector<8x1xi1> to vector<8x128xi1>
      %cst_147 = arith.constant 0.000000e+00 : f32
      %611 = vector.broadcast %cst_147 : f32 to vector<8x128xf32>
      %612 = arith.select %610, %605, %611 : vector<8x128xi1>, vector<8x128xf32>
      %c13_148 = arith.constant 13 : index
      %c0_149 = arith.constant 0 : index
      %c0_150 = arith.constant 0 : index
      %613 = vector.load %arg6[%c13_148, %c0_149, %c0_150] : memref<16x8x128xf32, #tpu.memory_space<vmem>>, vector<1x8x128xf32>
      %614 = vector.shape_cast %613 : vector<1x8x128xf32> to vector<8x128xf32>
      %615 = vector.shape_cast %612 : vector<8x128xf32> to vector<1x8x128xf32>
      tpu.vector_store %arg6[%c13_148, %c0_149, %c0_150], %615 {strides = array<i32>} : memref<16x8x128xf32, #tpu.memory_space<vmem>>, vector<1x8x128xf32>,
      %616 = arith.select %610, %605, %573 : vector<8x128xi1>, vector<8x128xf32>
      %617 = arith.select %610, %603, %574 : vector<8x128xi1>, vector<8x128xf32>
      %c14 = arith.constant 14 : index
      %c0_151 = arith.constant 0 : index
      %c0_152 = arith.constant 0 : index
      %618 = vector.load %arg4[%c14, %c0_151, %c0_152] : memref<16x8x512xbf16, #tpu.memory_space<vmem>>, vector<1x8x512xbf16>
      %619 = vector.shape_cast %618 : vector<1x8x512xbf16> to vector<8x512xbf16>
      %620 = arith.extf %619 : vector<8x512xbf16> to vector<8x512xf32>
      %621 = arith.truncf %616 : vector<8x128xf32> to vector<8x128xbf16>
      %cst_153 = arith.constant dense<0.000000e+00> : vector<8x512xf32>
      %622 = tpu.matmul %621, %13, %cst_153 {dimension_numbers = #tpu.dot_dimension_numbers<[1], [0], [0], [1], [0, 0, 1, 1], [], []>} : vector<8x128xbf16>, vector<128x512xbf16>, vector<8x512xf32> -> vector<8x512xf32>
      %623 = arith.addf %620, %622 : vector<8x512xf32>
      %624 = vector.extract_strided_slice %623 {offsets = [0, 0], sizes = [8, 128], strides = [1, 1]} : vector<8x512xf32> to vector<8x128xf32>
      %625 = arith.negf %624 : vector<8x128xf32>
      %626 = math.exp %625 : vector<8x128xf32>
      %cst_154 = arith.constant 1.000000e+00 : f32
      %627 = vector.broadcast %cst_154 : f32 to vector<8x128xf32>
      %628 = arith.addf %627, %626 : vector<8x128xf32>
      %629 = arith.divf %627, %628 : vector<8x128xf32>
      %630 = vector.extract_strided_slice %623 {offsets = [0, 128], sizes = [8, 128], strides = [1, 1]} : vector<8x512xf32> to vector<8x128xf32>
      %631 = arith.negf %630 : vector<8x128xf32>
      %632 = math.exp %631 : vector<8x128xf32>
      %cst_155 = arith.constant 1.000000e+00 : f32
      %633 = vector.broadcast %cst_155 : f32 to vector<8x128xf32>
      %634 = arith.addf %633, %632 : vector<8x128xf32>
      %635 = arith.divf %633, %634 : vector<8x128xf32>
      %636 = vector.extract_strided_slice %623 {offsets = [0, 256], sizes = [8, 128], strides = [1, 1]} : vector<8x512xf32> to vector<8x128xf32>
      %637 = math.tanh %636 : vector<8x128xf32>
      %638 = vector.extract_strided_slice %623 {offsets = [0, 384], sizes = [8, 128], strides = [1, 1]} : vector<8x512xf32> to vector<8x128xf32>
      %639 = arith.negf %638 : vector<8x128xf32>
      %640 = math.exp %639 : vector<8x128xf32>
      %cst_156 = arith.constant 1.000000e+00 : f32
      %641 = vector.broadcast %cst_156 : f32 to vector<8x128xf32>
      %642 = arith.addf %641, %640 : vector<8x128xf32>
      %643 = arith.divf %641, %642 : vector<8x128xf32>
      %644 = arith.mulf %635, %617 : vector<8x128xf32>
      %645 = arith.mulf %629, %637 : vector<8x128xf32>
      %646 = arith.addf %644, %645 : vector<8x128xf32>
      %647 = math.tanh %646 : vector<8x128xf32>
      %648 = arith.mulf %643, %647 : vector<8x128xf32>
      %c14_i32 = arith.constant 14 : i32
      %649 = arith.addi %0, %c14_i32 : i32
      %650 = vector.broadcast %649 : i32 to vector<8x1xi32>
      %651 = arith.cmpi slt, %650, %12 : vector<8x1xi32>
      %652 = vector.shape_cast %651 : vector<8x1xi1> to vector<8x1xi1>
      %653 = vector.broadcast %652 : vector<8x1xi1> to vector<8x128xi1>
      %cst_157 = arith.constant 0.000000e+00 : f32
      %654 = vector.broadcast %cst_157 : f32 to vector<8x128xf32>
      %655 = arith.select %653, %648, %654 : vector<8x128xi1>, vector<8x128xf32>
      %c14_158 = arith.constant 14 : index
      %c0_159 = arith.constant 0 : index
      %c0_160 = arith.constant 0 : index
      %656 = vector.load %arg6[%c14_158, %c0_159, %c0_160] : memref<16x8x128xf32, #tpu.memory_space<vmem>>, vector<1x8x128xf32>
      %657 = vector.shape_cast %656 : vector<1x8x128xf32> to vector<8x128xf32>
      %658 = vector.shape_cast %655 : vector<8x128xf32> to vector<1x8x128xf32>
      tpu.vector_store %arg6[%c14_158, %c0_159, %c0_160], %658 {strides = array<i32>} : memref<16x8x128xf32, #tpu.memory_space<vmem>>, vector<1x8x128xf32>,
      %659 = arith.select %653, %648, %616 : vector<8x128xi1>, vector<8x128xf32>
      %660 = arith.select %653, %646, %617 : vector<8x128xi1>, vector<8x128xf32>
      %c15 = arith.constant 15 : index
      %c0_161 = arith.constant 0 : index
      %c0_162 = arith.constant 0 : index
      %661 = vector.load %arg4[%c15, %c0_161, %c0_162] : memref<16x8x512xbf16, #tpu.memory_space<vmem>>, vector<1x8x512xbf16>
      %662 = vector.shape_cast %661 : vector<1x8x512xbf16> to vector<8x512xbf16>
      %663 = arith.extf %662 : vector<8x512xbf16> to vector<8x512xf32>
      %664 = arith.truncf %659 : vector<8x128xf32> to vector<8x128xbf16>
      %cst_163 = arith.constant dense<0.000000e+00> : vector<8x512xf32>
      %665 = tpu.matmul %664, %13, %cst_163 {dimension_numbers = #tpu.dot_dimension_numbers<[1], [0], [0], [1], [0, 0, 1, 1], [], []>} : vector<8x128xbf16>, vector<128x512xbf16>, vector<8x512xf32> -> vector<8x512xf32>
      %666 = arith.addf %663, %665 : vector<8x512xf32>
      %667 = vector.extract_strided_slice %666 {offsets = [0, 0], sizes = [8, 128], strides = [1, 1]} : vector<8x512xf32> to vector<8x128xf32>
      %668 = arith.negf %667 : vector<8x128xf32>
      %669 = math.exp %668 : vector<8x128xf32>
      %cst_164 = arith.constant 1.000000e+00 : f32
      %670 = vector.broadcast %cst_164 : f32 to vector<8x128xf32>
      %671 = arith.addf %670, %669 : vector<8x128xf32>
      %672 = arith.divf %670, %671 : vector<8x128xf32>
      %673 = vector.extract_strided_slice %666 {offsets = [0, 128], sizes = [8, 128], strides = [1, 1]} : vector<8x512xf32> to vector<8x128xf32>
      %674 = arith.negf %673 : vector<8x128xf32>
      %675 = math.exp %674 : vector<8x128xf32>
      %cst_165 = arith.constant 1.000000e+00 : f32
      %676 = vector.broadcast %cst_165 : f32 to vector<8x128xf32>
      %677 = arith.addf %676, %675 : vector<8x128xf32>
      %678 = arith.divf %676, %677 : vector<8x128xf32>
      %679 = vector.extract_strided_slice %666 {offsets = [0, 256], sizes = [8, 128], strides = [1, 1]} : vector<8x512xf32> to vector<8x128xf32>
      %680 = math.tanh %679 : vector<8x128xf32>
      %681 = vector.extract_strided_slice %666 {offsets = [0, 384], sizes = [8, 128], strides = [1, 1]} : vector<8x512xf32> to vector<8x128xf32>
      %682 = arith.negf %681 : vector<8x128xf32>
      %683 = math.exp %682 : vector<8x128xf32>
      %cst_166 = arith.constant 1.000000e+00 : f32
      %684 = vector.broadcast %cst_166 : f32 to vector<8x128xf32>
      %685 = arith.addf %684, %683 : vector<8x128xf32>
      %686 = arith.divf %684, %685 : vector<8x128xf32>
      %687 = arith.mulf %678, %660 : vector<8x128xf32>
      %688 = arith.mulf %672, %680 : vector<8x128xf32>
      %689 = arith.addf %687, %688 : vector<8x128xf32>
      %690 = math.tanh %689 : vector<8x128xf32>
      %691 = arith.mulf %686, %690 : vector<8x128xf32>
      %c15_i32 = arith.constant 15 : i32
      %692 = arith.addi %0, %c15_i32 : i32
      %693 = vector.broadcast %692 : i32 to vector<8x1xi32>
      %694 = arith.cmpi slt, %693, %12 : vector<8x1xi32>
      %695 = vector.shape_cast %694 : vector<8x1xi1> to vector<8x1xi1>
      %696 = vector.broadcast %695 : vector<8x1xi1> to vector<8x128xi1>
      %cst_167 = arith.constant 0.000000e+00 : f32
      %697 = vector.broadcast %cst_167 : f32 to vector<8x128xf32>
      %698 = arith.select %696, %691, %697 : vector<8x128xi1>, vector<8x128xf32>
      %c15_168 = arith.constant 15 : index
      %c0_169 = arith.constant 0 : index
      %c0_170 = arith.constant 0 : index
      %699 = vector.load %arg6[%c15_168, %c0_169, %c0_170] : memref<16x8x128xf32, #tpu.memory_space<vmem>>, vector<1x8x128xf32>
      %700 = vector.shape_cast %699 : vector<1x8x128xf32> to vector<8x128xf32>
      %701 = vector.shape_cast %698 : vector<8x128xf32> to vector<1x8x128xf32>
      tpu.vector_store %arg6[%c15_168, %c0_169, %c0_170], %701 {strides = array<i32>} : memref<16x8x128xf32, #tpu.memory_space<vmem>>, vector<1x8x128xf32>,
      %702 = arith.select %696, %691, %659 : vector<8x128xi1>, vector<8x128xf32>
      %703 = arith.select %696, %689, %660 : vector<8x128xi1>, vector<8x128xf32>
      %c0_171 = arith.constant 0 : index
      %c0_172 = arith.constant 0 : index
      %704 = vector.load %arg7[%c0_171, %c0_172] : memref<8x128xf32, #tpu.memory_space<vmem>>, vector<8x128xf32>
      tpu.vector_store %arg7[%c0_171, %c0_172], %702 {strides = array<i32>} : memref<8x128xf32, #tpu.memory_space<vmem>>, vector<8x128xf32>,
      %c0_173 = arith.constant 0 : index
      %c0_174 = arith.constant 0 : index
      %705 = vector.load %arg8[%c0_173, %c0_174] : memref<8x128xf32, #tpu.memory_space<vmem>>, vector<8x128xf32>
      tpu.vector_store %arg8[%c0_173, %c0_174], %703 {strides = array<i32>} : memref<8x128xf32, #tpu.memory_space<vmem>>, vector<8x128xf32>,
    } else {
    }
    %true = arith.constant true
    %9 = arith.xori %6, %true : i1
    %10 = arith.extui %9 : i1 to i32
    %c0_i32_2 = arith.constant 0 : i32
    %11 = arith.cmpi ne, %10, %c0_i32_2 : i32
    scf.if %11 {
      %cst = arith.constant 0.000000e+00 : f32
      %12 = vector.broadcast %cst : f32 to vector<16x8x128xf32>
      %c0 = arith.constant 0 : index
      %c0_3 = arith.constant 0 : index
      %c0_4 = arith.constant 0 : index
      %13 = vector.load %arg6[%c0, %c0_3, %c0_4] : memref<16x8x128xf32, #tpu.memory_space<vmem>>, vector<16x8x128xf32>
      tpu.vector_store %arg6[%c0, %c0_3, %c0_4], %12 {strides = array<i32>} : memref<16x8x128xf32, #tpu.memory_space<vmem>>, vector<16x8x128xf32>,
    } else {
    }
    return
  }
  func.func @transform_0(%arg0: i32, %arg1: i32, %arg2: memref<1xi32, #tpu.memory_space<smem>>) -> (i32, i32) {
    %c0_i32 = arith.constant 0 : i32
    %c0_i32_0 = arith.constant 0 : i32
    return %arg0, %c0_i32 : i32, i32
  }
  func.func @transform_1(%arg0: i32, %arg1: i32, %arg2: memref<1xi32, #tpu.memory_space<smem>>) -> (i32, i32, i32) {
    %c0_i32 = arith.constant 0 : i32
    %c0_i32_0 = arith.constant 0 : i32
    return %arg1, %arg0, %c0_i32 : i32, i32, i32
  }
  func.func @transform_3(%arg0: i32, %arg1: i32, %arg2: memref<1xi32, #tpu.memory_space<smem>>) -> (i32, i32, i32) {
    %c0_i32 = arith.constant 0 : i32
    %c0_i32_0 = arith.constant 0 : i32
    return %arg1, %arg0, %c0_i32 : i32, i32, i32
  }
  func.func @transform_4(%arg0: i32, %arg1: i32, %arg2: memref<1xi32, #tpu.memory_space<smem>>) -> (i32, i32) {
    %c0_i32 = arith.constant 0 : i32
    %c0_i32_0 = arith.constant 0 : i32
    return %arg0, %c0_i32 : i32, i32
  }
  func.func @transform_5(%arg0: i32, %arg1: i32, %arg2: memref<1xi32, #tpu.memory_space<smem>>) -> (i32, i32) {
    %c0_i32 = arith.constant 0 : i32
    %c0_i32_0 = arith.constant 0 : i32
    return %arg0, %c0_i32 : i32, i32
  }
}

</mosaic_0001>

<llo_original>
// kernel: lstm_encoder_forward.1
$region0: #{lstm_encoder_forward.1}
  #allocation0 [shape = 'u32[]', space=smem, size = 0x4, offset = 0x4, fixed_abs, tag = 'smem constant byte address 0x4 - core index']
  #allocation1 [shape = 'u32[72,128]{1,0:T(1,128)}', space=vmem, size = 0x9000, scoped, tag = 'internal scratch']
  #allocation2 [shape = 'bf16[128,512]{1,0:T(8,128)(2,1)}', space=vmem, size = 0x20000, scoped, tag = 'scratch operand']
  #allocation3 [shape = 's32[1]{0}', space=sflag, size = 0x4, scoped, tag = 'scratch operand']
  #allocation4 [shape = 's32[1]{0}', space=sflag, size = 0x4, scoped, tag = 'scoped memory for lstm_encoder_forward.1']
  #allocation5 [shape = 's32[1]{0:T(128)S(6)}', space=smem, size = 0x200, scoped, tag = 'prefetched SMEM operand 0']
  #allocation6 [shape = 's32[]', space=sflag, size = 0x4, offset = 0, fixed_abs, tag = 'sflag constant byte address 0x0 - dummy sync flag']
  %s0 = inlined_call_operand.<no memory space> [shape: s32[1], index: 0, kind: input, shape index: {}]
  %s1 = inlined_call_operand.vmem [shape: s32[8,1], index: 1, kind: input, shape index: {}]
  %s2 = inlined_call_operand.vmem [shape: bf16[32,8,512], index: 2, kind: input, shape index: {}]
  %s3 = inlined_call_operand.vmem [shape: bf16[128,512], index: 3, kind: input, shape index: {}]
  %s4 = inlined_call_operand.vmem [shape: f32[32,8,128], index: 4, kind: output, shape index: {0}]
  %s5 = inlined_call_operand.vmem [shape: f32[8,128], index: 5, kind: output, shape index: {1}]
  %s6 = inlined_call_operand.vmem [shape: f32[8,128], index: 6, kind: output, shape index: {2}]
  %7 = xla_tuple %s4, %s5, %s6
  %s8 = sld [smem:[#allocation0]]
  $region88: #{lstm_encoder_forward.1} parent=0
    _
  %s10 = ssub.s32 1, %s8
  %s11 = scalar_select 0, %s10, %s8
  %12 = sst [smem:[#allocation5]] %s0
  loop: start=0, step=1, limit=4
  $region2: #{lstm_encoder_forward.1} parent=0 // loop_pre_header
    _
  $region3: #{lstm_encoder_forward.1} parent=0 // loop_header
    %s14 = sphi 0, %s18
    %p15 = scmp.ge.s32.totalorder %s14, 4
    %s21 = sphi 0, %s33
    %s22 = sphi 0, %s29
    %s23 = sphi 0, %s21
    %s24 = sphi 0, %s22
    %s25 = sphi 0, %s23
    %s26 = sphi 0, %s24
    %s36 = sphi 0, %s38
    %s39 = sphi 0, %s36
    %s40 = sphi 0, %s39
    %s56 = sphi 0, %s40
    %s64 = sphi 0, %s66
    %s67 = sphi 0, %s64
    %s68 = sphi 0, %s67
    %s84 = sphi 0, %s68
    %s92 = sphi 0, %s94
    %s95 = sphi 0, %s92
    %s96 = sphi 0, %s95
    %s112 = sphi 0, %s96
    %s118 = sphi 0, %s120
    %s121 = sphi 0, %s118
    %s122 = sphi 0, %s121
    %s138 = sphi 0, %s122
    %s144 = sphi 0, %s146
    %s147 = sphi 0, %s144
    %s148 = sphi 0, %s147
    %s164 = sphi 0, %s148
  $region4: #{lstm_encoder_forward.1} parent=0 // loop_header_branch
    %17 = sbr.rel (%p15) target = $region8
  $region5: #{lstm_encoder_forward.1} parent=0 // loop_body
    %s19 = ssub.s32 %s14, 1
    %s20 = ssub.s32 %s14, 2
    %s27 = sadd.s32 1, %s22
    %p28 = scmp.ge.s32.totalorder %s27, 2
    %s29 = scalar_select %p28, 0, %s27
    %s30 = sadd.s32 1, %s21
    %s31 = scalar_select %p28, %s30, %s21
    %p32 = scmp.ge.s32.totalorder %s31, 1
    %s33 = scalar_select %p32, 0, %s31
    %s34 = ssub.s32 %s21, %s33
    %p35 = scmp.eq.s32.totalorder %s34, 0
    %s37 = sadd.s32 %s36, 1
    %s38 = scalar_select %p35, %s36, %s37
    %p41 = pneg %p35
    %p42 = scmp.eq.s32.totalorder %s14, 1
    %p43 = por %p41, %p42
    %p44 = scmp.ne.s32.totalorder %s36, %s39
    %p45 = scmp.eq.s32.totalorder %s14, 0
    %p46 = por %p44, %p45
    %p47 = scmp.ne.s32.totalorder %s36, %s39
    %p48 = scmp.eq.s32.totalorder %s19, 1
    %p49 = por %p47, %p48
    %p50 = scmp.ne.s32.totalorder %s39, %s40
    %p51 = scmp.eq.s32.totalorder %s19, 0
    %p52 = por %p50, %p51
    %p53 = scmp.ne.s32.totalorder %s39, %s40
    %p54 = scmp.eq.s32.totalorder %s20, 1
    %p55 = por %p53, %p54
    %p57 = scmp.ne.s32.totalorder %s40, %s56
    %p58 = scmp.eq.s32.totalorder %s20, 0
    %p59 = por %p57, %p58
    %s60 = ssub.s32 %s22, %s29
    %s61 = ssub.s32 %s21, %s33
    %s62 = sor.u32 %s60, %s61
    %p63 = scmp.eq.s32.totalorder %s62, 0
    %s65 = sadd.s32 %s64, 1
    %s66 = scalar_select %p63, %s64, %s65
    %p69 = pneg %p63
    %p70 = scmp.eq.s32.totalorder %s14, 1
    %p71 = por %p69, %p70
    %p72 = scmp.ne.s32.totalorder %s64, %s67
    %p73 = scmp.eq.s32.totalorder %s14, 0
    %p74 = por %p72, %p73
    %p75 = scmp.ne.s32.totalorder %s64, %s67
    %p76 = scmp.eq.s32.totalorder %s19, 1
    %p77 = por %p75, %p76
    %p78 = scmp.ne.s32.totalorder %s67, %s68
    %p79 = scmp.eq.s32.totalorder %s19, 0
    %p80 = por %p78, %p79
    %p81 = scmp.ne.s32.totalorder %s67, %s68
    %p82 = scmp.eq.s32.totalorder %s20, 1
    %p83 = por %p81, %p82
    %p85 = scmp.ne.s32.totalorder %s68, %s84
    %p86 = scmp.eq.s32.totalorder %s20, 0
    %p87 = por %p85, %p86
    %s88 = ssub.s32 %s22, %s29
    %s89 = ssub.s32 %s21, %s33
    %s90 = sor.u32 %s88, %s89
    %p91 = scmp.eq.s32.totalorder %s90, 0
    %s93 = sadd.s32 %s92, 1
    %s94 = scalar_select %p91, %s92, %s93
    %p97 = pneg %p91
    %p98 = scmp.eq.s32.totalorder %s14, 1
    %p99 = por %p97, %p98
    %p100 = scmp.ne.s32.totalorder %s92, %s95
    %p101 = scmp.eq.s32.totalorder %s14, 0
    %p102 = por %p100, %p101
    %p103 = scmp.ne.s32.totalorder %s92, %s95
    %p104 = scmp.eq.s32.totalorder %s19, 1
    %p105 = por %p103, %p104
    %p106 = scmp.ne.s32.totalorder %s95, %s96
    %p107 = scmp.eq.s32.totalorder %s19, 0
    %p108 = por %p106, %p107
    %p109 = scmp.ne.s32.totalorder %s95, %s96
    %p110 = scmp.eq.s32.totalorder %s20, 1
    %p111 = por %p109, %p110
    %p113 = scmp.ne.s32.totalorder %s96, %s112
    %p114 = scmp.eq.s32.totalorder %s20, 0
    %p115 = por %p113, %p114
    %s116 = ssub.s32 %s21, %s33
    %p117 = scmp.eq.s32.totalorder %s116, 0
    %s119 = sadd.s32 %s118, 1
    %s120 = scalar_select %p117, %s118, %s119
    %p123 = pneg %p117
    %p124 = scmp.eq.s32.totalorder %s14, 1
    %p125 = por %p123, %p124
    %p126 = scmp.ne.s32.totalorder %s118, %s121
    %p127 = scmp.eq.s32.totalorder %s14, 0
    %p128 = por %p126, %p127
    %p129 = scmp.ne.s32.totalorder %s118, %s121
    %p130 = scmp.eq.s32.totalorder %s19, 1
    %p131 = por %p129, %p130
    %p132 = scmp.ne.s32.totalorder %s121, %s122
    %p133 = scmp.eq.s32.totalorder %s19, 0
    %p134 = por %p132, %p133
    %p135 = scmp.ne.s32.totalorder %s121, %s122
    %p136 = scmp.eq.s32.totalorder %s20, 1
    %p137 = por %p135, %p136
    %p139 = scmp.ne.s32.totalorder %s122, %s138
    %p140 = scmp.eq.s32.totalorder %s20, 0
    %p141 = por %p139, %p140
    %s142 = ssub.s32 %s21, %s33
    %p143 = scmp.eq.s32.totalorder %s142, 0
    %s145 = sadd.s32 %s144, 1
    %s146 = scalar_select %p143, %s144, %s145
    %p149 = pneg %p143
    %p150 = scmp.eq.s32.totalorder %s14, 1
    %p151 = por %p149, %p150
    %p152 = scmp.ne.s32.totalorder %s144, %s147
    %p153 = scmp.eq.s32.totalorder %s14, 0
    %p154 = por %p152, %p153
    %p155 = scmp.ne.s32.totalorder %s144, %s147
    %p156 = scmp.eq.s32.totalorder %s19, 1
    %p157 = por %p155, %p156
    %p158 = scmp.ne.s32.totalorder %s147, %s148
    %p159 = scmp.eq.s32.totalorder %s19, 0
    %p160 = por %p158, %p159
    %p161 = scmp.ne.s32.totalorder %s147, %s148
    %p162 = scmp.eq.s32.totalorder %s20, 1
    %p163 = por %p161, %p162
    %p165 = scmp.ne.s32.totalorder %s148, %s164
    %p166 = scmp.eq.s32.totalorder %s20, 0
    %p167 = por %p165, %p166
    %p168 = scmp.le.s32.totalorder 1, %s14
    %p169 = scmp.lt.s32.totalorder %s14, 3
    %p170 = pnand %p168, %p169
    %p171 = pneg %p170
    // Predicated region
    $region9: #{lstm_encoder_forward.1} parent=5 // pred_check
      _
    $region10: #{lstm_encoder_forward.1} parent=5 // pred_check_branch
      %173 = sbr.rel (%p170) target = $region12
    $region11: #{lstm_encoder_forward.1} parent=5 // pred_region
      %s174 = ssub.s32 %s14, 1
      // Predicated region
      $region13: #{lstm_encoder_forward.1} parent=11 // pred_check
        %p175 = pneg %p52
      $region14: #{lstm_encoder_forward.1} parent=11 // pred_check_branch
        %177 = sbr.rel (%p175) target = $region16
      $region15: #{lstm_encoder_forward.1} parent=11 // pred_region
        %p178 = scmp.lt.s32.totalorder %s23, 0
        %s179 = scalar_select %p178, %s23, 0
        %s180 = smul.addr %s179, 8
        %s181 = scalar_lea.vmem %s1, %s180
      $region16: #{lstm_encoder_forward.1} parent=11 // pred_fallthru
        _
    $region12: #{lstm_encoder_forward.1} parent=5 // pred_fallthru
      _
    %p182 = scmp.lt.s32.totalorder %s14, 2
    // Predicated region
    $region17: #{lstm_encoder_forward.1} parent=5 // pred_check
      %p183 = pneg %p182
    $region18: #{lstm_encoder_forward.1} parent=5 // pred_check_branch
      %185 = sbr.rel (%p183) target = $region20
    $region19: #{lstm_encoder_forward.1} parent=5 // pred_region
      // Predicated region
      $region21: #{lstm_encoder_forward.1} parent=19 // pred_check
        %p186 = pneg %p74
      $region22: #{lstm_encoder_forward.1} parent=19 // pred_check_branch
        %188 = sbr.rel (%p186) target = $region24
      $region23: #{lstm_encoder_forward.1} parent=19 // pred_region
        %s189 = smul.u32 16, %s22
        %p190 = scmp.lt.s32.totalorder %s189, 31
        %s191 = scalar_select %p190, %s189, 31
        %p192 = scmp.lt.s32.totalorder %s21, 0
        %s193 = scalar_select %p192, %s21, 0
        %s194 = smul.addr %s193, 4
        %s195 = smul.addr %s191, 4
        %s196 = sadd.s32 %s194, %s195
        %s197 = smul.addr %s196, 4
        %s198 = scalar_lea.vmem %s2, %s197
        %s199 = smul.u32 16, %s22
      $region24: #{lstm_encoder_forward.1} parent=19 // pred_fallthru
        _
    $region20: #{lstm_encoder_forward.1} parent=5 // pred_fallthru
      _
    %p200 = scmp.le.s32.totalorder 1, %s14
    %p201 = scmp.lt.s32.totalorder %s14, 3
    %p202 = pnand %p200, %p201
    %p203 = pneg %p202
    // Predicated region
    $region25: #{lstm_encoder_forward.1} parent=5 // pred_check
      _
    $region26: #{lstm_encoder_forward.1} parent=5 // pred_check_branch
      %205 = sbr.rel (%p202) target = $region28
    $region27: #{lstm_encoder_forward.1} parent=5 // pred_region
      %s206 = ssub.s32 %s14, 1
      %p207 = scmp.lt.s32.totalorder %s23, 0
      %s208 = scalar_select %p207, %s23, 0
      %s209 = smul.addr %s208, 8
      %s210 = scalar_lea.vmem %s1, %s209
      %p211 = pneg %p52
      %p212 = pneg %p49
      %s213 = smul.u32 16, %s24
      %p214 = scmp.lt.s32.totalorder %s213, 31
      %s215 = scalar_select %p214, %s213, 31
      %p216 = scmp.lt.s32.totalorder %s23, 0
      %s217 = scalar_select %p216, %s23, 0
      %s218 = smul.addr %s217, 4
      %s219 = smul.addr %s215, 4
      %s220 = sadd.s32 %s218, %s219
      %s221 = smul.addr %s220, 4
      %s222 = scalar_lea.vmem %s2, %s221
      %p223 = pneg %p80
      %p224 = pneg %p77
      %p225 = pneg %p108
      %p226 = pneg %p105
      %s227 = smul.u32 16, %s24
      %p228 = scmp.lt.s32.totalorder %s227, 31
      %s229 = scalar_select %p228, %s227, 31
      %p230 = scmp.lt.s32.totalorder %s23, 0
      %s231 = scalar_select %p230, %s23, 0
      %s232 = sadd.s32 %s231, %s229
      %s233 = smul.addr %s232, 8
      %s234 = scalar_lea.vmem %s4, %s233
      %p235 = pneg %p134
      %p236 = pneg %p131
      %p237 = scmp.lt.s32.totalorder %s23, 0
      %s238 = scalar_select %p237, %s23, 0
      %s239 = smul.addr %s238, 8
      %s240 = scalar_lea.vmem %s5, %s239
      %p241 = pneg %p160
      %p242 = pneg %p157
      %p243 = scmp.lt.s32.totalorder %s23, 0
      %s244 = scalar_select %p243, %s23, 0
      %s245 = smul.addr %s244, 8
      %s246 = scalar_lea.vmem %s6, %s245
      %p247 = scmp.lt.s32.totalorder %s23, 0
      %s248 = scalar_select %p247, %s23, 0
      %s249 = smul.addr %s248, 8
      %s250 = scalar_lea.vmem %s1, %s249
      %s251 = smul.u32 16, %s24
      %p252 = scmp.lt.s32.totalorder %s251, 31
      %s253 = scalar_select %p252, %s251, 31
      %p254 = scmp.lt.s32.totalorder %s23, 0
      %s255 = scalar_select %p254, %s23, 0
      %s256 = smul.addr %s255, 4
      %s257 = smul.addr %s253, 4
      %s258 = sadd.s32 %s256, %s257
      %s259 = smul.addr %s258, 4
      %s260 = scalar_lea.vmem %s2, %s259
      %s261 = smul.u32 16, %s24
      %s262 = smul.u32 16, %s24
      %p263 = scmp.lt.s32.totalorder %s262, 31
      %s264 = scalar_select %p263, %s262, 31
      %p265 = scmp.lt.s32.totalorder %s23, 0
      %s266 = scalar_select %p265, %s23, 0
      %s267 = sadd.s32 %s266, %s264
      %s268 = smul.addr %s267, 8
      %s269 = scalar_lea.vmem %s4, %s268
      %s270 = smul.u32 16, %s24
      %p271 = scmp.lt.s32.totalorder %s23, 0
      %s272 = scalar_select %p271, %s23, 0
      %s273 = smul.addr %s272, 8
      %s274 = scalar_lea.vmem %s5, %s273
      %p275 = scmp.lt.s32.totalorder %s23, 0
      %s276 = scalar_select %p275, %s23, 0
      %s277 = smul.addr %s276, 8
      %s278 = scalar_lea.vmem %s6, %s277
      %s279 = smul.u32 %s24, 16
      %p280 = scmp.eq.s32.totalorder %s24, 0
      // Predicated region
      $region29: #{lstm_encoder_forward.1} parent=27 // pred_check
        %p281 = pneg %p280
      $region30: #{lstm_encoder_forward.1} parent=27 // pred_check_branch
        %283 = sbr.rel (%p281) target = $region32
      $region31: #{lstm_encoder_forward.1} parent=27 // pred_region
        %284 = vst [vmem:[%s274] sm:$0xff] 0.0
        %285 = vst [vmem:[%s278] sm:$0xff] 0.0
        // Predicated region
        $region33: #{lstm_encoder_forward.1} parent=31 // pred_check
          _
        $region34: #{lstm_encoder_forward.1} parent=31 // pred_check_branch
          %287 = sbr.rel (0) target = $region36
        $region35: #{lstm_encoder_forward.1} parent=31 // pred_region
          loop: start=0, step=1, limit=1
          $region37: #{lstm_encoder_forward.1} parent=35 // loop_pre_header
            _
          $region38: #{lstm_encoder_forward.1} parent=35 // loop_header
            %s289 = sphi 0, %s293
            %p290 = scmp.ge.s32.totalorder %s289, 1
            %s294 = sphi %s3, %s3
            %s295 = sphi [#allocation2], [#allocation2]
          $region39: #{lstm_encoder_forward.1} parent=35 // loop_header_branch
            %292 = sbr.rel (%p290) target = $region43
          $region40: #{lstm_encoder_forward.1} parent=35 // loop_body
            %v296 = vld [vmem:[%s294] sm:$0xff]
            %297 = vst [vmem:[%s295] sm:$0xff] %v296
            %v298 = vld [vmem:[%s294 + $0x8] sm:$0xff]
            %299 = vst [vmem:[%s295 + $0x8] sm:$0xff] %v298
            %v300 = vld [vmem:[%s294 + $0x10] sm:$0xff]
            %301 = vst [vmem:[%s295 + $0x10] sm:$0xff] %v300
            %v302 = vld [vmem:[%s294 + $0x18] sm:$0xff]
            %303 = vst [vmem:[%s295 + $0x18] sm:$0xff] %v302
            %v304 = vld [vmem:[%s294 + $0x20] sm:$0xff]
            %305 = vst [vmem:[%s295 + $0x20] sm:$0xff] %v304
            %v306 = vld [vmem:[%s294 + $0x28] sm:$0xff]
            %307 = vst [vmem:[%s295 + $0x28] sm:$0xff] %v306
            %v308 = vld [vmem:[%s294 + $0x30] sm:$0xff]
            %309 = vst [vmem:[%s295 + $0x30] sm:$0xff] %v308
            %v310 = vld [vmem:[%s294 + $0x38] sm:$0xff]
            %311 = vst [vmem:[%s295 + $0x38] sm:$0xff] %v310
            %v312 = vld [vmem:[%s294 + $0x40] sm:$0xff]
            %313 = vst [vmem:[%s295 + $0x40] sm:$0xff] %v312
            %v314 = vld [vmem:[%s294 + $0x48] sm:$0xff]
            %315 = vst [vmem:[%s295 + $0x48] sm:$0xff] %v314
            %v316 = vld [vmem:[%s294 + $0x50] sm:$0xff]
            %317 = vst [vmem:[%s295 + $0x50] sm:$0xff] %v316
            %v318 = vld [vmem:[%s294 + $0x58] sm:$0xff]
            %319 = vst [vmem:[%s295 + $0x58] sm:$0xff] %v318
            %v320 = vld [vmem:[%s294 + $0x60] sm:$0xff]
            %321 = vst [vmem:[%s295 + $0x60] sm:$0xff] %v320
            %v322 = vld [vmem:[%s294 + $0x68] sm:$0xff]
            %323 = vst [vmem:[%s295 + $0x68] sm:$0xff] %v322
            %v324 = vld [vmem:[%s294 + $0x70] sm:$0xff]
            %325 = vst [vmem:[%s295 + $0x70] sm:$0xff] %v324
            %v326 = vld [vmem:[%s294 + $0x78] sm:$0xff]
            %327 = vst [vmem:[%s295 + $0x78] sm:$0xff] %v326
            %v328 = vld [vmem:[%s294 + $0x80] sm:$0xff]
            %329 = vst [vmem:[%s295 + $0x80] sm:$0xff] %v328
            %v330 = vld [vmem:[%s294 + $0x88] sm:$0xff]
            %331 = vst [vmem:[%s295 + $0x88] sm:$0xff] %v330
            %v332 = vld [vmem:[%s294 + $0x90] sm:$0xff]
            %333 = vst [vmem:[%s295 + $0x90] sm:$0xff] %v332
            %v334 = vld [vmem:[%s294 + $0x98] sm:$0xff]
            %335 = vst [vmem:[%s295 + $0x98] sm:$0xff] %v334
            %v336 = vld [vmem:[%s294 + $0xa0] sm:$0xff]
            %337 = vst [vmem:[%s295 + $0xa0] sm:$0xff] %v336
            %v338 = vld [vmem:[%s294 + $0xa8] sm:$0xff]
            %339 = vst [vmem:[%s295 + $0xa8] sm:$0xff] %v338
            %v340 = vld [vmem:[%s294 + $0xb0] sm:$0xff]
            %341 = vst [vmem:[%s295 + $0xb0] sm:$0xff] %v340
            %v342 = vld [vmem:[%s294 + $0xb8] sm:$0xff]
            %343 = vst [vmem:[%s295 + $0xb8] sm:$0xff] %v342
            %v344 = vld [vmem:[%s294 + $0xc0] sm:$0xff]
            %345 = vst [vmem:[%s295 + $0xc0] sm:$0xff] %v344
            %v346 = vld [vmem:[%s294 + $0xc8] sm:$0xff]
            %347 = vst [vmem:[%s295 + $0xc8] sm:$0xff] %v346
            %v348 = vld [vmem:[%s294 + $0xd0] sm:$0xff]
            %349 = vst [vmem:[%s295 + $0xd0] sm:$0xff] %v348
            %v350 = vld [vmem:[%s294 + $0xd8] sm:$0xff]
            %351 = vst [vmem:[%s295 + $0xd8] sm:$0xff] %v350
            %v352 = vld [vmem:[%s294 + $0xe0] sm:$0xff]
            %353 = vst [vmem:[%s295 + $0xe0] sm:$0xff] %v352
            %v354 = vld [vmem:[%s294 + $0xe8] sm:$0xff]
            %355 = vst [vmem:[%s295 + $0xe8] sm:$0xff] %v354
            %v356 = vld [vmem:[%s294 + $0xf0] sm:$0xff]
            %357 = vst [vmem:[%s295 + $0xf0] sm:$0xff] %v356
            %v358 = vld [vmem:[%s294 + $0xf8] sm:$0xff]
            %359 = vst [vmem:[%s295 + $0xf8] sm:$0xff] %v358
          $region41: #{lstm_encoder_forward.1} parent=35 // loop_footer
            %s293 = sadd.s32 1, %s289
          $region42: #{lstm_encoder_forward.1} parent=35 // loop_footer_branch
            %288 = sbr.rel target = $region38
          $region43: #{lstm_encoder_forward.1} parent=35 // loop_exit
            _
        $region36: #{lstm_encoder_forward.1} parent=31 // pred_fallthru
          _
        // Predicated region
        $region44: #{lstm_encoder_forward.1} parent=31 // pred_check
          _
        $region45: #{lstm_encoder_forward.1} parent=31 // pred_check_branch
          %361 = sbr.rel target = $region47
        $region46: #{lstm_encoder_forward.1} parent=31 // pred_region
          _
        $region47: #{lstm_encoder_forward.1} parent=31 // pred_fallthru
          _
        // Predicated region
        $region48: #{lstm_encoder_forward.1} parent=31 // pred_check
          _
        $region49: #{lstm_encoder_forward.1} parent=31 // pred_check_branch
          %364 = sbr.rel (0) target = $region51
        $region50: #{lstm_encoder_forward.1} parent=31 // pred_region
          %365 = vsyncadd [#allocation3], 4096
        $region51: #{lstm_encoder_forward.1} parent=31 // pred_fallthru
          _
        %s366 = smul.u32 4, 16
        %s367 = smul.u32 %s366, 4
        %s368 = sshll.u32 %s367, 4
        %369 = dma.done [#allocation3], %s368
      $region32: #{lstm_encoder_forward.1} parent=27 // pred_fallthru
        _
      %s370 = sld [smem:[#allocation5 + %s23]]
      %p371 = scmp.lt.s32.totalorder %s279, %s370
      // Predicated region
      $region52: #{lstm_encoder_forward.1} parent=27 // pred_check
        %p372 = pneg %p371
      $region53: #{lstm_encoder_forward.1} parent=27 // pred_check_branch
        %374 = sbr.rel (%p372) target = $region55
      $region54: #{lstm_encoder_forward.1} parent=27 // pred_region
        %v375 = vld [vmem:[%s250] sm:$0xff]
        %v376 = vld [vmem:[#allocation2] sm:$0xff]
        %v377 = vld [vmem:[#allocation2 + $0x8] sm:$0xff]
        %v378 = vld [vmem:[#allocation2 + $0x10] sm:$0xff]
        %v379 = vld [vmem:[#allocation2 + $0x18] sm:$0xff]
        %v380 = vld [vmem:[#allocation2 + $0x20] sm:$0xff]
        %v381 = vld [vmem:[#allocation2 + $0x28] sm:$0xff]
        %v382 = vld [vmem:[#allocation2 + $0x30] sm:$0xff]
        %v383 = vld [vmem:[#allocation2 + $0x38] sm:$0xff]
        %v384 = vld [vmem:[#allocation2 + $0x40] sm:$0xff]
        %v385 = vld [vmem:[#allocation2 + $0x48] sm:$0xff]
        %v386 = vld [vmem:[#allocation2 + $0x50] sm:$0xff]
        %v387 = vld [vmem:[#allocation2 + $0x58] sm:$0xff]
        %v388 = vld [vmem:[#allocation2 + $0x60] sm:$0xff]
        %v389 = vld [vmem:[#allocation2 + $0x68] sm:$0xff]
        %v390 = vld [vmem:[#allocation2 + $0x70] sm:$0xff]
        %v391 = vld [vmem:[#allocation2 + $0x78] sm:$0xff]
        %v392 = vld [vmem:[#allocation2 + $0x80] sm:$0xff]
        %v393 = vld [vmem:[#allocation2 + $0x88] sm:$0xff]
        %v394 = vld [vmem:[#allocation2 + $0x90] sm:$0xff]
        %v395 = vld [vmem:[#allocation2 + $0x98] sm:$0xff]
        %v396 = vld [vmem:[#allocation2 + $0xa0] sm:$0xff]
        %v397 = vld [vmem:[#allocation2 + $0xa8] sm:$0xff]
        %v398 = vld [vmem:[#allocation2 + $0xb0] sm:$0xff]
        %v399 = vld [vmem:[#allocation2 + $0xb8] sm:$0xff]
        %v400 = vld [vmem:[#allocation2 + $0xc0] sm:$0xff]
        %v401 = vld [vmem:[#allocation2 + $0xc8] sm:$0xff]
        %v402 = vld [vmem:[#allocation2 + $0xd0] sm:$0xff]
        %v403 = vld [vmem:[#allocation2 + $0xd8] sm:$0xff]
        %v404 = vld [vmem:[#allocation2 + $0xe0] sm:$0xff]
        %v405 = vld [vmem:[#allocation2 + $0xe8] sm:$0xff]
        %v406 = vld [vmem:[#allocation2 + $0xf0] sm:$0xff]
        %v407 = vld [vmem:[#allocation2 + $0xf8] sm:$0xff]
        %v408 = vld [vmem:[%s274] sm:$0xff]
        %v409 = vld [vmem:[%s278] sm:$0xff]
        %v410 = vld [vmem:[%s260] sm:$0xff]
        %v411 = vld [vmem:[%s260 + $0x8] sm:$0xff]
        %v412 = vunpack.c.l.bf16 %v410
        %v413 = vunpack.c.h.bf16 %v410
        %v414 = vunpack.c.l.bf16 %v411
        %v415 = vunpack.c.h.bf16 %v411
        %v416 = vpack.c.bf16 %v408, %v408
        %v449 = vunpack.c.l.b16 %v376
        %v450 = vunpack.c.h.b16 %v376
        %v451 = vunpack.c.l.b16 %v377
        %v452 = vunpack.c.h.b16 %v377
        %v453 = vunpack.c.l.b16 %v378
        %v454 = vunpack.c.h.b16 %v378
        %v455 = vunpack.c.l.b16 %v379
        %v456 = vunpack.c.h.b16 %v379
        %v457 = vunpack.c.l.b16 %v380
        %v458 = vunpack.c.h.b16 %v380
        %v459 = vunpack.c.l.b16 %v381
        %v460 = vunpack.c.h.b16 %v381
        %v461 = vunpack.c.l.b16 %v382
        %v462 = vunpack.c.h.b16 %v382
        %v463 = vunpack.c.l.b16 %v383
        %v464 = vunpack.c.h.b16 %v383
        %v465 = vunpack.c.l.b16 %v384
        %v466 = vunpack.c.h.b16 %v384
        %v467 = vunpack.c.l.b16 %v385
        %v468 = vunpack.c.h.b16 %v385
        %v469 = vunpack.c.l.b16 %v386
        %v470 = vunpack.c.h.b16 %v386
        %v471 = vunpack.c.l.b16 %v387
        %v472 = vunpack.c.h.b16 %v387
        %v473 = vunpack.c.l.b16 %v388
        %v474 = vunpack.c.h.b16 %v388
        %v475 = vunpack.c.l.b16 %v389
        %v476 = vunpack.c.h.b16 %v389
        %v477 = vunpack.c.l.b16 %v390
        %v478 = vunpack.c.h.b16 %v390
        %v479 = vunpack.c.l.b16 %v391
        %v480 = vunpack.c.h.b16 %v391
        %v481 = vunpack.c.l.b16 %v392
        %v482 = vunpack.c.h.b16 %v392
        %v483 = vunpack.c.l.b16 %v393
        %v484 = vunpack.c.h.b16 %v393
        %v485 = vunpack.c.l.b16 %v394
        %v486 = vunpack.c.h.b16 %v394
        %v487 = vunpack.c.l.b16 %v395
        %v488 = vunpack.c.h.b16 %v395
        %v489 = vunpack.c.l.b16 %v396
        %v490 = vunpack.c.h.b16 %v396
        %v491 = vunpack.c.l.b16 %v397
        %v492 = vunpack.c.h.b16 %v397
        %v493 = vunpack.c.l.b16 %v398
        %v494 = vunpack.c.h.b16 %v398
        %v495 = vunpack.c.l.b16 %v399
        %v496 = vunpack.c.h.b16 %v399
        %v497 = vunpack.c.l.b16 %v400
        %v498 = vunpack.c.h.b16 %v400
        %v499 = vunpack.c.l.b16 %v401
        %v500 = vunpack.c.h.b16 %v401
        %v501 = vunpack.c.l.b16 %v402
        %v502 = vunpack.c.h.b16 %v402
        %v503 = vunpack.c.l.b16 %v403
        %v504 = vunpack.c.h.b16 %v403
        %v505 = vunpack.c.l.b16 %v404
        %v506 = vunpack.c.h.b16 %v404
        %v507 = vunpack.c.l.b16 %v405
        %v508 = vunpack.c.h.b16 %v405
        %v509 = vunpack.c.l.b16 %v406
        %v510 = vunpack.c.h.b16 %v406
        %v511 = vunpack.c.l.b16 %v407
        %v512 = vunpack.c.h.b16 %v407
        %v513 = vpack.c.b16 %v453, %v449
        %v514 = vpack.c.b16 %v454, %v450
        %v515 = vpack.c.b16 %v455, %v451
        %v516 = vpack.c.b16 %v456, %v452
        %v517 = vpack.c.b16 %v461, %v457
        %v518 = vpack.c.b16 %v462, %v458
        %v519 = vpack.c.b16 %v463, %v459
        %v520 = vpack.c.b16 %v464, %v460
        %v521 = vpack.c.b16 %v469, %v465
        %v522 = vpack.c.b16 %v470, %v466
        %v523 = vpack.c.b16 %v471, %v467
        %v524 = vpack.c.b16 %v472, %v468
        %v525 = vpack.c.b16 %v477, %v473
        %v526 = vpack.c.b16 %v478, %v474
        %v527 = vpack.c.b16 %v479, %v475
        %v528 = vpack.c.b16 %v480, %v476
        %v529 = vpack.c.b16 %v485, %v481
        %v530 = vpack.c.b16 %v486, %v482
        %v531 = vpack.c.b16 %v487, %v483
        %v532 = vpack.c.b16 %v488, %v484
        %v533 = vpack.c.b16 %v493, %v489
        %v534 = vpack.c.b16 %v494, %v490
        %v535 = vpack.c.b16 %v495, %v491
        %v536 = vpack.c.b16 %v496, %v492
        %v537 = vpack.c.b16 %v501, %v497
        %v538 = vpack.c.b16 %v502, %v498
        %v539 = vpack.c.b16 %v503, %v499
        %v540 = vpack.c.b16 %v504, %v500
        %v541 = vpack.c.b16 %v509, %v505
        %v542 = vpack.c.b16 %v510, %v506
        %v543 = vpack.c.b16 %v511, %v507
        %v544 = vpack.c.b16 %v512, %v508
        %577 = vmatpush.bf16.msra.mxu0 %v541
        %578 = vmatpush.bf16.msra.mxu0 %v537
        %579 = vmatpush.bf16.msra.mxu0 %v533
        %580 = vmatpush.bf16.msra.mxu0 %v529
        %581 = vmatpush.bf16.msra.mxu0 %v525
        %582 = vmatpush.bf16.msra.mxu0 %v521
        %583 = vmatpush.bf16.msra.mxu0 %v517
        %584 = vmatpush.bf16.msra.mxu0 %v513
        %585 = vmatmul.bf16.gmra.mxu0 %v416
        %v586 = vpop.f32.mrf.mxu0
        %v587 = vadd.f32 0.0, %v586
        %v588 = vpop.f32.mrf.mxu0
        %589 = vdwg.mxu0
        %590 = vmatpush.bf16.msra.mxu0 %v542
        %591 = vmatpush.bf16.msra.mxu0 %v538
        %592 = vmatpush.bf16.msra.mxu0 %v534
        %593 = vmatpush.bf16.msra.mxu0 %v530
        %594 = vmatpush.bf16.msra.mxu0 %v526
        %595 = vmatpush.bf16.msra.mxu0 %v522
        %596 = vmatpush.bf16.msra.mxu0 %v518
        %597 = vmatpush.bf16.msra.mxu0 %v514
        %598 = vmatmul.bf16.gmra.mxu0 %v416
        %v599 = vpop.f32.mrf.mxu0
        %v600 = vadd.f32 0.0, %v599
        %v601 = vpop.f32.mrf.mxu0
        %602 = vdwg.mxu0
        %603 = vmatpush.bf16.msra.mxu0 %v543
        %604 = vmatpush.bf16.msra.mxu0 %v539
        %605 = vmatpush.bf16.msra.mxu0 %v535
        %606 = vmatpush.bf16.msra.mxu0 %v531
        %607 = vmatpush.bf16.msra.mxu0 %v527
        %608 = vmatpush.bf16.msra.mxu0 %v523
        %609 = vmatpush.bf16.msra.mxu0 %v519
        %610 = vmatpush.bf16.msra.mxu0 %v515
        %611 = vmatmul.bf16.gmra.mxu0 %v416
        %v612 = vpop.f32.mrf.mxu0
        %v613 = vadd.f32 0.0, %v612
        %v614 = vpop.f32.mrf.mxu0
        %615 = vdwg.mxu0
        %616 = vmatpush.bf16.msra.mxu0 %v544
        %617 = vmatpush.bf16.msra.mxu0 %v540
        %618 = vmatpush.bf16.msra.mxu0 %v536
        %619 = vmatpush.bf16.msra.mxu0 %v532
        %620 = vmatpush.bf16.msra.mxu0 %v528
        %621 = vmatpush.bf16.msra.mxu0 %v524
        %622 = vmatpush.bf16.msra.mxu0 %v520
        %623 = vmatpush.bf16.msra.mxu0 %v516
        %624 = vmatmul.bf16.gmra.mxu0 %v416
        %v625 = vpop.f32.mrf.mxu0
        %v626 = vadd.f32 0.0, %v625
        %v627 = vpop.f32.mrf.mxu0
        %628 = vdwg.mxu0
        %v629 = vadd.f32 %v412, %v587
        %v630 = vadd.f32 %v413, %v600
        %v631 = vadd.f32 %v414, %v613
        %v632 = vadd.f32 %v415, %v626
        %v633 = vxor.u32 %v629, 2147483648
        %v634 = vmul.f32 %v633, 1.442695
        %v635 = vpow.pop %v634
        %v636 = vadd.f32 %v635, 1.0
        %v637 = vrcp.pop %v636
        %v638 = vmul.f32 %v636, %v637
        %v639 = vsub.f32 1.0, %v638
        %v640 = vmul.f32 %v637, %v639
        %v641 = vadd.f32 %v637, %v640
        %vm642 = vweird.f32 %v636
        %vm643 = vweird.f32 %v637
        %vm644 = vmor %vm642, %vm643
        %v645 = vsel %vm644, %v637, %v641
        %v646 = vand.u32 2147483647, %v636
        %vm647 = vcmp.eq.f32.partialorder %v646, 8.507059e+37
        %v648 = vand.u32 %v636, 2147483648
        %v649 = vor.u32 1.1754944e-38, %v648
        %v650 = vsel %vm647, %v649, %v645
        %v651 = vmul.f32 1.0, %v650
        %v652 = vxor.u32 %v630, 2147483648
        %v653 = vmul.f32 %v652, 1.442695
        %v654 = vpow.pop %v653
        %v655 = vadd.f32 %v654, 1.0
        %v656 = vrcp.pop %v655
        %v657 = vmul.f32 %v655, %v656
        %v658 = vsub.f32 1.0, %v657
        %v659 = vmul.f32 %v656, %v658
        %v660 = vadd.f32 %v656, %v659
        %vm661 = vweird.f32 %v655
        %vm662 = vweird.f32 %v656
        %vm663 = vmor %vm661, %vm662
        %v664 = vsel %vm663, %v656, %v660
        %v665 = vand.u32 2147483647, %v655
        %vm666 = vcmp.eq.f32.partialorder %v665, 8.507059e+37
        %v667 = vand.u32 %v655, 2147483648
        %v668 = vor.u32 1.1754944e-38, %v667
        %v669 = vsel %vm666, %v668, %v664
        %v670 = vmul.f32 1.0, %v669
        %v671 = vtanh.pop %v631
        %v672 = vxor.u32 %v632, 2147483648
        %v673 = vmul.f32 %v672, 1.442695
        %v674 = vpow.pop %v673
        %v675 = vadd.f32 %v674, 1.0
        %v676 = vrcp.pop %v675
        %v677 = vmul.f32 %v675, %v676
        %v678 = vsub.f32 1.0, %v677
        %v679 = vmul.f32 %v676, %v678
        %v680 = vadd.f32 %v676, %v679
        %vm681 = vweird.f32 %v675
        %vm682 = vweird.f32 %v676
        %vm683 = vmor %vm681, %vm682
        %v684 = vsel %vm683, %v676, %v680
        %v685 = vand.u32 2147483647, %v675
        %vm686 = vcmp.eq.f32.partialorder %v685, 8.507059e+37
        %v687 = vand.u32 %v675, 2147483648
        %v688 = vor.u32 1.1754944e-38, %v687
        %v689 = vsel %vm686, %v688, %v684
        %v690 = vmul.f32 1.0, %v689
        %v691 = vmul.f32 %v670, %v409
        %v692 = vmul.f32 %v651, %v671
        %v693 = vadd.f32 %v691, %v692
        %v694 = vtanh.pop %v693
        %v695 = vmul.f32 %v690, %v694
        %v696 = vstv %s279
        %vm697 = vcmp.lt.s32.totalorder %v696, %v375
        %v698 = vsel %vm697, 1, 0
        %699 = vset.pattern.permute.xlu0 0
        %700 = vperm.xlu0 %699, %v698
        %v701 = vpop.permute.xlu0 %700
        %vm702 = vcmp.eq.s32.totalorder %v701, 1
        %v703 = vsel %vm702, %v695, 0.0
        %704 = vst [vmem:[%s269] sm:$0xff] %v703
        %v705 = vsel %vm702, %v695, %v408
        %v706 = vsel %vm702, %v693, %v409
        %s707 = scalar_lea.vmem %s260, 16
        %v708 = vld [vmem:[%s707] sm:$0xff]
        %v709 = vld [vmem:[%s707 + $0x8] sm:$0xff]
        %v710 = vunpack.c.l.bf16 %v708
        %v711 = vunpack.c.h.bf16 %v708
        %v712 = vunpack.c.l.bf16 %v709
        %v713 = vunpack.c.h.bf16 %v709
        %v714 = vpack.c.bf16 %v705, %v705
        %715 = vmatpush.bf16.msra.mxu0 %v541
        %716 = vmatpush.bf16.msra.mxu0 %v537
        %717 = vmatpush.bf16.msra.mxu0 %v533
        %718 = vmatpush.bf16.msra.mxu0 %v529
        %719 = vmatpush.bf16.msra.mxu0 %v525
        %720 = vmatpush.bf16.msra.mxu0 %v521
        %721 = vmatpush.bf16.msra.mxu0 %v517
        %722 = vmatpush.bf16.msra.mxu0 %v513
        %723 = vmatmul.bf16.gmra.mxu0 %v714
        %v724 = vpop.f32.mrf.mxu0
        %v725 = vadd.f32 0.0, %v724
        %v726 = vpop.f32.mrf.mxu0
        %727 = vdwg.mxu0
        %728 = vmatpush.bf16.msra.mxu0 %v542
        %729 = vmatpush.bf16.msra.mxu0 %v538
        %730 = vmatpush.bf16.msra.mxu0 %v534
        %731 = vmatpush.bf16.msra.mxu0 %v530
        %732 = vmatpush.bf16.msra.mxu0 %v526
        %733 = vmatpush.bf16.msra.mxu0 %v522
        %734 = vmatpush.bf16.msra.mxu0 %v518
        %735 = vmatpush.bf16.msra.mxu0 %v514
        %736 = vmatmul.bf16.gmra.mxu0 %v714
        %v737 = vpop.f32.mrf.mxu0
        %v738 = vadd.f32 0.0, %v737
        %v739 = vpop.f32.mrf.mxu0
        %740 = vdwg.mxu0
        %741 = vmatpush.bf16.msra.mxu0 %v543
        %742 = vmatpush.bf16.msra.mxu0 %v539
        %743 = vmatpush.bf16.msra.mxu0 %v535
        %744 = vmatpush.bf16.msra.mxu0 %v531
        %745 = vmatpush.bf16.msra.mxu0 %v527
        %746 = vmatpush.bf16.msra.mxu0 %v523
        %747 = vmatpush.bf16.msra.mxu0 %v519
        %748 = vmatpush.bf16.msra.mxu0 %v515
        %749 = vmatmul.bf16.gmra.mxu0 %v714
        %v750 = vpop.f32.mrf.mxu0
        %v751 = vadd.f32 0.0, %v750
        %v752 = vpop.f32.mrf.mxu0
        %753 = vdwg.mxu0
        %754 = vmatpush.bf16.msra.mxu0 %v544
        %755 = vmatpush.bf16.msra.mxu0 %v540
        %756 = vmatpush.bf16.msra.mxu0 %v536
        %757 = vmatpush.bf16.msra.mxu0 %v532
        %758 = vmatpush.bf16.msra.mxu0 %v528
        %759 = vmatpush.bf16.msra.mxu0 %v524
        %760 = vmatpush.bf16.msra.mxu0 %v520
        %761 = vmatpush.bf16.msra.mxu0 %v516
        %762 = vmatmul.bf16.gmra.mxu0 %v714
        %v763 = vpop.f32.mrf.mxu0
        %v764 = vadd.f32 0.0, %v763
        %v765 = vpop.f32.mrf.mxu0
        %766 = vdwg.mxu0
        %v767 = vadd.f32 %v710, %v725
        %v768 = vadd.f32 %v711, %v738
        %v769 = vadd.f32 %v712, %v751
        %v770 = vadd.f32 %v713, %v764
        %v771 = vxor.u32 %v767, 2147483648
        %v772 = vmul.f32 %v771, 1.442695
        %v773 = vpow.pop %v772
        %v774 = vadd.f32 %v773, 1.0
        %v775 = vrcp.pop %v774
        %v776 = vmul.f32 %v774, %v775
        %v777 = vsub.f32 1.0, %v776
        %v778 = vmul.f32 %v775, %v777
        %v779 = vadd.f32 %v775, %v778
        %vm780 = vweird.f32 %v774
        %vm781 = vweird.f32 %v775
        %vm782 = vmor %vm780, %vm781
        %v783 = vsel %vm782, %v775, %v779
        %v784 = vand.u32 2147483647, %v774
        %vm785 = vcmp.eq.f32.partialorder %v784, 8.507059e+37
        %v786 = vand.u32 %v774, 2147483648
        %v787 = vor.u32 1.1754944e-38, %v786
        %v788 = vsel %vm785, %v787, %v783
        %v789 = vmul.f32 1.0, %v788
        %v790 = vxor.u32 %v768, 2147483648
        %v791 = vmul.f32 %v790, 1.442695
        %v792 = vpow.pop %v791
        %v793 = vadd.f32 %v792, 1.0
        %v794 = vrcp.pop %v793
        %v795 = vmul.f32 %v793, %v794
        %v796 = vsub.f32 1.0, %v795
        %v797 = vmul.f32 %v794, %v796
        %v798 = vadd.f32 %v794, %v797
        %vm799 = vweird.f32 %v793
        %vm800 = vweird.f32 %v794
        %vm801 = vmor %vm799, %vm800
        %v802 = vsel %vm801, %v794, %v798
        %v803 = vand.u32 2147483647, %v793
        %vm804 = vcmp.eq.f32.partialorder %v803, 8.507059e+37
        %v805 = vand.u32 %v793, 2147483648
        %v806 = vor.u32 1.1754944e-38, %v805
        %v807 = vsel %vm804, %v806, %v802
        %v808 = vmul.f32 1.0, %v807
        %v809 = vtanh.pop %v769
        %v810 = vxor.u32 %v770, 2147483648
        %v811 = vmul.f32 %v810, 1.442695
        %v812 = vpow.pop %v811
        %v813 = vadd.f32 %v812, 1.0
        %v814 = vrcp.pop %v813
        %v815 = vmul.f32 %v813, %v814
        %v816 = vsub.f32 1.0, %v815
        %v817 = vmul.f32 %v814, %v816
        %v818 = vadd.f32 %v814, %v817
        %vm819 = vweird.f32 %v813
        %vm820 = vweird.f32 %v814
        %vm821 = vmor %vm819, %vm820
        %v822 = vsel %vm821, %v814, %v818
        %v823 = vand.u32 2147483647, %v813
        %vm824 = vcmp.eq.f32.partialorder %v823, 8.507059e+37
        %v825 = vand.u32 %v813, 2147483648
        %v826 = vor.u32 1.1754944e-38, %v825
        %v827 = vsel %vm824, %v826, %v822
        %v828 = vmul.f32 1.0, %v827
        %v829 = vmul.f32 %v808, %v706
        %v830 = vmul.f32 %v789, %v809
        %v831 = vadd.f32 %v829, %v830
        %v832 = vtanh.pop %v831
        %v833 = vmul.f32 %v828, %v832
        %s834 = sadd.s32 %s279, 1
        %v835 = vstv %s834
        %vm836 = vcmp.lt.s32.totalorder %v835, %v375
        %v837 = vsel %vm836, 1, 0
        %838 = vset.pattern.permute.xlu0 0
        %839 = vperm.xlu0 %838, %v837
        %v840 = vpop.permute.xlu0 %839
        %vm841 = vcmp.eq.s32.totalorder %v840, 1
        %v842 = vsel %vm841, %v833, 0.0
        %s843 = scalar_lea.vmem %s269, 8
        %844 = vst [vmem:[%s843] sm:$0xff] %v842
        %v845 = vsel %vm841, %v833, %v705
        %v846 = vsel %vm841, %v831, %v706
        %s847 = scalar_lea.vmem %s260, 32
        %v848 = vld [vmem:[%s847] sm:$0xff]
        %v849 = vld [vmem:[%s847 + $0x8] sm:$0xff]
        %v850 = vunpack.c.l.bf16 %v848
        %v851 = vunpack.c.h.bf16 %v848
        %v852 = vunpack.c.l.bf16 %v849
        %v853 = vunpack.c.h.bf16 %v849
        %v854 = vpack.c.bf16 %v845, %v845
        %855 = vmatpush.bf16.msra.mxu0 %v541
        %856 = vmatpush.bf16.msra.mxu0 %v537
        %857 = vmatpush.bf16.msra.mxu0 %v533
        %858 = vmatpush.bf16.msra.mxu0 %v529
        %859 = vmatpush.bf16.msra.mxu0 %v525
        %860 = vmatpush.bf16.msra.mxu0 %v521
        %861 = vmatpush.bf16.msra.mxu0 %v517
        %862 = vmatpush.bf16.msra.mxu0 %v513
        %863 = vmatmul.bf16.gmra.mxu0 %v854
        %v864 = vpop.f32.mrf.mxu0
        %v865 = vadd.f32 0.0, %v864
        %v866 = vpop.f32.mrf.mxu0
        %867 = vdwg.mxu0
        %868 = vmatpush.bf16.msra.mxu0 %v542
        %869 = vmatpush.bf16.msra.mxu0 %v538
        %870 = vmatpush.bf16.msra.mxu0 %v534
        %871 = vmatpush.bf16.msra.mxu0 %v530
        %872 = vmatpush.bf16.msra.mxu0 %v526
        %873 = vmatpush.bf16.msra.mxu0 %v522
        %874 = vmatpush.bf16.msra.mxu0 %v518
        %875 = vmatpush.bf16.msra.mxu0 %v514
        %876 = vmatmul.bf16.gmra.mxu0 %v854
        %v877 = vpop.f32.mrf.mxu0
        %v878 = vadd.f32 0.0, %v877
        %v879 = vpop.f32.mrf.mxu0
        %880 = vdwg.mxu0
        %881 = vmatpush.bf16.msra.mxu0 %v543
        %882 = vmatpush.bf16.msra.mxu0 %v539
        %883 = vmatpush.bf16.msra.mxu0 %v535
        %884 = vmatpush.bf16.msra.mxu0 %v531
        %885 = vmatpush.bf16.msra.mxu0 %v527
        %886 = vmatpush.bf16.msra.mxu0 %v523
        %887 = vmatpush.bf16.msra.mxu0 %v519
        %888 = vmatpush.bf16.msra.mxu0 %v515
        %889 = vmatmul.bf16.gmra.mxu0 %v854
        %v890 = vpop.f32.mrf.mxu0
        %v891 = vadd.f32 0.0, %v890
        %v892 = vpop.f32.mrf.mxu0
        %893 = vdwg.mxu0
        %894 = vmatpush.bf16.msra.mxu0 %v544
        %895 = vmatpush.bf16.msra.mxu0 %v540
        %896 = vmatpush.bf16.msra.mxu0 %v536
        %897 = vmatpush.bf16.msra.mxu0 %v532
        %898 = vmatpush.bf16.msra.mxu0 %v528
        %899 = vmatpush.bf16.msra.mxu0 %v524
        %900 = vmatpush.bf16.msra.mxu0 %v520
        %901 = vmatpush.bf16.msra.mxu0 %v516
        %902 = vmatmul.bf16.gmra.mxu0 %v854
        %v903 = vpop.f32.mrf.mxu0
        %v904 = vadd.f32 0.0, %v903
        %v905 = vpop.f32.mrf.mxu0
        %906 = vdwg.mxu0
        %v907 = vadd.f32 %v850, %v865
        %v908 = vadd.f32 %v851, %v878
        %v909 = vadd.f32 %v852, %v891
        %v910 = vadd.f32 %v853, %v904
        %v911 = vxor.u32 %v907, 2147483648
        %v912 = vmul.f32 %v911, 1.442695
        %v913 = vpow.pop %v912
        %v914 = vadd.f32 %v913, 1.0
        %v915 = vrcp.pop %v914
        %v916 = vmul.f32 %v914, %v915
        %v917 = vsub.f32 1.0, %v916
        %v918 = vmul.f32 %v915, %v917
        %v919 = vadd.f32 %v915, %v918
        %vm920 = vweird.f32 %v914
        %vm921 = vweird.f32 %v915
        %vm922 = vmor %vm920, %vm921
        %v923 = vsel %vm922, %v915, %v919
        %v924 = vand.u32 2147483647, %v914
        %vm925 = vcmp.eq.f32.partialorder %v924, 8.507059e+37
        %v926 = vand.u32 %v914, 2147483648
        %v927 = vor.u32 1.1754944e-38, %v926
        %v928 = vsel %vm925, %v927, %v923
        %v929 = vmul.f32 1.0, %v928
        %v930 = vxor.u32 %v908, 2147483648
        %v931 = vmul.f32 %v930, 1.442695
        %v932 = vpow.pop %v931
        %v933 = vadd.f32 %v932, 1.0
        %v934 = vrcp.pop %v933
        %v935 = vmul.f32 %v933, %v934
        %v936 = vsub.f32 1.0, %v935
        %v937 = vmul.f32 %v934, %v936
        %v938 = vadd.f32 %v934, %v937
        %vm939 = vweird.f32 %v933
        %vm940 = vweird.f32 %v934
        %vm941 = vmor %vm939, %vm940
        %v942 = vsel %vm941, %v934, %v938
        %v943 = vand.u32 2147483647, %v933
        %vm944 = vcmp.eq.f32.partialorder %v943, 8.507059e+37
        %v945 = vand.u32 %v933, 2147483648
        %v946 = vor.u32 1.1754944e-38, %v945
        %v947 = vsel %vm944, %v946, %v942
        %v948 = vmul.f32 1.0, %v947
        %v949 = vtanh.pop %v909
        %v950 = vxor.u32 %v910, 2147483648
        %v951 = vmul.f32 %v950, 1.442695
        %v952 = vpow.pop %v951
        %v953 = vadd.f32 %v952, 1.0
        %v954 = vrcp.pop %v953
        %v955 = vmul.f32 %v953, %v954
        %v956 = vsub.f32 1.0, %v955
        %v957 = vmul.f32 %v954, %v956
        %v958 = vadd.f32 %v954, %v957
        %vm959 = vweird.f32 %v953
        %vm960 = vweird.f32 %v954
        %vm961 = vmor %vm959, %vm960
        %v962 = vsel %vm961, %v954, %v958
        %v963 = vand.u32 2147483647, %v953
        %vm964 = vcmp.eq.f32.partialorder %v963, 8.507059e+37
        %v965 = vand.u32 %v953, 2147483648
        %v966 = vor.u32 1.1754944e-38, %v965
        %v967 = vsel %vm964, %v966, %v962
        %v968 = vmul.f32 1.0, %v967
        %v969 = vmul.f32 %v948, %v846
        %v970 = vmul.f32 %v929, %v949
        %v971 = vadd.f32 %v969, %v970
        %v972 = vtanh.pop %v971
        %v973 = vmul.f32 %v968, %v972
        %s974 = sadd.s32 %s279, 2
        %v975 = vstv %s974
        %vm976 = vcmp.lt.s32.totalorder %v975, %v375
        %v977 = vsel %vm976, 1, 0
        %978 = vset.pattern.permute.xlu0 0
        %979 = vperm.xlu0 %978, %v977
        %v980 = vpop.permute.xlu0 %979
        %vm981 = vcmp.eq.s32.totalorder %v980, 1
        %v982 = vsel %vm981, %v973, 0.0
        %s983 = scalar_lea.vmem %s269, 16
        %984 = vst [vmem:[%s983] sm:$0xff] %v982
        %v985 = vsel %vm981, %v973, %v845
        %v986 = vsel %vm981, %v971, %v846
        %s987 = scalar_lea.vmem %s260, 48
        %v988 = vld [vmem:[%s987] sm:$0xff]
        %v989 = vld [vmem:[%s987 + $0x8] sm:$0xff]
        %v990 = vunpack.c.l.bf16 %v988
        %v991 = vunpack.c.h.bf16 %v988
        %v992 = vunpack.c.l.bf16 %v989
        %v993 = vunpack.c.h.bf16 %v989
        %v994 = vpack.c.bf16 %v985, %v985
        %995 = vmatpush.bf16.msra.mxu0 %v541
        %996 = vmatpush.bf16.msra.mxu0 %v537
        %997 = vmatpush.bf16.msra.mxu0 %v533
        %998 = vmatpush.bf16.msra.mxu0 %v529
        %999 = vmatpush.bf16.msra.mxu0 %v525
        %1000 = vmatpush.bf16.msra.mxu0 %v521
        %1001 = vmatpush.bf16.msra.mxu0 %v517
        %1002 = vmatpush.bf16.msra.mxu0 %v513
        %1003 = vmatmul.bf16.gmra.mxu0 %v994
        %v1004 = vpop.f32.mrf.mxu0
        %v1005 = vadd.f32 0.0, %v1004
        %v1006 = vpop.f32.mrf.mxu0
        %1007 = vdwg.mxu0
        %1008 = vmatpush.bf16.msra.mxu0 %v542
        %1009 = vmatpush.bf16.msra.mxu0 %v538
        %1010 = vmatpush.bf16.msra.mxu0 %v534
        %1011 = vmatpush.bf16.msra.mxu0 %v530
        %1012 = vmatpush.bf16.msra.mxu0 %v526
        %1013 = vmatpush.bf16.msra.mxu0 %v522
        %1014 = vmatpush.bf16.msra.mxu0 %v518
        %1015 = vmatpush.bf16.msra.mxu0 %v514
        %1016 = vmatmul.bf16.gmra.mxu0 %v994
        %v1017 = vpop.f32.mrf.mxu0
        %v1018 = vadd.f32 0.0, %v1017
        %v1019 = vpop.f32.mrf.mxu0
        %1020 = vdwg.mxu0
        %1021 = vmatpush.bf16.msra.mxu0 %v543
        %1022 = vmatpush.bf16.msra.mxu0 %v539
        %1023 = vmatpush.bf16.msra.mxu0 %v535
        %1024 = vmatpush.bf16.msra.mxu0 %v531
        %1025 = vmatpush.bf16.msra.mxu0 %v527
        %1026 = vmatpush.bf16.msra.mxu0 %v523
        %1027 = vmatpush.bf16.msra.mxu0 %v519
        %1028 = vmatpush.bf16.msra.mxu0 %v515
        %1029 = vmatmul.bf16.gmra.mxu0 %v994
        %v1030 = vpop.f32.mrf.mxu0
        %v1031 = vadd.f32 0.0, %v1030
        %v1032 = vpop.f32.mrf.mxu0
        %1033 = vdwg.mxu0
        %1034 = vmatpush.bf16.msra.mxu0 %v544
        %1035 = vmatpush.bf16.msra.mxu0 %v540
        %1036 = vmatpush.bf16.msra.mxu0 %v536
        %1037 = vmatpush.bf16.msra.mxu0 %v532
        %1038 = vmatpush.bf16.msra.mxu0 %v528
        %1039 = vmatpush.bf16.msra.mxu0 %v524
        %1040 = vmatpush.bf16.msra.mxu0 %v520
        %1041 = vmatpush.bf16.msra.mxu0 %v516
        %1042 = vmatmul.bf16.gmra.mxu0 %v994
        %v1043 = vpop.f32.mrf.mxu0
        %v1044 = vadd.f32 0.0, %v1043
        %v1045 = vpop.f32.mrf.mxu0
        %1046 = vdwg.mxu0
        %v1047 = vadd.f32 %v990, %v1005
        %v1048 = vadd.f32 %v991, %v1018
        %v1049 = vadd.f32 %v992, %v1031
        %v1050 = vadd.f32 %v993, %v1044
        %v1051 = vxor.u32 %v1047, 2147483648
        %v1052 = vmul.f32 %v1051, 1.442695
        %v1053 = vpow.pop %v1052
        %v1054 = vadd.f32 %v1053, 1.0
        %v1055 = vrcp.pop %v1054
        %v1056 = vmul.f32 %v1054, %v1055
        %v1057 = vsub.f32 1.0, %v1056
        %v1058 = vmul.f32 %v1055, %v1057
        %v1059 = vadd.f32 %v1055, %v1058
        %vm1060 = vweird.f32 %v1054
        %vm1061 = vweird.f32 %v1055
        %vm1062 = vmor %vm1060, %vm1061
        %v1063 = vsel %vm1062, %v1055, %v1059
        %v1064 = vand.u32 2147483647, %v1054
        %vm1065 = vcmp.eq.f32.partialorder %v1064, 8.507059e+37
        %v1066 = vand.u32 %v1054, 2147483648
        %v1067 = vor.u32 1.1754944e-38, %v1066
        %v1068 = vsel %vm1065, %v1067, %v1063
        %v1069 = vmul.f32 1.0, %v1068
        %v1070 = vxor.u32 %v1048, 2147483648
        %v1071 = vmul.f32 %v1070, 1.442695
        %v1072 = vpow.pop %v1071
        %v1073 = vadd.f32 %v1072, 1.0
        %v1074 = vrcp.pop %v1073
        %v1075 = vmul.f32 %v1073, %v1074
        %v1076 = vsub.f32 1.0, %v1075
        %v1077 = vmul.f32 %v1074, %v1076
        %v1078 = vadd.f32 %v1074, %v1077
        %vm1079 = vweird.f32 %v1073
        %vm1080 = vweird.f32 %v1074
        %vm1081 = vmor %vm1079, %vm1080
        %v1082 = vsel %vm1081, %v1074, %v1078
        %v1083 = vand.u32 2147483647, %v1073
        %vm1084 = vcmp.eq.f32.partialorder %v1083, 8.507059e+37
        %v1085 = vand.u32 %v1073, 2147483648
        %v1086 = vor.u32 1.1754944e-38, %v1085
        %v1087 = vsel %vm1084, %v1086, %v1082
        %v1088 = vmul.f32 1.0, %v1087
        %v1089 = vtanh.pop %v1049
        %v1090 = vxor.u32 %v1050, 2147483648
        %v1091 = vmul.f32 %v1090, 1.442695
        %v1092 = vpow.pop %v1091
        %v1093 = vadd.f32 %v1092, 1.0
        %v1094 = vrcp.pop %v1093
        %v1095 = vmul.f32 %v1093, %v1094
        %v1096 = vsub.f32 1.0, %v1095
        %v1097 = vmul.f32 %v1094, %v1096
        %v1098 = vadd.f32 %v1094, %v1097
        %vm1099 = vweird.f32 %v1093
        %vm1100 = vweird.f32 %v1094
        %vm1101 = vmor %vm1099, %vm1100
        %v1102 = vsel %vm1101, %v1094, %v1098
        %v1103 = vand.u32 2147483647, %v1093
        %vm1104 = vcmp.eq.f32.partialorder %v1103, 8.507059e+37
        %v1105 = vand.u32 %v1093, 2147483648
        %v1106 = vor.u32 1.1754944e-38, %v1105
        %v1107 = vsel %vm1104, %v1106, %v1102
        %v1108 = vmul.f32 1.0, %v1107
        %v1109 = vmul.f32 %v1088, %v986
        %v1110 = vmul.f32 %v1069, %v1089
        %v1111 = vadd.f32 %v1109, %v1110
        %v1112 = vtanh.pop %v1111
        %v1113 = vmul.f32 %v1108, %v1112
        %s1114 = sadd.s32 %s279, 3
        %v1115 = vstv %s1114
        %vm1116 = vcmp.lt.s32.totalorder %v1115, %v375
        %v1117 = vsel %vm1116, 1, 0
        %1118 = vset.pattern.permute.xlu0 0
        %1119 = vperm.xlu0 %1118, %v1117
        %v1120 = vpop.permute.xlu0 %1119
        %vm1121 = vcmp.eq.s32.totalorder %v1120, 1
        %v1122 = vsel %vm1121, %v1113, 0.0
        %s1123 = scalar_lea.vmem %s269, 24
        %1124 = vst [vmem:[%s1123] sm:$0xff] %v1122
        %v1125 = vsel %vm1121, %v1113, %v985
        %v1126 = vsel %vm1121, %v1111, %v986
        %s1127 = scalar_lea.vmem %s260, 64
        %v1128 = vld [vmem:[%s1127] sm:$0xff]
        %v1129 = vld [vmem:[%s1127 + $0x8] sm:$0xff]
        %v1130 = vunpack.c.l.bf16 %v1128
        %v1131 = vunpack.c.h.bf16 %v1128
        %v1132 = vunpack.c.l.bf16 %v1129
        %v1133 = vunpack.c.h.bf16 %v1129
        %v1134 = vpack.c.bf16 %v1125, %v1125
        %1135 = vmatpush.bf16.msra.mxu0 %v541
        %1136 = vmatpush.bf16.msra.mxu0 %v537
        %1137 = vmatpush.bf16.msra.mxu0 %v533
        %1138 = vmatpush.bf16.msra.mxu0 %v529
        %1139 = vmatpush.bf16.msra.mxu0 %v525
        %1140 = vmatpush.bf16.msra.mxu0 %v521
        %1141 = vmatpush.bf16.msra.mxu0 %v517
        %1142 = vmatpush.bf16.msra.mxu0 %v513
        %1143 = vmatmul.bf16.gmra.mxu0 %v1134
        %v1144 = vpop.f32.mrf.mxu0
        %v1145 = vadd.f32 0.0, %v1144
        %v1146 = vpop.f32.mrf.mxu0
        %1147 = vdwg.mxu0
        %1148 = vmatpush.bf16.msra.mxu0 %v542
        %1149 = vmatpush.bf16.msra.mxu0 %v538
        %1150 = vmatpush.bf16.msra.mxu0 %v534
        %1151 = vmatpush.bf16.msra.mxu0 %v530
        %1152 = vmatpush.bf16.msra.mxu0 %v526
        %1153 = vmatpush.bf16.msra.mxu0 %v522
        %1154 = vmatpush.bf16.msra.mxu0 %v518
        %1155 = vmatpush.bf16.msra.mxu0 %v514
        %1156 = vmatmul.bf16.gmra.mxu0 %v1134
        %v1157 = vpop.f32.mrf.mxu0
        %v1158 = vadd.f32 0.0, %v1157
        %v1159 = vpop.f32.mrf.mxu0
        %1160 = vdwg.mxu0
        %1161 = vmatpush.bf16.msra.mxu0 %v543
        %1162 = vmatpush.bf16.msra.mxu0 %v539
        %1163 = vmatpush.bf16.msra.mxu0 %v535
        %1164 = vmatpush.bf16.msra.mxu0 %v531
        %1165 = vmatpush.bf16.msra.mxu0 %v527
        %1166 = vmatpush.bf16.msra.mxu0 %v523
        %1167 = vmatpush.bf16.msra.mxu0 %v519
        %1168 = vmatpush.bf16.msra.mxu0 %v515
        %1169 = vmatmul.bf16.gmra.mxu0 %v1134
        %v1170 = vpop.f32.mrf.mxu0
        %v1171 = vadd.f32 0.0, %v1170
        %v1172 = vpop.f32.mrf.mxu0
        %1173 = vdwg.mxu0
        %1174 = vmatpush.bf16.msra.mxu0 %v544
        %1175 = vmatpush.bf16.msra.mxu0 %v540
        %1176 = vmatpush.bf16.msra.mxu0 %v536
        %1177 = vmatpush.bf16.msra.mxu0 %v532
        %1178 = vmatpush.bf16.msra.mxu0 %v528
        %1179 = vmatpush.bf16.msra.mxu0 %v524
        %1180 = vmatpush.bf16.msra.mxu0 %v520
        %1181 = vmatpush.bf16.msra.mxu0 %v516
        %1182 = vmatmul.bf16.gmra.mxu0 %v1134
        %v1183 = vpop.f32.mrf.mxu0
        %v1184 = vadd.f32 0.0, %v1183
        %v1185 = vpop.f32.mrf.mxu0
        %1186 = vdwg.mxu0
        %v1187 = vadd.f32 %v1130, %v1145
        %v1188 = vadd.f32 %v1131, %v1158
        %v1189 = vadd.f32 %v1132, %v1171
        %v1190 = vadd.f32 %v1133, %v1184
        %v1191 = vxor.u32 %v1187, 2147483648
        %v1192 = vmul.f32 %v1191, 1.442695
        %v1193 = vpow.pop %v1192
        %v1194 = vadd.f32 %v1193, 1.0
        %v1195 = vrcp.pop %v1194
        %v1196 = vmul.f32 %v1194, %v1195
        %v1197 = vsub.f32 1.0, %v1196
        %v1198 = vmul.f32 %v1195, %v1197
        %v1199 = vadd.f32 %v1195, %v1198
        %vm1200 = vweird.f32 %v1194
        %vm1201 = vweird.f32 %v1195
        %vm1202 = vmor %vm1200, %vm1201
        %v1203 = vsel %vm1202, %v1195, %v1199
        %v1204 = vand.u32 2147483647, %v1194
        %vm1205 = vcmp.eq.f32.partialorder %v1204, 8.507059e+37
        %v1206 = vand.u32 %v1194, 2147483648
        %v1207 = vor.u32 1.1754944e-38, %v1206
        %v1208 = vsel %vm1205, %v1207, %v1203
        %v1209 = vmul.f32 1.0, %v1208
        %v1210 = vxor.u32 %v1188, 2147483648
        %v1211 = vmul.f32 %v1210, 1.442695
        %v1212 = vpow.pop %v1211
        %v1213 = vadd.f32 %v1212, 1.0
        %v1214 = vrcp.pop %v1213
        %v1215 = vmul.f32 %v1213, %v1214
        %v1216 = vsub.f32 1.0, %v1215
        %v1217 = vmul.f32 %v1214, %v1216
        %v1218 = vadd.f32 %v1214, %v1217
        %vm1219 = vweird.f32 %v1213
        %vm1220 = vweird.f32 %v1214
        %vm1221 = vmor %vm1219, %vm1220
        %v1222 = vsel %vm1221, %v1214, %v1218
        %v1223 = vand.u32 2147483647, %v1213
        %vm1224 = vcmp.eq.f32.partialorder %v1223, 8.507059e+37
        %v1225 = vand.u32 %v1213, 2147483648
        %v1226 = vor.u32 1.1754944e-38, %v1225
        %v1227 = vsel %vm1224, %v1226, %v1222
        %v1228 = vmul.f32 1.0, %v1227
        %v1229 = vtanh.pop %v1189
        %v1230 = vxor.u32 %v1190, 2147483648
        %v1231 = vmul.f32 %v1230, 1.442695
        %v1232 = vpow.pop %v1231
        %v1233 = vadd.f32 %v1232, 1.0
        %v1234 = vrcp.pop %v1233
        %v1235 = vmul.f32 %v1233, %v1234
        %v1236 = vsub.f32 1.0, %v1235
        %v1237 = vmul.f32 %v1234, %v1236
        %v1238 = vadd.f32 %v1234, %v1237
        %vm1239 = vweird.f32 %v1233
        %vm1240 = vweird.f32 %v1234
        %vm1241 = vmor %vm1239, %vm1240
        %v1242 = vsel %vm1241, %v1234, %v1238
        %v1243 = vand.u32 2147483647, %v1233
        %vm1244 = vcmp.eq.f32.partialorder %v1243, 8.507059e+37
        %v1245 = vand.u32 %v1233, 2147483648
        %v1246 = vor.u32 1.1754944e-38, %v1245
        %v1247 = vsel %vm1244, %v1246, %v1242
        %v1248 = vmul.f32 1.0, %v1247
        %v1249 = vmul.f32 %v1228, %v1126
        %v1250 = vmul.f32 %v1209, %v1229
        %v1251 = vadd.f32 %v1249, %v1250
        %v1252 = vtanh.pop %v1251
        %v1253 = vmul.f32 %v1248, %v1252
        %s1254 = sadd.s32 %s279, 4
        %v1255 = vstv %s1254
        %vm1256 = vcmp.lt.s32.totalorder %v1255, %v375
        %v1257 = vsel %vm1256, 1, 0
        %1258 = vset.pattern.permute.xlu0 0
        %1259 = vperm.xlu0 %1258, %v1257
        %v1260 = vpop.permute.xlu0 %1259
        %vm1261 = vcmp.eq.s32.totalorder %v1260, 1
        %v1262 = vsel %vm1261, %v1253, 0.0
        %s1263 = scalar_lea.vmem %s269, 32
        %1264 = vst [vmem:[%s1263] sm:$0xff] %v1262
        %v1265 = vsel %vm1261, %v1253, %v1125
        %v1266 = vsel %vm1261, %v1251, %v1126
        %s1267 = scalar_lea.vmem %s260, 80
        %v1268 = vld [vmem:[%s1267] sm:$0xff]
        %v1269 = vld [vmem:[%s1267 + $0x8] sm:$0xff]
        %v1270 = vunpack.c.l.bf16 %v1268
        %v1271 = vunpack.c.h.bf16 %v1268
        %v1272 = vunpack.c.l.bf16 %v1269
        %v1273 = vunpack.c.h.bf16 %v1269
        %v1274 = vpack.c.bf16 %v1265, %v1265
        %1275 = vmatpush.bf16.msra.mxu0 %v541
        %1276 = vmatpush.bf16.msra.mxu0 %v537
        %1277 = vmatpush.bf16.msra.mxu0 %v533
        %1278 = vmatpush.bf16.msra.mxu0 %v529
        %1279 = vmatpush.bf16.msra.mxu0 %v525
        %1280 = vmatpush.bf16.msra.mxu0 %v521
        %1281 = vmatpush.bf16.msra.mxu0 %v517
        %1282 = vmatpush.bf16.msra.mxu0 %v513
        %1283 = vmatmul.bf16.gmra.mxu0 %v1274
        %v1284 = vpop.f32.mrf.mxu0
        %v1285 = vadd.f32 0.0, %v1284
        %v1286 = vpop.f32.mrf.mxu0
        %1287 = vdwg.mxu0
        %1288 = vmatpush.bf16.msra.mxu0 %v542
        %1289 = vmatpush.bf16.msra.mxu0 %v538
        %1290 = vmatpush.bf16.msra.mxu0 %v534
        %1291 = vmatpush.bf16.msra.mxu0 %v530
        %1292 = vmatpush.bf16.msra.mxu0 %v526
        %1293 = vmatpush.bf16.msra.mxu0 %v522
        %1294 = vmatpush.bf16.msra.mxu0 %v518
        %1295 = vmatpush.bf16.msra.mxu0 %v514
        %1296 = vmatmul.bf16.gmra.mxu0 %v1274
        %v1297 = vpop.f32.mrf.mxu0
        %v1298 = vadd.f32 0.0, %v1297
        %v1299 = vpop.f32.mrf.mxu0
        %1300 = vdwg.mxu0
        %1301 = vmatpush.bf16.msra.mxu0 %v543
        %1302 = vmatpush.bf16.msra.mxu0 %v539
        %1303 = vmatpush.bf16.msra.mxu0 %v535
        %1304 = vmatpush.bf16.msra.mxu0 %v531
        %1305 = vmatpush.bf16.msra.mxu0 %v527
        %1306 = vmatpush.bf16.msra.mxu0 %v523
        %1307 = vmatpush.bf16.msra.mxu0 %v519
        %1308 = vmatpush.bf16.msra.mxu0 %v515
        %1309 = vmatmul.bf16.gmra.mxu0 %v1274
        %v1310 = vpop.f32.mrf.mxu0
        %v1311 = vadd.f32 0.0, %v1310
        %v1312 = vpop.f32.mrf.mxu0
        %1313 = vdwg.mxu0
        %1314 = vmatpush.bf16.msra.mxu0 %v544
        %1315 = vmatpush.bf16.msra.mxu0 %v540
        %1316 = vmatpush.bf16.msra.mxu0 %v536
        %1317 = vmatpush.bf16.msra.mxu0 %v532
        %1318 = vmatpush.bf16.msra.mxu0 %v528
        %1319 = vmatpush.bf16.msra.mxu0 %v524
        %1320 = vmatpush.bf16.msra.mxu0 %v520
        %1321 = vmatpush.bf16.msra.mxu0 %v516
        %1322 = vmatmul.bf16.gmra.mxu0 %v1274
        %v1323 = vpop.f32.mrf.mxu0
        %v1324 = vadd.f32 0.0, %v1323
        %v1325 = vpop.f32.mrf.mxu0
        %1326 = vdwg.mxu0
        %v1327 = vadd.f32 %v1270, %v1285
        %v1328 = vadd.f32 %v1271, %v1298
        %v1329 = vadd.f32 %v1272, %v1311
        %v1330 = vadd.f32 %v1273, %v1324
        %v1331 = vxor.u32 %v1327, 2147483648
        %v1332 = vmul.f32 %v1331, 1.442695
        %v1333 = vpow.pop %v1332
        %v1334 = vadd.f32 %v1333, 1.0
        %v1335 = vrcp.pop %v1334
        %v1336 = vmul.f32 %v1334, %v1335
        %v1337 = vsub.f32 1.0, %v1336
        %v1338 = vmul.f32 %v1335, %v1337
        %v1339 = vadd.f32 %v1335, %v1338
        %vm1340 = vweird.f32 %v1334
        %vm1341 = vweird.f32 %v1335
        %vm1342 = vmor %vm1340, %vm1341
        %v1343 = vsel %vm1342, %v1335, %v1339
        %v1344 = vand.u32 2147483647, %v1334
        %vm1345 = vcmp.eq.f32.partialorder %v1344, 8.507059e+37
        %v1346 = vand.u32 %v1334, 2147483648
        %v1347 = vor.u32 1.1754944e-38, %v1346
        %v1348 = vsel %vm1345, %v1347, %v1343
        %v1349 = vmul.f32 1.0, %v1348
        %v1350 = vxor.u32 %v1328, 2147483648
        %v1351 = vmul.f32 %v1350, 1.442695
        %v1352 = vpow.pop %v1351
        %v1353 = vadd.f32 %v1352, 1.0
        %v1354 = vrcp.pop %v1353
        %v1355 = vmul.f32 %v1353, %v1354
        %v1356 = vsub.f32 1.0, %v1355
        %v1357 = vmul.f32 %v1354, %v1356
        %v1358 = vadd.f32 %v1354, %v1357
        %vm1359 = vweird.f32 %v1353
        %vm1360 = vweird.f32 %v1354
        %vm1361 = vmor %vm1359, %vm1360
        %v1362 = vsel %vm1361, %v1354, %v1358
        %v1363 = vand.u32 2147483647, %v1353
        %vm1364 = vcmp.eq.f32.partialorder %v1363, 8.507059e+37
        %v1365 = vand.u32 %v1353, 2147483648
        %v1366 = vor.u32 1.1754944e-38, %v1365
        %v1367 = vsel %vm1364, %v1366, %v1362
        %v1368 = vmul.f32 1.0, %v1367
        %v1369 = vtanh.pop %v1329
        %v1370 = vxor.u32 %v1330, 2147483648
        %v1371 = vmul.f32 %v1370, 1.442695
        %v1372 = vpow.pop %v1371
        %v1373 = vadd.f32 %v1372, 1.0
        %v1374 = vrcp.pop %v1373
        %v1375 = vmul.f32 %v1373, %v1374
        %v1376 = vsub.f32 1.0, %v1375
        %v1377 = vmul.f32 %v1374, %v1376
        %v1378 = vadd.f32 %v1374, %v1377
        %vm1379 = vweird.f32 %v1373
        %vm1380 = vweird.f32 %v1374
        %vm1381 = vmor %vm1379, %vm1380
        %v1382 = vsel %vm1381, %v1374, %v1378
        %v1383 = vand.u32 2147483647, %v1373
        %vm1384 = vcmp.eq.f32.partialorder %v1383, 8.507059e+37
        %v1385 = vand.u32 %v1373, 2147483648
        %v1386 = vor.u32 1.1754944e-38, %v1385
        %v1387 = vsel %vm1384, %v1386, %v1382
        %v1388 = vmul.f32 1.0, %v1387
        %v1389 = vmul.f32 %v1368, %v1266
        %v1390 = vmul.f32 %v1349, %v1369
        %v1391 = vadd.f32 %v1389, %v1390
        %v1392 = vtanh.pop %v1391
        %v1393 = vmul.f32 %v1388, %v1392
        %s1394 = sadd.s32 %s279, 5
        %v1395 = vstv %s1394
        %vm1396 = vcmp.lt.s32.totalorder %v1395, %v375
        %v1397 = vsel %vm1396, 1, 0
        %1398 = vset.pattern.permute.xlu0 0
        %1399 = vperm.xlu0 %1398, %v1397
        %v1400 = vpop.permute.xlu0 %1399
        %vm1401 = vcmp.eq.s32.totalorder %v1400, 1
        %v1402 = vsel %vm1401, %v1393, 0.0
        %s1403 = scalar_lea.vmem %s269, 40
        %1404 = vst [vmem:[%s1403] sm:$0xff] %v1402
        %v1405 = vsel %vm1401, %v1393, %v1265
        %v1406 = vsel %vm1401, %v1391, %v1266
        %s1407 = scalar_lea.vmem %s260, 96
        %v1408 = vld [vmem:[%s1407] sm:$0xff]
        %v1409 = vld [vmem:[%s1407 + $0x8] sm:$0xff]
        %v1410 = vunpack.c.l.bf16 %v1408
        %v1411 = vunpack.c.h.bf16 %v1408
        %v1412 = vunpack.c.l.bf16 %v1409
        %v1413 = vunpack.c.h.bf16 %v1409
        %v1414 = vpack.c.bf16 %v1405, %v1405
        %1415 = vmatpush.bf16.msra.mxu0 %v541
        %1416 = vmatpush.bf16.msra.mxu0 %v537
        %1417 = vmatpush.bf16.msra.mxu0 %v533
        %1418 = vmatpush.bf16.msra.mxu0 %v529
        %1419 = vmatpush.bf16.msra.mxu0 %v525
        %1420 = vmatpush.bf16.msra.mxu0 %v521
        %1421 = vmatpush.bf16.msra.mxu0 %v517
        %1422 = vmatpush.bf16.msra.mxu0 %v513
        %1423 = vmatmul.bf16.gmra.mxu0 %v1414
        %v1424 = vpop.f32.mrf.mxu0
        %v1425 = vadd.f32 0.0, %v1424
        %v1426 = vpop.f32.mrf.mxu0
        %1427 = vdwg.mxu0
        %1428 = vmatpush.bf16.msra.mxu0 %v542
        %1429 = vmatpush.bf16.msra.mxu0 %v538
        %1430 = vmatpush.bf16.msra.mxu0 %v534
        %1431 = vmatpush.bf16.msra.mxu0 %v530
        %1432 = vmatpush.bf16.msra.mxu0 %v526
        %1433 = vmatpush.bf16.msra.mxu0 %v522
        %1434 = vmatpush.bf16.msra.mxu0 %v518
        %1435 = vmatpush.bf16.msra.mxu0 %v514
        %1436 = vmatmul.bf16.gmra.mxu0 %v1414
        %v1437 = vpop.f32.mrf.mxu0
        %v1438 = vadd.f32 0.0, %v1437
        %v1439 = vpop.f32.mrf.mxu0
        %1440 = vdwg.mxu0
        %1441 = vmatpush.bf16.msra.mxu0 %v543
        %1442 = vmatpush.bf16.msra.mxu0 %v539
        %1443 = vmatpush.bf16.msra.mxu0 %v535
        %1444 = vmatpush.bf16.msra.mxu0 %v531
        %1445 = vmatpush.bf16.msra.mxu0 %v527
        %1446 = vmatpush.bf16.msra.mxu0 %v523
        %1447 = vmatpush.bf16.msra.mxu0 %v519
        %1448 = vmatpush.bf16.msra.mxu0 %v515
        %1449 = vmatmul.bf16.gmra.mxu0 %v1414
        %v1450 = vpop.f32.mrf.mxu0
        %v1451 = vadd.f32 0.0, %v1450
        %v1452 = vpop.f32.mrf.mxu0
        %1453 = vdwg.mxu0
        %1454 = vmatpush.bf16.msra.mxu0 %v544
        %1455 = vmatpush.bf16.msra.mxu0 %v540
        %1456 = vmatpush.bf16.msra.mxu0 %v536
        %1457 = vmatpush.bf16.msra.mxu0 %v532
        %1458 = vmatpush.bf16.msra.mxu0 %v528
        %1459 = vmatpush.bf16.msra.mxu0 %v524
        %1460 = vmatpush.bf16.msra.mxu0 %v520
        %1461 = vmatpush.bf16.msra.mxu0 %v516
        %1462 = vmatmul.bf16.gmra.mxu0 %v1414
        %v1463 = vpop.f32.mrf.mxu0
        %v1464 = vadd.f32 0.0, %v1463
        %v1465 = vpop.f32.mrf.mxu0
        %1466 = vdwg.mxu0
        %v1467 = vadd.f32 %v1410, %v1425
        %v1468 = vadd.f32 %v1411, %v1438
        %v1469 = vadd.f32 %v1412, %v1451
        %v1470 = vadd.f32 %v1413, %v1464
        %v1471 = vxor.u32 %v1467, 2147483648
        %v1472 = vmul.f32 %v1471, 1.442695
        %v1473 = vpow.pop %v1472
        %v1474 = vadd.f32 %v1473, 1.0
        %v1475 = vrcp.pop %v1474
        %v1476 = vmul.f32 %v1474, %v1475
        %v1477 = vsub.f32 1.0, %v1476
        %v1478 = vmul.f32 %v1475, %v1477
        %v1479 = vadd.f32 %v1475, %v1478
        %vm1480 = vweird.f32 %v1474
        %vm1481 = vweird.f32 %v1475
        %vm1482 = vmor %vm1480, %vm1481
        %v1483 = vsel %vm1482, %v1475, %v1479
        %v1484 = vand.u32 2147483647, %v1474
        %vm1485 = vcmp.eq.f32.partialorder %v1484, 8.507059e+37
        %v1486 = vand.u32 %v1474, 2147483648
        %v1487 = vor.u32 1.1754944e-38, %v1486
        %v1488 = vsel %vm1485, %v1487, %v1483
        %v1489 = vmul.f32 1.0, %v1488
        %v1490 = vxor.u32 %v1468, 2147483648
        %v1491 = vmul.f32 %v1490, 1.442695
        %v1492 = vpow.pop %v1491
        %v1493 = vadd.f32 %v1492, 1.0
        %v1494 = vrcp.pop %v1493
        %v1495 = vmul.f32 %v1493, %v1494
        %v1496 = vsub.f32 1.0, %v1495
        %v1497 = vmul.f32 %v1494, %v1496
        %v1498 = vadd.f32 %v1494, %v1497
        %vm1499 = vweird.f32 %v1493
        %vm1500 = vweird.f32 %v1494
        %vm1501 = vmor %vm1499, %vm1500
        %v1502 = vsel %vm1501, %v1494, %v1498
        %v1503 = vand.u32 2147483647, %v1493
        %vm1504 = vcmp.eq.f32.partialorder %v1503, 8.507059e+37
        %v1505 = vand.u32 %v1493, 2147483648
        %v1506 = vor.u32 1.1754944e-38, %v1505
        %v1507 = vsel %vm1504, %v1506, %v1502
        %v1508 = vmul.f32 1.0, %v1507
        %v1509 = vtanh.pop %v1469
        %v1510 = vxor.u32 %v1470, 2147483648
        %v1511 = vmul.f32 %v1510, 1.442695
        %v1512 = vpow.pop %v1511
        %v1513 = vadd.f32 %v1512, 1.0
        %v1514 = vrcp.pop %v1513
        %v1515 = vmul.f32 %v1513, %v1514
        %v1516 = vsub.f32 1.0, %v1515
        %v1517 = vmul.f32 %v1514, %v1516
        %v1518 = vadd.f32 %v1514, %v1517
        %vm1519 = vweird.f32 %v1513
        %vm1520 = vweird.f32 %v1514
        %vm1521 = vmor %vm1519, %vm1520
        %v1522 = vsel %vm1521, %v1514, %v1518
        %v1523 = vand.u32 2147483647, %v1513
        %vm1524 = vcmp.eq.f32.partialorder %v1523, 8.507059e+37
        %v1525 = vand.u32 %v1513, 2147483648
        %v1526 = vor.u32 1.1754944e-38, %v1525
        %v1527 = vsel %vm1524, %v1526, %v1522
        %v1528 = vmul.f32 1.0, %v1527
        %v1529 = vmul.f32 %v1508, %v1406
        %v1530 = vmul.f32 %v1489, %v1509
        %v1531 = vadd.f32 %v1529, %v1530
        %v1532 = vtanh.pop %v1531
        %v1533 = vmul.f32 %v1528, %v1532
        %s1534 = sadd.s32 %s279, 6
        %v1535 = vstv %s1534
        %vm1536 = vcmp.lt.s32.totalorder %v1535, %v375
        %v1537 = vsel %vm1536, 1, 0
        %1538 = vset.pattern.permute.xlu0 0
        %1539 = vperm.xlu0 %1538, %v1537
        %v1540 = vpop.permute.xlu0 %1539
        %vm1541 = vcmp.eq.s32.totalorder %v1540, 1
        %v1542 = vsel %vm1541, %v1533, 0.0
        %s1543 = scalar_lea.vmem %s269, 48
        %1544 = vst [vmem:[%s1543] sm:$0xff] %v1542
        %v1545 = vsel %vm1541, %v1533, %v1405
        %v1546 = vsel %vm1541, %v1531, %v1406
        %s1547 = scalar_lea.vmem %s260, 112
        %v1548 = vld [vmem:[%s1547] sm:$0xff]
        %v1549 = vld [vmem:[%s1547 + $0x8] sm:$0xff]
        %v1550 = vunpack.c.l.bf16 %v1548
        %v1551 = vunpack.c.h.bf16 %v1548
        %v1552 = vunpack.c.l.bf16 %v1549
        %v1553 = vunpack.c.h.bf16 %v1549
        %v1554 = vpack.c.bf16 %v1545, %v1545
        %1555 = vmatpush.bf16.msra.mxu0 %v541
        %1556 = vmatpush.bf16.msra.mxu0 %v537
        %1557 = vmatpush.bf16.msra.mxu0 %v533
        %1558 = vmatpush.bf16.msra.mxu0 %v529
        %1559 = vmatpush.bf16.msra.mxu0 %v525
        %1560 = vmatpush.bf16.msra.mxu0 %v521
        %1561 = vmatpush.bf16.msra.mxu0 %v517
        %1562 = vmatpush.bf16.msra.mxu0 %v513
        %1563 = vmatmul.bf16.gmra.mxu0 %v1554
        %v1564 = vpop.f32.mrf.mxu0
        %v1565 = vadd.f32 0.0, %v1564
        %v1566 = vpop.f32.mrf.mxu0
        %1567 = vdwg.mxu0
        %1568 = vmatpush.bf16.msra.mxu0 %v542
        %1569 = vmatpush.bf16.msra.mxu0 %v538
        %1570 = vmatpush.bf16.msra.mxu0 %v534
        %1571 = vmatpush.bf16.msra.mxu0 %v530
        %1572 = vmatpush.bf16.msra.mxu0 %v526
        %1573 = vmatpush.bf16.msra.mxu0 %v522
        %1574 = vmatpush.bf16.msra.mxu0 %v518
        %1575 = vmatpush.bf16.msra.mxu0 %v514
        %1576 = vmatmul.bf16.gmra.mxu0 %v1554
        %v1577 = vpop.f32.mrf.mxu0
        %v1578 = vadd.f32 0.0, %v1577
        %v1579 = vpop.f32.mrf.mxu0
        %1580 = vdwg.mxu0
        %1581 = vmatpush.bf16.msra.mxu0 %v543
        %1582 = vmatpush.bf16.msra.mxu0 %v539
        %1583 = vmatpush.bf16.msra.mxu0 %v535
        %1584 = vmatpush.bf16.msra.mxu0 %v531
        %1585 = vmatpush.bf16.msra.mxu0 %v527
        %1586 = vmatpush.bf16.msra.mxu0 %v523
        %1587 = vmatpush.bf16.msra.mxu0 %v519
        %1588 = vmatpush.bf16.msra.mxu0 %v515
        %1589 = vmatmul.bf16.gmra.mxu0 %v1554
        %v1590 = vpop.f32.mrf.mxu0
        %v1591 = vadd.f32 0.0, %v1590
        %v1592 = vpop.f32.mrf.mxu0
        %1593 = vdwg.mxu0
        %1594 = vmatpush.bf16.msra.mxu0 %v544
        %1595 = vmatpush.bf16.msra.mxu0 %v540
        %1596 = vmatpush.bf16.msra.mxu0 %v536
        %1597 = vmatpush.bf16.msra.mxu0 %v532
        %1598 = vmatpush.bf16.msra.mxu0 %v528
        %1599 = vmatpush.bf16.msra.mxu0 %v524
        %1600 = vmatpush.bf16.msra.mxu0 %v520
        %1601 = vmatpush.bf16.msra.mxu0 %v516
        %1602 = vmatmul.bf16.gmra.mxu0 %v1554
        %v1603 = vpop.f32.mrf.mxu0
        %v1604 = vadd.f32 0.0, %v1603
        %v1605 = vpop.f32.mrf.mxu0
        %1606 = vdwg.mxu0
        %v1607 = vadd.f32 %v1550, %v1565
        %v1608 = vadd.f32 %v1551, %v1578
        %v1609 = vadd.f32 %v1552, %v1591
        %v1610 = vadd.f32 %v1553, %v1604
        %v1611 = vxor.u32 %v1607, 2147483648
        %v1612 = vmul.f32 %v1611, 1.442695
        %v1613 = vpow.pop %v1612
        %v1614 = vadd.f32 %v1613, 1.0
        %v1615 = vrcp.pop %v1614
        %v1616 = vmul.f32 %v1614, %v1615
        %v1617 = vsub.f32 1.0, %v1616
        %v1618 = vmul.f32 %v1615, %v1617
        %v1619 = vadd.f32 %v1615, %v1618
        %vm1620 = vweird.f32 %v1614
        %vm1621 = vweird.f32 %v1615
        %vm1622 = vmor %vm1620, %vm1621
        %v1623 = vsel %vm1622, %v1615, %v1619
        %v1624 = vand.u32 2147483647, %v1614
        %vm1625 = vcmp.eq.f32.partialorder %v1624, 8.507059e+37
        %v1626 = vand.u32 %v1614, 2147483648
        %v1627 = vor.u32 1.1754944e-38, %v1626
        %v1628 = vsel %vm1625, %v1627, %v1623
        %v1629 = vmul.f32 1.0, %v1628
        %v1630 = vxor.u32 %v1608, 2147483648
        %v1631 = vmul.f32 %v1630, 1.442695
        %v1632 = vpow.pop %v1631
        %v1633 = vadd.f32 %v1632, 1.0
        %v1634 = vrcp.pop %v1633
        %v1635 = vmul.f32 %v1633, %v1634
        %v1636 = vsub.f32 1.0, %v1635
        %v1637 = vmul.f32 %v1634, %v1636
        %v1638 = vadd.f32 %v1634, %v1637
        %vm1639 = vweird.f32 %v1633
        %vm1640 = vweird.f32 %v1634
        %vm1641 = vmor %vm1639, %vm1640
        %v1642 = vsel %vm1641, %v1634, %v1638
        %v1643 = vand.u32 2147483647, %v1633
        %vm1644 = vcmp.eq.f32.partialorder %v1643, 8.507059e+37
        %v1645 = vand.u32 %v1633, 2147483648
        %v1646 = vor.u32 1.1754944e-38, %v1645
        %v1647 = vsel %vm1644, %v1646, %v1642
        %v1648 = vmul.f32 1.0, %v1647
        %v1649 = vtanh.pop %v1609
        %v1650 = vxor.u32 %v1610, 2147483648
        %v1651 = vmul.f32 %v1650, 1.442695
        %v1652 = vpow.pop %v1651
        %v1653 = vadd.f32 %v1652, 1.0
        %v1654 = vrcp.pop %v1653
        %v1655 = vmul.f32 %v1653, %v1654
        %v1656 = vsub.f32 1.0, %v1655
        %v1657 = vmul.f32 %v1654, %v1656
        %v1658 = vadd.f32 %v1654, %v1657
        %vm1659 = vweird.f32 %v1653
        %vm1660 = vweird.f32 %v1654
        %vm1661 = vmor %vm1659, %vm1660
        %v1662 = vsel %vm1661, %v1654, %v1658
        %v1663 = vand.u32 2147483647, %v1653
        %vm1664 = vcmp.eq.f32.partialorder %v1663, 8.507059e+37
        %v1665 = vand.u32 %v1653, 2147483648
        %v1666 = vor.u32 1.1754944e-38, %v1665
        %v1667 = vsel %vm1664, %v1666, %v1662
        %v1668 = vmul.f32 1.0, %v1667
        %v1669 = vmul.f32 %v1648, %v1546
        %v1670 = vmul.f32 %v1629, %v1649
        %v1671 = vadd.f32 %v1669, %v1670
        %v1672 = vtanh.pop %v1671
        %v1673 = vmul.f32 %v1668, %v1672
        %s1674 = sadd.s32 %s279, 7
        %v1675 = vstv %s1674
        %vm1676 = vcmp.lt.s32.totalorder %v1675, %v375
        %v1677 = vsel %vm1676, 1, 0
        %1678 = vset.pattern.permute.xlu0 0
        %1679 = vperm.xlu0 %1678, %v1677
        %v1680 = vpop.permute.xlu0 %1679
        %vm1681 = vcmp.eq.s32.totalorder %v1680, 1
        %v1682 = vsel %vm1681, %v1673, 0.0
        %s1683 = scalar_lea.vmem %s269, 56
        %1684 = vst [vmem:[%s1683] sm:$0xff] %v1682
        %v1685 = vsel %vm1681, %v1673, %v1545
        %v1686 = vsel %vm1681, %v1671, %v1546
        %s1687 = scalar_lea.vmem %s260, 128
        %v1688 = vld [vmem:[%s1687] sm:$0xff]
        %v1689 = vld [vmem:[%s1687 + $0x8] sm:$0xff]
        %v1690 = vunpack.c.l.bf16 %v1688
        %v1691 = vunpack.c.h.bf16 %v1688
        %v1692 = vunpack.c.l.bf16 %v1689
        %v1693 = vunpack.c.h.bf16 %v1689
        %v1694 = vpack.c.bf16 %v1685, %v1685
        %1695 = vmatpush.bf16.msra.mxu0 %v541
        %1696 = vmatpush.bf16.msra.mxu0 %v537
        %1697 = vmatpush.bf16.msra.mxu0 %v533
        %1698 = vmatpush.bf16.msra.mxu0 %v529
        %1699 = vmatpush.bf16.msra.mxu0 %v525
        %1700 = vmatpush.bf16.msra.mxu0 %v521
        %1701 = vmatpush.bf16.msra.mxu0 %v517
        %1702 = vmatpush.bf16.msra.mxu0 %v513
        %1703 = vmatmul.bf16.gmra.mxu0 %v1694
        %v1704 = vpop.f32.mrf.mxu0
        %v1705 = vadd.f32 0.0, %v1704
        %v1706 = vpop.f32.mrf.mxu0
        %1707 = vdwg.mxu0
        %1708 = vmatpush.bf16.msra.mxu0 %v542
        %1709 = vmatpush.bf16.msra.mxu0 %v538
        %1710 = vmatpush.bf16.msra.mxu0 %v534
        %1711 = vmatpush.bf16.msra.mxu0 %v530
        %1712 = vmatpush.bf16.msra.mxu0 %v526
        %1713 = vmatpush.bf16.msra.mxu0 %v522
        %1714 = vmatpush.bf16.msra.mxu0 %v518
        %1715 = vmatpush.bf16.msra.mxu0 %v514
        %1716 = vmatmul.bf16.gmra.mxu0 %v1694
        %v1717 = vpop.f32.mrf.mxu0
        %v1718 = vadd.f32 0.0, %v1717
        %v1719 = vpop.f32.mrf.mxu0
        %1720 = vdwg.mxu0
        %1721 = vmatpush.bf16.msra.mxu0 %v543
        %1722 = vmatpush.bf16.msra.mxu0 %v539
        %1723 = vmatpush.bf16.msra.mxu0 %v535
        %1724 = vmatpush.bf16.msra.mxu0 %v531
        %1725 = vmatpush.bf16.msra.mxu0 %v527
        %1726 = vmatpush.bf16.msra.mxu0 %v523
        %1727 = vmatpush.bf16.msra.mxu0 %v519
        %1728 = vmatpush.bf16.msra.mxu0 %v515
        %1729 = vmatmul.bf16.gmra.mxu0 %v1694
        %v1730 = vpop.f32.mrf.mxu0
        %v1731 = vadd.f32 0.0, %v1730
        %v1732 = vpop.f32.mrf.mxu0
        %1733 = vdwg.mxu0
        %1734 = vmatpush.bf16.msra.mxu0 %v544
        %1735 = vmatpush.bf16.msra.mxu0 %v540
        %1736 = vmatpush.bf16.msra.mxu0 %v536
        %1737 = vmatpush.bf16.msra.mxu0 %v532
        %1738 = vmatpush.bf16.msra.mxu0 %v528
        %1739 = vmatpush.bf16.msra.mxu0 %v524
        %1740 = vmatpush.bf16.msra.mxu0 %v520
        %1741 = vmatpush.bf16.msra.mxu0 %v516
        %1742 = vmatmul.bf16.gmra.mxu0 %v1694
        %v1743 = vpop.f32.mrf.mxu0
        %v1744 = vadd.f32 0.0, %v1743
        %v1745 = vpop.f32.mrf.mxu0
        %1746 = vdwg.mxu0
        %v1747 = vadd.f32 %v1690, %v1705
        %v1748 = vadd.f32 %v1691, %v1718
        %v1749 = vadd.f32 %v1692, %v1731
        %v1750 = vadd.f32 %v1693, %v1744
        %v1751 = vxor.u32 %v1747, 2147483648
        %v1752 = vmul.f32 %v1751, 1.442695
        %v1753 = vpow.pop %v1752
        %v1754 = vadd.f32 %v1753, 1.0
        %v1755 = vrcp.pop %v1754
        %v1756 = vmul.f32 %v1754, %v1755
        %v1757 = vsub.f32 1.0, %v1756
        %v1758 = vmul.f32 %v1755, %v1757
        %v1759 = vadd.f32 %v1755, %v1758
        %vm1760 = vweird.f32 %v1754
        %vm1761 = vweird.f32 %v1755
        %vm1762 = vmor %vm1760, %vm1761
        %v1763 = vsel %vm1762, %v1755, %v1759
        %v1764 = vand.u32 2147483647, %v1754
        %vm1765 = vcmp.eq.f32.partialorder %v1764, 8.507059e+37
        %v1766 = vand.u32 %v1754, 2147483648
        %v1767 = vor.u32 1.1754944e-38, %v1766
        %v1768 = vsel %vm1765, %v1767, %v1763
        %v1769 = vmul.f32 1.0, %v1768
        %v1770 = vxor.u32 %v1748, 2147483648
        %v1771 = vmul.f32 %v1770, 1.442695
        %v1772 = vpow.pop %v1771
        %v1773 = vadd.f32 %v1772, 1.0
        %v1774 = vrcp.pop %v1773
        %v1775 = vmul.f32 %v1773, %v1774
        %v1776 = vsub.f32 1.0, %v1775
        %v1777 = vmul.f32 %v1774, %v1776
        %v1778 = vadd.f32 %v1774, %v1777
        %vm1779 = vweird.f32 %v1773
        %vm1780 = vweird.f32 %v1774
        %vm1781 = vmor %vm1779, %vm1780
        %v1782 = vsel %vm1781, %v1774, %v1778
        %v1783 = vand.u32 2147483647, %v1773
        %vm1784 = vcmp.eq.f32.partialorder %v1783, 8.507059e+37
        %v1785 = vand.u32 %v1773, 2147483648
        %v1786 = vor.u32 1.1754944e-38, %v1785
        %v1787 = vsel %vm1784, %v1786, %v1782
        %v1788 = vmul.f32 1.0, %v1787
        %v1789 = vtanh.pop %v1749
        %v1790 = vxor.u32 %v1750, 2147483648
        %v1791 = vmul.f32 %v1790, 1.442695
        %v1792 = vpow.pop %v1791
        %v1793 = vadd.f32 %v1792, 1.0
        %v1794 = vrcp.pop %v1793
        %v1795 = vmul.f32 %v1793, %v1794
        %v1796 = vsub.f32 1.0, %v1795
        %v1797 = vmul.f32 %v1794, %v1796
        %v1798 = vadd.f32 %v1794, %v1797
        %vm1799 = vweird.f32 %v1793
        %vm1800 = vweird.f32 %v1794
        %vm1801 = vmor %vm1799, %vm1800
        %v1802 = vsel %vm1801, %v1794, %v1798
        %v1803 = vand.u32 2147483647, %v1793
        %vm1804 = vcmp.eq.f32.partialorder %v1803, 8.507059e+37
        %v1805 = vand.u32 %v1793, 2147483648
        %v1806 = vor.u32 1.1754944e-38, %v1805
        %v1807 = vsel %vm1804, %v1806, %v1802
        %v1808 = vmul.f32 1.0, %v1807
        %v1809 = vmul.f32 %v1788, %v1686
        %v1810 = vmul.f32 %v1769, %v1789
        %v1811 = vadd.f32 %v1809, %v1810
        %v1812 = vtanh.pop %v1811
        %v1813 = vmul.f32 %v1808, %v1812
        %s1814 = sadd.s32 %s279, 8
        %v1815 = vstv %s1814
        %vm1816 = vcmp.lt.s32.totalorder %v1815, %v375
        %v1817 = vsel %vm1816, 1, 0
        %1818 = vset.pattern.permute.xlu0 0
        %1819 = vperm.xlu0 %1818, %v1817
        %v1820 = vpop.permute.xlu0 %1819
        %vm1821 = vcmp.eq.s32.totalorder %v1820, 1
        %v1822 = vsel %vm1821, %v1813, 0.0
        %s1823 = scalar_lea.vmem %s269, 64
        %1824 = vst [vmem:[%s1823] sm:$0xff] %v1822
        %v1825 = vsel %vm1821, %v1813, %v1685
        %v1826 = vsel %vm1821, %v1811, %v1686
        %s1827 = scalar_lea.vmem %s260, 144
        %v1828 = vld [vmem:[%s1827] sm:$0xff]
        %v1829 = vld [vmem:[%s1827 + $0x8] sm:$0xff]
        %v1830 = vunpack.c.l.bf16 %v1828
        %v1831 = vunpack.c.h.bf16 %v1828
        %v1832 = vunpack.c.l.bf16 %v1829
        %v1833 = vunpack.c.h.bf16 %v1829
        %v1834 = vpack.c.bf16 %v1825, %v1825
        %1835 = vmatpush.bf16.msra.mxu0 %v541
        %1836 = vmatpush.bf16.msra.mxu0 %v537
        %1837 = vmatpush.bf16.msra.mxu0 %v533
        %1838 = vmatpush.bf16.msra.mxu0 %v529
        %1839 = vmatpush.bf16.msra.mxu0 %v525
        %1840 = vmatpush.bf16.msra.mxu0 %v521
        %1841 = vmatpush.bf16.msra.mxu0 %v517
        %1842 = vmatpush.bf16.msra.mxu0 %v513
        %1843 = vmatmul.bf16.gmra.mxu0 %v1834
        %v1844 = vpop.f32.mrf.mxu0
        %v1845 = vadd.f32 0.0, %v1844
        %v1846 = vpop.f32.mrf.mxu0
        %1847 = vdwg.mxu0
        %1848 = vmatpush.bf16.msra.mxu0 %v542
        %1849 = vmatpush.bf16.msra.mxu0 %v538
        %1850 = vmatpush.bf16.msra.mxu0 %v534
        %1851 = vmatpush.bf16.msra.mxu0 %v530
        %1852 = vmatpush.bf16.msra.mxu0 %v526
        %1853 = vmatpush.bf16.msra.mxu0 %v522
        %1854 = vmatpush.bf16.msra.mxu0 %v518
        %1855 = vmatpush.bf16.msra.mxu0 %v514
        %1856 = vmatmul.bf16.gmra.mxu0 %v1834
        %v1857 = vpop.f32.mrf.mxu0
        %v1858 = vadd.f32 0.0, %v1857
        %v1859 = vpop.f32.mrf.mxu0
        %1860 = vdwg.mxu0
        %1861 = vmatpush.bf16.msra.mxu0 %v543
        %1862 = vmatpush.bf16.msra.mxu0 %v539
        %1863 = vmatpush.bf16.msra.mxu0 %v535
        %1864 = vmatpush.bf16.msra.mxu0 %v531
        %1865 = vmatpush.bf16.msra.mxu0 %v527
        %1866 = vmatpush.bf16.msra.mxu0 %v523
        %1867 = vmatpush.bf16.msra.mxu0 %v519
        %1868 = vmatpush.bf16.msra.mxu0 %v515
        %1869 = vmatmul.bf16.gmra.mxu0 %v1834
        %v1870 = vpop.f32.mrf.mxu0
        %v1871 = vadd.f32 0.0, %v1870
        %v1872 = vpop.f32.mrf.mxu0
        %1873 = vdwg.mxu0
        %1874 = vmatpush.bf16.msra.mxu0 %v544
        %1875 = vmatpush.bf16.msra.mxu0 %v540
        %1876 = vmatpush.bf16.msra.mxu0 %v536
        %1877 = vmatpush.bf16.msra.mxu0 %v532
        %1878 = vmatpush.bf16.msra.mxu0 %v528
        %1879 = vmatpush.bf16.msra.mxu0 %v524
        %1880 = vmatpush.bf16.msra.mxu0 %v520
        %1881 = vmatpush.bf16.msra.mxu0 %v516
        %1882 = vmatmul.bf16.gmra.mxu0 %v1834
        %v1883 = vpop.f32.mrf.mxu0
        %v1884 = vadd.f32 0.0, %v1883
        %v1885 = vpop.f32.mrf.mxu0
        %1886 = vdwg.mxu0
        %v1887 = vadd.f32 %v1830, %v1845
        %v1888 = vadd.f32 %v1831, %v1858
        %v1889 = vadd.f32 %v1832, %v1871
        %v1890 = vadd.f32 %v1833, %v1884
        %v1891 = vxor.u32 %v1887, 2147483648
        %v1892 = vmul.f32 %v1891, 1.442695
        %v1893 = vpow.pop %v1892
        %v1894 = vadd.f32 %v1893, 1.0
        %v1895 = vrcp.pop %v1894
        %v1896 = vmul.f32 %v1894, %v1895
        %v1897 = vsub.f32 1.0, %v1896
        %v1898 = vmul.f32 %v1895, %v1897
        %v1899 = vadd.f32 %v1895, %v1898
        %vm1900 = vweird.f32 %v1894
        %vm1901 = vweird.f32 %v1895
        %vm1902 = vmor %vm1900, %vm1901
        %v1903 = vsel %vm1902, %v1895, %v1899
        %v1904 = vand.u32 2147483647, %v1894
        %vm1905 = vcmp.eq.f32.partialorder %v1904, 8.507059e+37
        %v1906 = vand.u32 %v1894, 2147483648
        %v1907 = vor.u32 1.1754944e-38, %v1906
        %v1908 = vsel %vm1905, %v1907, %v1903
        %v1909 = vmul.f32 1.0, %v1908
        %v1910 = vxor.u32 %v1888, 2147483648
        %v1911 = vmul.f32 %v1910, 1.442695
        %v1912 = vpow.pop %v1911
        %v1913 = vadd.f32 %v1912, 1.0
        %v1914 = vrcp.pop %v1913
        %v1915 = vmul.f32 %v1913, %v1914
        %v1916 = vsub.f32 1.0, %v1915
        %v1917 = vmul.f32 %v1914, %v1916
        %v1918 = vadd.f32 %v1914, %v1917
        %vm1919 = vweird.f32 %v1913
        %vm1920 = vweird.f32 %v1914
        %vm1921 = vmor %vm1919, %vm1920
        %v1922 = vsel %vm1921, %v1914, %v1918
        %v1923 = vand.u32 2147483647, %v1913
        %vm1924 = vcmp.eq.f32.partialorder %v1923, 8.507059e+37
        %v1925 = vand.u32 %v1913, 2147483648
        %v1926 = vor.u32 1.1754944e-38, %v1925
        %v1927 = vsel %vm1924, %v1926, %v1922
        %v1928 = vmul.f32 1.0, %v1927
        %v1929 = vtanh.pop %v1889
        %v1930 = vxor.u32 %v1890, 2147483648
        %v1931 = vmul.f32 %v1930, 1.442695
        %v1932 = vpow.pop %v1931
        %v1933 = vadd.f32 %v1932, 1.0
        %v1934 = vrcp.pop %v1933
        %v1935 = vmul.f32 %v1933, %v1934
        %v1936 = vsub.f32 1.0, %v1935
        %v1937 = vmul.f32 %v1934, %v1936
        %v1938 = vadd.f32 %v1934, %v1937
        %vm1939 = vweird.f32 %v1933
        %vm1940 = vweird.f32 %v1934
        %vm1941 = vmor %vm1939, %vm1940
        %v1942 = vsel %vm1941, %v1934, %v1938
        %v1943 = vand.u32 2147483647, %v1933
        %vm1944 = vcmp.eq.f32.partialorder %v1943, 8.507059e+37
        %v1945 = vand.u32 %v1933, 2147483648
        %v1946 = vor.u32 1.1754944e-38, %v1945
        %v1947 = vsel %vm1944, %v1946, %v1942
        %v1948 = vmul.f32 1.0, %v1947
        %v1949 = vmul.f32 %v1928, %v1826
        %v1950 = vmul.f32 %v1909, %v1929
        %v1951 = vadd.f32 %v1949, %v1950
        %v1952 = vtanh.pop %v1951
        %v1953 = vmul.f32 %v1948, %v1952
        %s1954 = sadd.s32 %s279, 9
        %v1955 = vstv %s1954
        %vm1956 = vcmp.lt.s32.totalorder %v1955, %v375
        %v1957 = vsel %vm1956, 1, 0
        %1958 = vset.pattern.permute.xlu0 0
        %1959 = vperm.xlu0 %1958, %v1957
        %v1960 = vpop.permute.xlu0 %1959
        %vm1961 = vcmp.eq.s32.totalorder %v1960, 1
        %v1962 = vsel %vm1961, %v1953, 0.0
        %s1963 = scalar_lea.vmem %s269, 72
        %1964 = vst [vmem:[%s1963] sm:$0xff] %v1962
        %v1965 = vsel %vm1961, %v1953, %v1825
        %v1966 = vsel %vm1961, %v1951, %v1826
        %s1967 = scalar_lea.vmem %s260, 160
        %v1968 = vld [vmem:[%s1967] sm:$0xff]
        %v1969 = vld [vmem:[%s1967 + $0x8] sm:$0xff]
        %v1970 = vunpack.c.l.bf16 %v1968
        %v1971 = vunpack.c.h.bf16 %v1968
        %v1972 = vunpack.c.l.bf16 %v1969
        %v1973 = vunpack.c.h.bf16 %v1969
        %v1974 = vpack.c.bf16 %v1965, %v1965
        %1975 = vmatpush.bf16.msra.mxu0 %v541
        %1976 = vmatpush.bf16.msra.mxu0 %v537
        %1977 = vmatpush.bf16.msra.mxu0 %v533
        %1978 = vmatpush.bf16.msra.mxu0 %v529
        %1979 = vmatpush.bf16.msra.mxu0 %v525
        %1980 = vmatpush.bf16.msra.mxu0 %v521
        %1981 = vmatpush.bf16.msra.mxu0 %v517
        %1982 = vmatpush.bf16.msra.mxu0 %v513
        %1983 = vmatmul.bf16.gmra.mxu0 %v1974
        %v1984 = vpop.f32.mrf.mxu0
        %v1985 = vadd.f32 0.0, %v1984
        %v1986 = vpop.f32.mrf.mxu0
        %1987 = vdwg.mxu0
        %1988 = vmatpush.bf16.msra.mxu0 %v542
        %1989 = vmatpush.bf16.msra.mxu0 %v538
        %1990 = vmatpush.bf16.msra.mxu0 %v534
        %1991 = vmatpush.bf16.msra.mxu0 %v530
        %1992 = vmatpush.bf16.msra.mxu0 %v526
        %1993 = vmatpush.bf16.msra.mxu0 %v522
        %1994 = vmatpush.bf16.msra.mxu0 %v518
        %1995 = vmatpush.bf16.msra.mxu0 %v514
        %1996 = vmatmul.bf16.gmra.mxu0 %v1974
        %v1997 = vpop.f32.mrf.mxu0
        %v1998 = vadd.f32 0.0, %v1997
        %v1999 = vpop.f32.mrf.mxu0
        %2000 = vdwg.mxu0
        %2001 = vmatpush.bf16.msra.mxu0 %v543
        %2002 = vmatpush.bf16.msra.mxu0 %v539
        %2003 = vmatpush.bf16.msra.mxu0 %v535
        %2004 = vmatpush.bf16.msra.mxu0 %v531
        %2005 = vmatpush.bf16.msra.mxu0 %v527
        %2006 = vmatpush.bf16.msra.mxu0 %v523
        %2007 = vmatpush.bf16.msra.mxu0 %v519
        %2008 = vmatpush.bf16.msra.mxu0 %v515
        %2009 = vmatmul.bf16.gmra.mxu0 %v1974
        %v2010 = vpop.f32.mrf.mxu0
        %v2011 = vadd.f32 0.0, %v2010
        %v2012 = vpop.f32.mrf.mxu0
        %2013 = vdwg.mxu0
        %2014 = vmatpush.bf16.msra.mxu0 %v544
        %2015 = vmatpush.bf16.msra.mxu0 %v540
        %2016 = vmatpush.bf16.msra.mxu0 %v536
        %2017 = vmatpush.bf16.msra.mxu0 %v532
        %2018 = vmatpush.bf16.msra.mxu0 %v528
        %2019 = vmatpush.bf16.msra.mxu0 %v524
        %2020 = vmatpush.bf16.msra.mxu0 %v520
        %2021 = vmatpush.bf16.msra.mxu0 %v516
        %2022 = vmatmul.bf16.gmra.mxu0 %v1974
        %v2023 = vpop.f32.mrf.mxu0
        %v2024 = vadd.f32 0.0, %v2023
        %v2025 = vpop.f32.mrf.mxu0
        %2026 = vdwg.mxu0
        %v2027 = vadd.f32 %v1970, %v1985
        %v2028 = vadd.f32 %v1971, %v1998
        %v2029 = vadd.f32 %v1972, %v2011
        %v2030 = vadd.f32 %v1973, %v2024
        %v2031 = vxor.u32 %v2027, 2147483648
        %v2032 = vmul.f32 %v2031, 1.442695
        %v2033 = vpow.pop %v2032
        %v2034 = vadd.f32 %v2033, 1.0
        %v2035 = vrcp.pop %v2034
        %v2036 = vmul.f32 %v2034, %v2035
        %v2037 = vsub.f32 1.0, %v2036
        %v2038 = vmul.f32 %v2035, %v2037
        %v2039 = vadd.f32 %v2035, %v2038
        %vm2040 = vweird.f32 %v2034
        %vm2041 = vweird.f32 %v2035
        %vm2042 = vmor %vm2040, %vm2041
        %v2043 = vsel %vm2042, %v2035, %v2039
        %v2044 = vand.u32 2147483647, %v2034
        %vm2045 = vcmp.eq.f32.partialorder %v2044, 8.507059e+37
        %v2046 = vand.u32 %v2034, 2147483648
        %v2047 = vor.u32 1.1754944e-38, %v2046
        %v2048 = vsel %vm2045, %v2047, %v2043
        %v2049 = vmul.f32 1.0, %v2048
        %v2050 = vxor.u32 %v2028, 2147483648
        %v2051 = vmul.f32 %v2050, 1.442695
        %v2052 = vpow.pop %v2051
        %v2053 = vadd.f32 %v2052, 1.0
        %v2054 = vrcp.pop %v2053
        %v2055 = vmul.f32 %v2053, %v2054
        %v2056 = vsub.f32 1.0, %v2055
        %v2057 = vmul.f32 %v2054, %v2056
        %v2058 = vadd.f32 %v2054, %v2057
        %vm2059 = vweird.f32 %v2053
        %vm2060 = vweird.f32 %v2054
        %vm2061 = vmor %vm2059, %vm2060
        %v2062 = vsel %vm2061, %v2054, %v2058
        %v2063 = vand.u32 2147483647, %v2053
        %vm2064 = vcmp.eq.f32.partialorder %v2063, 8.507059e+37
        %v2065 = vand.u32 %v2053, 2147483648
        %v2066 = vor.u32 1.1754944e-38, %v2065
        %v2067 = vsel %vm2064, %v2066, %v2062
        %v2068 = vmul.f32 1.0, %v2067
        %v2069 = vtanh.pop %v2029
        %v2070 = vxor.u32 %v2030, 2147483648
        %v2071 = vmul.f32 %v2070, 1.442695
        %v2072 = vpow.pop %v2071
        %v2073 = vadd.f32 %v2072, 1.0
        %v2074 = vrcp.pop %v2073
        %v2075 = vmul.f32 %v2073, %v2074
        %v2076 = vsub.f32 1.0, %v2075
        %v2077 = vmul.f32 %v2074, %v2076
        %v2078 = vadd.f32 %v2074, %v2077
        %vm2079 = vweird.f32 %v2073
        %vm2080 = vweird.f32 %v2074
        %vm2081 = vmor %vm2079, %vm2080
        %v2082 = vsel %vm2081, %v2074, %v2078
        %v2083 = vand.u32 2147483647, %v2073
        %vm2084 = vcmp.eq.f32.partialorder %v2083, 8.507059e+37
        %v2085 = vand.u32 %v2073, 2147483648
        %v2086 = vor.u32 1.1754944e-38, %v2085
        %v2087 = vsel %vm2084, %v2086, %v2082
        %v2088 = vmul.f32 1.0, %v2087
        %v2089 = vmul.f32 %v2068, %v1966
        %v2090 = vmul.f32 %v2049, %v2069
        %v2091 = vadd.f32 %v2089, %v2090
        %v2092 = vtanh.pop %v2091
        %v2093 = vmul.f32 %v2088, %v2092
        %s2094 = sadd.s32 %s279, 10
        %v2095 = vstv %s2094
        %vm2096 = vcmp.lt.s32.totalorder %v2095, %v375
        %v2097 = vsel %vm2096, 1, 0
        %2098 = vset.pattern.permute.xlu0 0
        %2099 = vperm.xlu0 %2098, %v2097
        %v2100 = vpop.permute.xlu0 %2099
        %vm2101 = vcmp.eq.s32.totalorder %v2100, 1
        %v2102 = vsel %vm2101, %v2093, 0.0
        %s2103 = scalar_lea.vmem %s269, 80
        %2104 = vst [vmem:[%s2103] sm:$0xff] %v2102
        %v2105 = vsel %vm2101, %v2093, %v1965
        %v2106 = vsel %vm2101, %v2091, %v1966
        %s2107 = scalar_lea.vmem %s260, 176
        %v2108 = vld [vmem:[%s2107] sm:$0xff]
        %v2109 = vld [vmem:[%s2107 + $0x8] sm:$0xff]
        %v2110 = vunpack.c.l.bf16 %v2108
        %v2111 = vunpack.c.h.bf16 %v2108
        %v2112 = vunpack.c.l.bf16 %v2109
        %v2113 = vunpack.c.h.bf16 %v2109
        %v2114 = vpack.c.bf16 %v2105, %v2105
        %2115 = vmatpush.bf16.msra.mxu0 %v541
        %2116 = vmatpush.bf16.msra.mxu0 %v537
        %2117 = vmatpush.bf16.msra.mxu0 %v533
        %2118 = vmatpush.bf16.msra.mxu0 %v529
        %2119 = vmatpush.bf16.msra.mxu0 %v525
        %2120 = vmatpush.bf16.msra.mxu0 %v521
        %2121 = vmatpush.bf16.msra.mxu0 %v517
        %2122 = vmatpush.bf16.msra.mxu0 %v513
        %2123 = vmatmul.bf16.gmra.mxu0 %v2114
        %v2124 = vpop.f32.mrf.mxu0
        %v2125 = vadd.f32 0.0, %v2124
        %v2126 = vpop.f32.mrf.mxu0
        %2127 = vdwg.mxu0
        %2128 = vmatpush.bf16.msra.mxu0 %v542
        %2129 = vmatpush.bf16.msra.mxu0 %v538
        %2130 = vmatpush.bf16.msra.mxu0 %v534
        %2131 = vmatpush.bf16.msra.mxu0 %v530
        %2132 = vmatpush.bf16.msra.mxu0 %v526
        %2133 = vmatpush.bf16.msra.mxu0 %v522
        %2134 = vmatpush.bf16.msra.mxu0 %v518
        %2135 = vmatpush.bf16.msra.mxu0 %v514
        %2136 = vmatmul.bf16.gmra.mxu0 %v2114
        %v2137 = vpop.f32.mrf.mxu0
        %v2138 = vadd.f32 0.0, %v2137
        %v2139 = vpop.f32.mrf.mxu0
        %2140 = vdwg.mxu0
        %2141 = vmatpush.bf16.msra.mxu0 %v543
        %2142 = vmatpush.bf16.msra.mxu0 %v539
        %2143 = vmatpush.bf16.msra.mxu0 %v535
        %2144 = vmatpush.bf16.msra.mxu0 %v531
        %2145 = vmatpush.bf16.msra.mxu0 %v527
        %2146 = vmatpush.bf16.msra.mxu0 %v523
        %2147 = vmatpush.bf16.msra.mxu0 %v519
        %2148 = vmatpush.bf16.msra.mxu0 %v515
        %2149 = vmatmul.bf16.gmra.mxu0 %v2114
        %v2150 = vpop.f32.mrf.mxu0
        %v2151 = vadd.f32 0.0, %v2150
        %v2152 = vpop.f32.mrf.mxu0
        %2153 = vdwg.mxu0
        %2154 = vmatpush.bf16.msra.mxu0 %v544
        %2155 = vmatpush.bf16.msra.mxu0 %v540
        %2156 = vmatpush.bf16.msra.mxu0 %v536
        %2157 = vmatpush.bf16.msra.mxu0 %v532
        %2158 = vmatpush.bf16.msra.mxu0 %v528
        %2159 = vmatpush.bf16.msra.mxu0 %v524
        %2160 = vmatpush.bf16.msra.mxu0 %v520
        %2161 = vmatpush.bf16.msra.mxu0 %v516
        %2162 = vmatmul.bf16.gmra.mxu0 %v2114
        %v2163 = vpop.f32.mrf.mxu0
        %v2164 = vadd.f32 0.0, %v2163
        %v2165 = vpop.f32.mrf.mxu0
        %2166 = vdwg.mxu0
        %v2167 = vadd.f32 %v2110, %v2125
        %v2168 = vadd.f32 %v2111, %v2138
        %v2169 = vadd.f32 %v2112, %v2151
        %v2170 = vadd.f32 %v2113, %v2164
        %v2171 = vxor.u32 %v2167, 2147483648
        %v2172 = vmul.f32 %v2171, 1.442695
        %v2173 = vpow.pop %v2172
        %v2174 = vadd.f32 %v2173, 1.0
        %v2175 = vrcp.pop %v2174
        %v2176 = vmul.f32 %v2174, %v2175
        %v2177 = vsub.f32 1.0, %v2176
        %v2178 = vmul.f32 %v2175, %v2177
        %v2179 = vadd.f32 %v2175, %v2178
        %vm2180 = vweird.f32 %v2174
        %vm2181 = vweird.f32 %v2175
        %vm2182 = vmor %vm2180, %vm2181
        %v2183 = vsel %vm2182, %v2175, %v2179
        %v2184 = vand.u32 2147483647, %v2174
        %vm2185 = vcmp.eq.f32.partialorder %v2184, 8.507059e+37
        %v2186 = vand.u32 %v2174, 2147483648
        %v2187 = vor.u32 1.1754944e-38, %v2186
        %v2188 = vsel %vm2185, %v2187, %v2183
        %v2189 = vmul.f32 1.0, %v2188
        %v2190 = vxor.u32 %v2168, 2147483648
        %v2191 = vmul.f32 %v2190, 1.442695
        %v2192 = vpow.pop %v2191
        %v2193 = vadd.f32 %v2192, 1.0
        %v2194 = vrcp.pop %v2193
        %v2195 = vmul.f32 %v2193, %v2194
        %v2196 = vsub.f32 1.0, %v2195
        %v2197 = vmul.f32 %v2194, %v2196
        %v2198 = vadd.f32 %v2194, %v2197
        %vm2199 = vweird.f32 %v2193
        %vm2200 = vweird.f32 %v2194
        %vm2201 = vmor %vm2199, %vm2200
        %v2202 = vsel %vm2201, %v2194, %v2198
        %v2203 = vand.u32 2147483647, %v2193
        %vm2204 = vcmp.eq.f32.partialorder %v2203, 8.507059e+37
        %v2205 = vand.u32 %v2193, 2147483648
        %v2206 = vor.u32 1.1754944e-38, %v2205
        %v2207 = vsel %vm2204, %v2206, %v2202
        %v2208 = vmul.f32 1.0, %v2207
        %v2209 = vtanh.pop %v2169
        %v2210 = vxor.u32 %v2170, 2147483648
        %v2211 = vmul.f32 %v2210, 1.442695
        %v2212 = vpow.pop %v2211
        %v2213 = vadd.f32 %v2212, 1.0
        %v2214 = vrcp.pop %v2213
        %v2215 = vmul.f32 %v2213, %v2214
        %v2216 = vsub.f32 1.0, %v2215
        %v2217 = vmul.f32 %v2214, %v2216
        %v2218 = vadd.f32 %v2214, %v2217
        %vm2219 = vweird.f32 %v2213
        %vm2220 = vweird.f32 %v2214
        %vm2221 = vmor %vm2219, %vm2220
        %v2222 = vsel %vm2221, %v2214, %v2218
        %v2223 = vand.u32 2147483647, %v2213
        %vm2224 = vcmp.eq.f32.partialorder %v2223, 8.507059e+37
        %v2225 = vand.u32 %v2213, 2147483648
        %v2226 = vor.u32 1.1754944e-38, %v2225
        %v2227 = vsel %vm2224, %v2226, %v2222
        %v2228 = vmul.f32 1.0, %v2227
        %v2229 = vmul.f32 %v2208, %v2106
        %v2230 = vmul.f32 %v2189, %v2209
        %v2231 = vadd.f32 %v2229, %v2230
        %v2232 = vtanh.pop %v2231
        %v2233 = vmul.f32 %v2228, %v2232
        %s2234 = sadd.s32 %s279, 11
        %v2235 = vstv %s2234
        %vm2236 = vcmp.lt.s32.totalorder %v2235, %v375
        %v2237 = vsel %vm2236, 1, 0
        %2238 = vset.pattern.permute.xlu0 0
        %2239 = vperm.xlu0 %2238, %v2237
        %v2240 = vpop.permute.xlu0 %2239
        %vm2241 = vcmp.eq.s32.totalorder %v2240, 1
        %v2242 = vsel %vm2241, %v2233, 0.0
        %s2243 = scalar_lea.vmem %s269, 88
        %2244 = vst [vmem:[%s2243] sm:$0xff] %v2242
        %v2245 = vsel %vm2241, %v2233, %v2105
        %v2246 = vsel %vm2241, %v2231, %v2106
        %s2247 = scalar_lea.vmem %s260, 192
        %v2248 = vld [vmem:[%s2247] sm:$0xff]
        %v2249 = vld [vmem:[%s2247 + $0x8] sm:$0xff]
        %v2250 = vunpack.c.l.bf16 %v2248
        %v2251 = vunpack.c.h.bf16 %v2248
        %v2252 = vunpack.c.l.bf16 %v2249
        %v2253 = vunpack.c.h.bf16 %v2249
        %v2254 = vpack.c.bf16 %v2245, %v2245
        %2255 = vmatpush.bf16.msra.mxu0 %v541
        %2256 = vmatpush.bf16.msra.mxu0 %v537
        %2257 = vmatpush.bf16.msra.mxu0 %v533
        %2258 = vmatpush.bf16.msra.mxu0 %v529
        %2259 = vmatpush.bf16.msra.mxu0 %v525
        %2260 = vmatpush.bf16.msra.mxu0 %v521
        %2261 = vmatpush.bf16.msra.mxu0 %v517
        %2262 = vmatpush.bf16.msra.mxu0 %v513
        %2263 = vmatmul.bf16.gmra.mxu0 %v2254
        %v2264 = vpop.f32.mrf.mxu0
        %v2265 = vadd.f32 0.0, %v2264
        %v2266 = vpop.f32.mrf.mxu0
        %2267 = vdwg.mxu0
        %2268 = vmatpush.bf16.msra.mxu0 %v542
        %2269 = vmatpush.bf16.msra.mxu0 %v538
        %2270 = vmatpush.bf16.msra.mxu0 %v534
        %2271 = vmatpush.bf16.msra.mxu0 %v530
        %2272 = vmatpush.bf16.msra.mxu0 %v526
        %2273 = vmatpush.bf16.msra.mxu0 %v522
        %2274 = vmatpush.bf16.msra.mxu0 %v518
        %2275 = vmatpush.bf16.msra.mxu0 %v514
        %2276 = vmatmul.bf16.gmra.mxu0 %v2254
        %v2277 = vpop.f32.mrf.mxu0
        %v2278 = vadd.f32 0.0, %v2277
        %v2279 = vpop.f32.mrf.mxu0
        %2280 = vdwg.mxu0
        %2281 = vmatpush.bf16.msra.mxu0 %v543
        %2282 = vmatpush.bf16.msra.mxu0 %v539
        %2283 = vmatpush.bf16.msra.mxu0 %v535
        %2284 = vmatpush.bf16.msra.mxu0 %v531
        %2285 = vmatpush.bf16.msra.mxu0 %v527
        %2286 = vmatpush.bf16.msra.mxu0 %v523
        %2287 = vmatpush.bf16.msra.mxu0 %v519
        %2288 = vmatpush.bf16.msra.mxu0 %v515
        %2289 = vmatmul.bf16.gmra.mxu0 %v2254
        %v2290 = vpop.f32.mrf.mxu0
        %v2291 = vadd.f32 0.0, %v2290
        %v2292 = vpop.f32.mrf.mxu0
        %2293 = vdwg.mxu0
        %2294 = vmatpush.bf16.msra.mxu0 %v544
        %2295 = vmatpush.bf16.msra.mxu0 %v540
        %2296 = vmatpush.bf16.msra.mxu0 %v536
        %2297 = vmatpush.bf16.msra.mxu0 %v532
        %2298 = vmatpush.bf16.msra.mxu0 %v528
        %2299 = vmatpush.bf16.msra.mxu0 %v524
        %2300 = vmatpush.bf16.msra.mxu0 %v520
        %2301 = vmatpush.bf16.msra.mxu0 %v516
        %2302 = vmatmul.bf16.gmra.mxu0 %v2254
        %v2303 = vpop.f32.mrf.mxu0
        %v2304 = vadd.f32 0.0, %v2303
        %v2305 = vpop.f32.mrf.mxu0
        %2306 = vdwg.mxu0
        %v2307 = vadd.f32 %v2250, %v2265
        %v2308 = vadd.f32 %v2251, %v2278
        %v2309 = vadd.f32 %v2252, %v2291
        %v2310 = vadd.f32 %v2253, %v2304
        %v2311 = vxor.u32 %v2307, 2147483648
        %v2312 = vmul.f32 %v2311, 1.442695
        %v2313 = vpow.pop %v2312
        %v2314 = vadd.f32 %v2313, 1.0
        %v2315 = vrcp.pop %v2314
        %v2316 = vmul.f32 %v2314, %v2315
        %v2317 = vsub.f32 1.0, %v2316
        %v2318 = vmul.f32 %v2315, %v2317
        %v2319 = vadd.f32 %v2315, %v2318
        %vm2320 = vweird.f32 %v2314
        %vm2321 = vweird.f32 %v2315
        %vm2322 = vmor %vm2320, %vm2321
        %v2323 = vsel %vm2322, %v2315, %v2319
        %v2324 = vand.u32 2147483647, %v2314
        %vm2325 = vcmp.eq.f32.partialorder %v2324, 8.507059e+37
        %v2326 = vand.u32 %v2314, 2147483648
        %v2327 = vor.u32 1.1754944e-38, %v2326
        %v2328 = vsel %vm2325, %v2327, %v2323
        %v2329 = vmul.f32 1.0, %v2328
        %v2330 = vxor.u32 %v2308, 2147483648
        %v2331 = vmul.f32 %v2330, 1.442695
        %v2332 = vpow.pop %v2331
        %v2333 = vadd.f32 %v2332, 1.0
        %v2334 = vrcp.pop %v2333
        %v2335 = vmul.f32 %v2333, %v2334
        %v2336 = vsub.f32 1.0, %v2335
        %v2337 = vmul.f32 %v2334, %v2336
        %v2338 = vadd.f32 %v2334, %v2337
        %vm2339 = vweird.f32 %v2333
        %vm2340 = vweird.f32 %v2334
        %vm2341 = vmor %vm2339, %vm2340
        %v2342 = vsel %vm2341, %v2334, %v2338
        %v2343 = vand.u32 2147483647, %v2333
        %vm2344 = vcmp.eq.f32.partialorder %v2343, 8.507059e+37
        %v2345 = vand.u32 %v2333, 2147483648
        %v2346 = vor.u32 1.1754944e-38, %v2345
        %v2347 = vsel %vm2344, %v2346, %v2342
        %v2348 = vmul.f32 1.0, %v2347
        %v2349 = vtanh.pop %v2309
        %v2350 = vxor.u32 %v2310, 2147483648
        %v2351 = vmul.f32 %v2350, 1.442695
        %v2352 = vpow.pop %v2351
        %v2353 = vadd.f32 %v2352, 1.0
        %v2354 = vrcp.pop %v2353
        %v2355 = vmul.f32 %v2353, %v2354
        %v2356 = vsub.f32 1.0, %v2355
        %v2357 = vmul.f32 %v2354, %v2356
        %v2358 = vadd.f32 %v2354, %v2357
        %vm2359 = vweird.f32 %v2353
        %vm2360 = vweird.f32 %v2354
        %vm2361 = vmor %vm2359, %vm2360
        %v2362 = vsel %vm2361, %v2354, %v2358
        %v2363 = vand.u32 2147483647, %v2353
        %vm2364 = vcmp.eq.f32.partialorder %v2363, 8.507059e+37
        %v2365 = vand.u32 %v2353, 2147483648
        %v2366 = vor.u32 1.1754944e-38, %v2365
        %v2367 = vsel %vm2364, %v2366, %v2362
        %v2368 = vmul.f32 1.0, %v2367
        %v2369 = vmul.f32 %v2348, %v2246
        %v2370 = vmul.f32 %v2329, %v2349
        %v2371 = vadd.f32 %v2369, %v2370
        %v2372 = vtanh.pop %v2371
        %v2373 = vmul.f32 %v2368, %v2372
        %s2374 = sadd.s32 %s279, 12
        %v2375 = vstv %s2374
        %vm2376 = vcmp.lt.s32.totalorder %v2375, %v375
        %v2377 = vsel %vm2376, 1, 0
        %2378 = vset.pattern.permute.xlu0 0
        %2379 = vperm.xlu0 %2378, %v2377
        %v2380 = vpop.permute.xlu0 %2379
        %vm2381 = vcmp.eq.s32.totalorder %v2380, 1
        %v2382 = vsel %vm2381, %v2373, 0.0
        %s2383 = scalar_lea.vmem %s269, 96
        %2384 = vst [vmem:[%s2383] sm:$0xff] %v2382
        %v2385 = vsel %vm2381, %v2373, %v2245
        %v2386 = vsel %vm2381, %v2371, %v2246
        %s2387 = scalar_lea.vmem %s260, 208
        %v2388 = vld [vmem:[%s2387] sm:$0xff]
        %v2389 = vld [vmem:[%s2387 + $0x8] sm:$0xff]
        %v2390 = vunpack.c.l.bf16 %v2388
        %v2391 = vunpack.c.h.bf16 %v2388
        %v2392 = vunpack.c.l.bf16 %v2389
        %v2393 = vunpack.c.h.bf16 %v2389
        %v2394 = vpack.c.bf16 %v2385, %v2385
        %2395 = vmatpush.bf16.msra.mxu0 %v541
        %2396 = vmatpush.bf16.msra.mxu0 %v537
        %2397 = vmatpush.bf16.msra.mxu0 %v533
        %2398 = vmatpush.bf16.msra.mxu0 %v529
        %2399 = vmatpush.bf16.msra.mxu0 %v525
        %2400 = vmatpush.bf16.msra.mxu0 %v521
        %2401 = vmatpush.bf16.msra.mxu0 %v517
        %2402 = vmatpush.bf16.msra.mxu0 %v513
        %2403 = vmatmul.bf16.gmra.mxu0 %v2394
        %v2404 = vpop.f32.mrf.mxu0
        %v2405 = vadd.f32 0.0, %v2404
        %v2406 = vpop.f32.mrf.mxu0
        %2407 = vdwg.mxu0
        %2408 = vmatpush.bf16.msra.mxu0 %v542
        %2409 = vmatpush.bf16.msra.mxu0 %v538
        %2410 = vmatpush.bf16.msra.mxu0 %v534
        %2411 = vmatpush.bf16.msra.mxu0 %v530
        %2412 = vmatpush.bf16.msra.mxu0 %v526
        %2413 = vmatpush.bf16.msra.mxu0 %v522
        %2414 = vmatpush.bf16.msra.mxu0 %v518
        %2415 = vmatpush.bf16.msra.mxu0 %v514
        %2416 = vmatmul.bf16.gmra.mxu0 %v2394
        %v2417 = vpop.f32.mrf.mxu0
        %v2418 = vadd.f32 0.0, %v2417
        %v2419 = vpop.f32.mrf.mxu0
        %2420 = vdwg.mxu0
        %2421 = vmatpush.bf16.msra.mxu0 %v543
        %2422 = vmatpush.bf16.msra.mxu0 %v539
        %2423 = vmatpush.bf16.msra.mxu0 %v535
        %2424 = vmatpush.bf16.msra.mxu0 %v531
        %2425 = vmatpush.bf16.msra.mxu0 %v527
        %2426 = vmatpush.bf16.msra.mxu0 %v523
        %2427 = vmatpush.bf16.msra.mxu0 %v519
        %2428 = vmatpush.bf16.msra.mxu0 %v515
        %2429 = vmatmul.bf16.gmra.mxu0 %v2394
        %v2430 = vpop.f32.mrf.mxu0
        %v2431 = vadd.f32 0.0, %v2430
        %v2432 = vpop.f32.mrf.mxu0
        %2433 = vdwg.mxu0
        %2434 = vmatpush.bf16.msra.mxu0 %v544
        %2435 = vmatpush.bf16.msra.mxu0 %v540
        %2436 = vmatpush.bf16.msra.mxu0 %v536
        %2437 = vmatpush.bf16.msra.mxu0 %v532
        %2438 = vmatpush.bf16.msra.mxu0 %v528
        %2439 = vmatpush.bf16.msra.mxu0 %v524
        %2440 = vmatpush.bf16.msra.mxu0 %v520
        %2441 = vmatpush.bf16.msra.mxu0 %v516
        %2442 = vmatmul.bf16.gmra.mxu0 %v2394
        %v2443 = vpop.f32.mrf.mxu0
        %v2444 = vadd.f32 0.0, %v2443
        %v2445 = vpop.f32.mrf.mxu0
        %2446 = vdwg.mxu0
        %v2447 = vadd.f32 %v2390, %v2405
        %v2448 = vadd.f32 %v2391, %v2418
        %v2449 = vadd.f32 %v2392, %v2431
        %v2450 = vadd.f32 %v2393, %v2444
        %v2451 = vxor.u32 %v2447, 2147483648
        %v2452 = vmul.f32 %v2451, 1.442695
        %v2453 = vpow.pop %v2452
        %v2454 = vadd.f32 %v2453, 1.0
        %v2455 = vrcp.pop %v2454
        %v2456 = vmul.f32 %v2454, %v2455
        %v2457 = vsub.f32 1.0, %v2456
        %v2458 = vmul.f32 %v2455, %v2457
        %v2459 = vadd.f32 %v2455, %v2458
        %vm2460 = vweird.f32 %v2454
        %vm2461 = vweird.f32 %v2455
        %vm2462 = vmor %vm2460, %vm2461
        %v2463 = vsel %vm2462, %v2455, %v2459
        %v2464 = vand.u32 2147483647, %v2454
        %vm2465 = vcmp.eq.f32.partialorder %v2464, 8.507059e+37
        %v2466 = vand.u32 %v2454, 2147483648
        %v2467 = vor.u32 1.1754944e-38, %v2466
        %v2468 = vsel %vm2465, %v2467, %v2463
        %v2469 = vmul.f32 1.0, %v2468
        %v2470 = vxor.u32 %v2448, 2147483648
        %v2471 = vmul.f32 %v2470, 1.442695
        %v2472 = vpow.pop %v2471
        %v2473 = vadd.f32 %v2472, 1.0
        %v2474 = vrcp.pop %v2473
        %v2475 = vmul.f32 %v2473, %v2474
        %v2476 = vsub.f32 1.0, %v2475
        %v2477 = vmul.f32 %v2474, %v2476
        %v2478 = vadd.f32 %v2474, %v2477
        %vm2479 = vweird.f32 %v2473
        %vm2480 = vweird.f32 %v2474
        %vm2481 = vmor %vm2479, %vm2480
        %v2482 = vsel %vm2481, %v2474, %v2478
        %v2483 = vand.u32 2147483647, %v2473
        %vm2484 = vcmp.eq.f32.partialorder %v2483, 8.507059e+37
        %v2485 = vand.u32 %v2473, 2147483648
        %v2486 = vor.u32 1.1754944e-38, %v2485
        %v2487 = vsel %vm2484, %v2486, %v2482
        %v2488 = vmul.f32 1.0, %v2487
        %v2489 = vtanh.pop %v2449
        %v2490 = vxor.u32 %v2450, 2147483648
        %v2491 = vmul.f32 %v2490, 1.442695
        %v2492 = vpow.pop %v2491
        %v2493 = vadd.f32 %v2492, 1.0
        %v2494 = vrcp.pop %v2493
        %v2495 = vmul.f32 %v2493, %v2494
        %v2496 = vsub.f32 1.0, %v2495
        %v2497 = vmul.f32 %v2494, %v2496
        %v2498 = vadd.f32 %v2494, %v2497
        %vm2499 = vweird.f32 %v2493
        %vm2500 = vweird.f32 %v2494
        %vm2501 = vmor %vm2499, %vm2500
        %v2502 = vsel %vm2501, %v2494, %v2498
        %v2503 = vand.u32 2147483647, %v2493
        %vm2504 = vcmp.eq.f32.partialorder %v2503, 8.507059e+37
        %v2505 = vand.u32 %v2493, 2147483648
        %v2506 = vor.u32 1.1754944e-38, %v2505
        %v2507 = vsel %vm2504, %v2506, %v2502
        %v2508 = vmul.f32 1.0, %v2507
        %v2509 = vmul.f32 %v2488, %v2386
        %v2510 = vmul.f32 %v2469, %v2489
        %v2511 = vadd.f32 %v2509, %v2510
        %v2512 = vtanh.pop %v2511
        %v2513 = vmul.f32 %v2508, %v2512
        %s2514 = sadd.s32 %s279, 13
        %v2515 = vstv %s2514
        %vm2516 = vcmp.lt.s32.totalorder %v2515, %v375
        %v2517 = vsel %vm2516, 1, 0
        %2518 = vset.pattern.permute.xlu0 0
        %2519 = vperm.xlu0 %2518, %v2517
        %v2520 = vpop.permute.xlu0 %2519
        %vm2521 = vcmp.eq.s32.totalorder %v2520, 1
        %v2522 = vsel %vm2521, %v2513, 0.0
        %s2523 = scalar_lea.vmem %s269, 104
        %2524 = vst [vmem:[%s2523] sm:$0xff] %v2522
        %v2525 = vsel %vm2521, %v2513, %v2385
        %v2526 = vsel %vm2521, %v2511, %v2386
        %s2527 = scalar_lea.vmem %s260, 224
        %v2528 = vld [vmem:[%s2527] sm:$0xff]
        %v2529 = vld [vmem:[%s2527 + $0x8] sm:$0xff]
        %v2530 = vunpack.c.l.bf16 %v2528
        %v2531 = vunpack.c.h.bf16 %v2528
        %v2532 = vunpack.c.l.bf16 %v2529
        %v2533 = vunpack.c.h.bf16 %v2529
        %v2534 = vpack.c.bf16 %v2525, %v2525
        %2535 = vmatpush.bf16.msra.mxu0 %v541
        %2536 = vmatpush.bf16.msra.mxu0 %v537
        %2537 = vmatpush.bf16.msra.mxu0 %v533
        %2538 = vmatpush.bf16.msra.mxu0 %v529
        %2539 = vmatpush.bf16.msra.mxu0 %v525
        %2540 = vmatpush.bf16.msra.mxu0 %v521
        %2541 = vmatpush.bf16.msra.mxu0 %v517
        %2542 = vmatpush.bf16.msra.mxu0 %v513
        %2543 = vmatmul.bf16.gmra.mxu0 %v2534
        %v2544 = vpop.f32.mrf.mxu0
        %v2545 = vadd.f32 0.0, %v2544
        %v2546 = vpop.f32.mrf.mxu0
        %2547 = vdwg.mxu0
        %2548 = vmatpush.bf16.msra.mxu0 %v542
        %2549 = vmatpush.bf16.msra.mxu0 %v538
        %2550 = vmatpush.bf16.msra.mxu0 %v534
        %2551 = vmatpush.bf16.msra.mxu0 %v530
        %2552 = vmatpush.bf16.msra.mxu0 %v526
        %2553 = vmatpush.bf16.msra.mxu0 %v522
        %2554 = vmatpush.bf16.msra.mxu0 %v518
        %2555 = vmatpush.bf16.msra.mxu0 %v514
        %2556 = vmatmul.bf16.gmra.mxu0 %v2534
        %v2557 = vpop.f32.mrf.mxu0
        %v2558 = vadd.f32 0.0, %v2557
        %v2559 = vpop.f32.mrf.mxu0
        %2560 = vdwg.mxu0
        %2561 = vmatpush.bf16.msra.mxu0 %v543
        %2562 = vmatpush.bf16.msra.mxu0 %v539
        %2563 = vmatpush.bf16.msra.mxu0 %v535
        %2564 = vmatpush.bf16.msra.mxu0 %v531
        %2565 = vmatpush.bf16.msra.mxu0 %v527
        %2566 = vmatpush.bf16.msra.mxu0 %v523
        %2567 = vmatpush.bf16.msra.mxu0 %v519
        %2568 = vmatpush.bf16.msra.mxu0 %v515
        %2569 = vmatmul.bf16.gmra.mxu0 %v2534
        %v2570 = vpop.f32.mrf.mxu0
        %v2571 = vadd.f32 0.0, %v2570
        %v2572 = vpop.f32.mrf.mxu0
        %2573 = vdwg.mxu0
        %2574 = vmatpush.bf16.msra.mxu0 %v544
        %2575 = vmatpush.bf16.msra.mxu0 %v540
        %2576 = vmatpush.bf16.msra.mxu0 %v536
        %2577 = vmatpush.bf16.msra.mxu0 %v532
        %2578 = vmatpush.bf16.msra.mxu0 %v528
        %2579 = vmatpush.bf16.msra.mxu0 %v524
        %2580 = vmatpush.bf16.msra.mxu0 %v520
        %2581 = vmatpush.bf16.msra.mxu0 %v516
        %2582 = vmatmul.bf16.gmra.mxu0 %v2534
        %v2583 = vpop.f32.mrf.mxu0
        %v2584 = vadd.f32 0.0, %v2583
        %v2585 = vpop.f32.mrf.mxu0
        %2586 = vdwg.mxu0
        %v2587 = vadd.f32 %v2530, %v2545
        %v2588 = vadd.f32 %v2531, %v2558
        %v2589 = vadd.f32 %v2532, %v2571
        %v2590 = vadd.f32 %v2533, %v2584
        %v2591 = vxor.u32 %v2587, 2147483648
        %v2592 = vmul.f32 %v2591, 1.442695
        %v2593 = vpow.pop %v2592
        %v2594 = vadd.f32 %v2593, 1.0
        %v2595 = vrcp.pop %v2594
        %v2596 = vmul.f32 %v2594, %v2595
        %v2597 = vsub.f32 1.0, %v2596
        %v2598 = vmul.f32 %v2595, %v2597
        %v2599 = vadd.f32 %v2595, %v2598
        %vm2600 = vweird.f32 %v2594
        %vm2601 = vweird.f32 %v2595
        %vm2602 = vmor %vm2600, %vm2601
        %v2603 = vsel %vm2602, %v2595, %v2599
        %v2604 = vand.u32 2147483647, %v2594
        %vm2605 = vcmp.eq.f32.partialorder %v2604, 8.507059e+37
        %v2606 = vand.u32 %v2594, 2147483648
        %v2607 = vor.u32 1.1754944e-38, %v2606
        %v2608 = vsel %vm2605, %v2607, %v2603
        %v2609 = vmul.f32 1.0, %v2608
        %v2610 = vxor.u32 %v2588, 2147483648
        %v2611 = vmul.f32 %v2610, 1.442695
        %v2612 = vpow.pop %v2611
        %v2613 = vadd.f32 %v2612, 1.0
        %v2614 = vrcp.pop %v2613
        %v2615 = vmul.f32 %v2613, %v2614
        %v2616 = vsub.f32 1.0, %v2615
        %v2617 = vmul.f32 %v2614, %v2616
        %v2618 = vadd.f32 %v2614, %v2617
        %vm2619 = vweird.f32 %v2613
        %vm2620 = vweird.f32 %v2614
        %vm2621 = vmor %vm2619, %vm2620
        %v2622 = vsel %vm2621, %v2614, %v2618
        %v2623 = vand.u32 2147483647, %v2613
        %vm2624 = vcmp.eq.f32.partialorder %v2623, 8.507059e+37
        %v2625 = vand.u32 %v2613, 2147483648
        %v2626 = vor.u32 1.1754944e-38, %v2625
        %v2627 = vsel %vm2624, %v2626, %v2622
        %v2628 = vmul.f32 1.0, %v2627
        %v2629 = vtanh.pop %v2589
        %v2630 = vxor.u32 %v2590, 2147483648
        %v2631 = vmul.f32 %v2630, 1.442695
        %v2632 = vpow.pop %v2631
        %v2633 = vadd.f32 %v2632, 1.0
        %v2634 = vrcp.pop %v2633
        %v2635 = vmul.f32 %v2633, %v2634
        %v2636 = vsub.f32 1.0, %v2635
        %v2637 = vmul.f32 %v2634, %v2636
        %v2638 = vadd.f32 %v2634, %v2637
        %vm2639 = vweird.f32 %v2633
        %vm2640 = vweird.f32 %v2634
        %vm2641 = vmor %vm2639, %vm2640
        %v2642 = vsel %vm2641, %v2634, %v2638
        %v2643 = vand.u32 2147483647, %v2633
        %vm2644 = vcmp.eq.f32.partialorder %v2643, 8.507059e+37
        %v2645 = vand.u32 %v2633, 2147483648
        %v2646 = vor.u32 1.1754944e-38, %v2645
        %v2647 = vsel %vm2644, %v2646, %v2642
        %v2648 = vmul.f32 1.0, %v2647
        %v2649 = vmul.f32 %v2628, %v2526
        %v2650 = vmul.f32 %v2609, %v2629
        %v2651 = vadd.f32 %v2649, %v2650
        %v2652 = vtanh.pop %v2651
        %v2653 = vmul.f32 %v2648, %v2652
        %s2654 = sadd.s32 %s279, 14
        %v2655 = vstv %s2654
        %vm2656 = vcmp.lt.s32.totalorder %v2655, %v375
        %v2657 = vsel %vm2656, 1, 0
        %2658 = vset.pattern.permute.xlu0 0
        %2659 = vperm.xlu0 %2658, %v2657
        %v2660 = vpop.permute.xlu0 %2659
        %vm2661 = vcmp.eq.s32.totalorder %v2660, 1
        %v2662 = vsel %vm2661, %v2653, 0.0
        %s2663 = scalar_lea.vmem %s269, 112
        %2664 = vst [vmem:[%s2663] sm:$0xff] %v2662
        %v2665 = vsel %vm2661, %v2653, %v2525
        %v2666 = vsel %vm2661, %v2651, %v2526
        %s2667 = scalar_lea.vmem %s260, 240
        %v2668 = vld [vmem:[%s2667] sm:$0xff]
        %v2669 = vld [vmem:[%s2667 + $0x8] sm:$0xff]
        %v2670 = vunpack.c.l.bf16 %v2668
        %v2671 = vunpack.c.h.bf16 %v2668
        %v2672 = vunpack.c.l.bf16 %v2669
        %v2673 = vunpack.c.h.bf16 %v2669
        %v2674 = vpack.c.bf16 %v2665, %v2665
        %2675 = vmatpush.bf16.msra.mxu0 %v541
        %2676 = vmatpush.bf16.msra.mxu0 %v537
        %2677 = vmatpush.bf16.msra.mxu0 %v533
        %2678 = vmatpush.bf16.msra.mxu0 %v529
        %2679 = vmatpush.bf16.msra.mxu0 %v525
        %2680 = vmatpush.bf16.msra.mxu0 %v521
        %2681 = vmatpush.bf16.msra.mxu0 %v517
        %2682 = vmatpush.bf16.msra.mxu0 %v513
        %2683 = vmatmul.bf16.gmra.mxu0 %v2674
        %v2684 = vpop.f32.mrf.mxu0
        %v2685 = vadd.f32 0.0, %v2684
        %v2686 = vpop.f32.mrf.mxu0
        %2687 = vdwg.mxu0
        %2688 = vmatpush.bf16.msra.mxu0 %v542
        %2689 = vmatpush.bf16.msra.mxu0 %v538
        %2690 = vmatpush.bf16.msra.mxu0 %v534
        %2691 = vmatpush.bf16.msra.mxu0 %v530
        %2692 = vmatpush.bf16.msra.mxu0 %v526
        %2693 = vmatpush.bf16.msra.mxu0 %v522
        %2694 = vmatpush.bf16.msra.mxu0 %v518
        %2695 = vmatpush.bf16.msra.mxu0 %v514
        %2696 = vmatmul.bf16.gmra.mxu0 %v2674
        %v2697 = vpop.f32.mrf.mxu0
        %v2698 = vadd.f32 0.0, %v2697
        %v2699 = vpop.f32.mrf.mxu0
        %2700 = vdwg.mxu0
        %2701 = vmatpush.bf16.msra.mxu0 %v543
        %2702 = vmatpush.bf16.msra.mxu0 %v539
        %2703 = vmatpush.bf16.msra.mxu0 %v535
        %2704 = vmatpush.bf16.msra.mxu0 %v531
        %2705 = vmatpush.bf16.msra.mxu0 %v527
        %2706 = vmatpush.bf16.msra.mxu0 %v523
        %2707 = vmatpush.bf16.msra.mxu0 %v519
        %2708 = vmatpush.bf16.msra.mxu0 %v515
        %2709 = vmatmul.bf16.gmra.mxu0 %v2674
        %v2710 = vpop.f32.mrf.mxu0
        %v2711 = vadd.f32 0.0, %v2710
        %v2712 = vpop.f32.mrf.mxu0
        %2713 = vdwg.mxu0
        %2714 = vmatpush.bf16.msra.mxu0 %v544
        %2715 = vmatpush.bf16.msra.mxu0 %v540
        %2716 = vmatpush.bf16.msra.mxu0 %v536
        %2717 = vmatpush.bf16.msra.mxu0 %v532
        %2718 = vmatpush.bf16.msra.mxu0 %v528
        %2719 = vmatpush.bf16.msra.mxu0 %v524
        %2720 = vmatpush.bf16.msra.mxu0 %v520
        %2721 = vmatpush.bf16.msra.mxu0 %v516
        %2722 = vmatmul.bf16.gmra.mxu0 %v2674
        %v2723 = vpop.f32.mrf.mxu0
        %v2724 = vadd.f32 0.0, %v2723
        %v2725 = vpop.f32.mrf.mxu0
        %2726 = vdwg.mxu0
        %v2727 = vadd.f32 %v2670, %v2685
        %v2728 = vadd.f32 %v2671, %v2698
        %v2729 = vadd.f32 %v2672, %v2711
        %v2730 = vadd.f32 %v2673, %v2724
        %v2731 = vxor.u32 %v2727, 2147483648
        %v2732 = vmul.f32 %v2731, 1.442695
        %v2733 = vpow.pop %v2732
        %v2734 = vadd.f32 %v2733, 1.0
        %v2735 = vrcp.pop %v2734
        %v2736 = vmul.f32 %v2734, %v2735
        %v2737 = vsub.f32 1.0, %v2736
        %v2738 = vmul.f32 %v2735, %v2737
        %v2739 = vadd.f32 %v2735, %v2738
        %vm2740 = vweird.f32 %v2734
        %vm2741 = vweird.f32 %v2735
        %vm2742 = vmor %vm2740, %vm2741
        %v2743 = vsel %vm2742, %v2735, %v2739
        %v2744 = vand.u32 2147483647, %v2734
        %vm2745 = vcmp.eq.f32.partialorder %v2744, 8.507059e+37
        %v2746 = vand.u32 %v2734, 2147483648
        %v2747 = vor.u32 1.1754944e-38, %v2746
        %v2748 = vsel %vm2745, %v2747, %v2743
        %v2749 = vmul.f32 1.0, %v2748
        %v2750 = vxor.u32 %v2728, 2147483648
        %v2751 = vmul.f32 %v2750, 1.442695
        %v2752 = vpow.pop %v2751
        %v2753 = vadd.f32 %v2752, 1.0
        %v2754 = vrcp.pop %v2753
        %v2755 = vmul.f32 %v2753, %v2754
        %v2756 = vsub.f32 1.0, %v2755
        %v2757 = vmul.f32 %v2754, %v2756
        %v2758 = vadd.f32 %v2754, %v2757
        %vm2759 = vweird.f32 %v2753
        %vm2760 = vweird.f32 %v2754
        %vm2761 = vmor %vm2759, %vm2760
        %v2762 = vsel %vm2761, %v2754, %v2758
        %v2763 = vand.u32 2147483647, %v2753
        %vm2764 = vcmp.eq.f32.partialorder %v2763, 8.507059e+37
        %v2765 = vand.u32 %v2753, 2147483648
        %v2766 = vor.u32 1.1754944e-38, %v2765
        %v2767 = vsel %vm2764, %v2766, %v2762
        %v2768 = vmul.f32 1.0, %v2767
        %v2769 = vtanh.pop %v2729
        %v2770 = vxor.u32 %v2730, 2147483648
        %v2771 = vmul.f32 %v2770, 1.442695
        %v2772 = vpow.pop %v2771
        %v2773 = vadd.f32 %v2772, 1.0
        %v2774 = vrcp.pop %v2773
        %v2775 = vmul.f32 %v2773, %v2774
        %v2776 = vsub.f32 1.0, %v2775
        %v2777 = vmul.f32 %v2774, %v2776
        %v2778 = vadd.f32 %v2774, %v2777
        %vm2779 = vweird.f32 %v2773
        %vm2780 = vweird.f32 %v2774
        %vm2781 = vmor %vm2779, %vm2780
        %v2782 = vsel %vm2781, %v2774, %v2778
        %v2783 = vand.u32 2147483647, %v2773
        %vm2784 = vcmp.eq.f32.partialorder %v2783, 8.507059e+37
        %v2785 = vand.u32 %v2773, 2147483648
        %v2786 = vor.u32 1.1754944e-38, %v2785
        %v2787 = vsel %vm2784, %v2786, %v2782
        %v2788 = vmul.f32 1.0, %v2787
        %v2789 = vmul.f32 %v2768, %v2666
        %v2790 = vmul.f32 %v2749, %v2769
        %v2791 = vadd.f32 %v2789, %v2790
        %v2792 = vtanh.pop %v2791
        %v2793 = vmul.f32 %v2788, %v2792
        %s2794 = sadd.s32 %s279, 15
        %v2795 = vstv %s2794
        %vm2796 = vcmp.lt.s32.totalorder %v2795, %v375
        %v2797 = vsel %vm2796, 1, 0
        %2798 = vset.pattern.permute.xlu0 0
        %2799 = vperm.xlu0 %2798, %v2797
        %v2800 = vpop.permute.xlu0 %2799
        %vm2801 = vcmp.eq.s32.totalorder %v2800, 1
        %v2802 = vsel %vm2801, %v2793, 0.0
        %s2803 = scalar_lea.vmem %s269, 120
        %2804 = vst [vmem:[%s2803] sm:$0xff] %v2802
        %v2805 = vsel %vm2801, %v2793, %v2665
        %v2806 = vsel %vm2801, %v2791, %v2666
        %2807 = vst [vmem:[%s274] sm:$0xff] %v2805
        %2808 = vst [vmem:[%s278] sm:$0xff] %v2806
      $region55: #{lstm_encoder_forward.1} parent=27 // pred_fallthru
        _
      %p2809 = scmp.ge.s32.totalorder %s279, %s370
      // Predicated region
      $region56: #{lstm_encoder_forward.1} parent=27 // pred_check
        %p2810 = pneg %p2809
      $region57: #{lstm_encoder_forward.1} parent=27 // pred_check_branch
        %2812 = sbr.rel (%p2810) target = $region59
      $region58: #{lstm_encoder_forward.1} parent=27 // pred_region
        %2813 = vst [vmem:[%s269] sm:$0xff] 0.0
        %2814 = vst [vmem:[%s269 + $0x8] sm:$0xff] 0.0
        %2815 = vst [vmem:[%s269 + $0x10] sm:$0xff] 0.0
        %2816 = vst [vmem:[%s269 + $0x18] sm:$0xff] 0.0
        %2817 = vst [vmem:[%s269 + $0x20] sm:$0xff] 0.0
        %2818 = vst [vmem:[%s269 + $0x28] sm:$0xff] 0.0
        %2819 = vst [vmem:[%s269 + $0x30] sm:$0xff] 0.0
        %2820 = vst [vmem:[%s269 + $0x38] sm:$0xff] 0.0
        %2821 = vst [vmem:[%s269 + $0x40] sm:$0xff] 0.0
        %2822 = vst [vmem:[%s269 + $0x48] sm:$0xff] 0.0
        %2823 = vst [vmem:[%s269 + $0x50] sm:$0xff] 0.0
        %2824 = vst [vmem:[%s269 + $0x58] sm:$0xff] 0.0
        %2825 = vst [vmem:[%s269 + $0x60] sm:$0xff] 0.0
        %2826 = vst [vmem:[%s269 + $0x68] sm:$0xff] 0.0
        %2827 = vst [vmem:[%s269 + $0x70] sm:$0xff] 0.0
        %2828 = vst [vmem:[%s269 + $0x78] sm:$0xff] 0.0
      $region59: #{lstm_encoder_forward.1} parent=27 // pred_fallthru
        _
      %s2829 = smul.u32 16, %s24
      %p2830 = scmp.lt.s32.totalorder %s2829, 31
      %s2831 = scalar_select %p2830, %s2829, 31
      %p2832 = scmp.lt.s32.totalorder %s23, 0
      %s2833 = scalar_select %p2832, %s23, 0
      %s2834 = sadd.s32 %s2833, %s2831
      %s2835 = smul.addr %s2834, 8
      %s2836 = scalar_lea.vmem %s4, %s2835
      %p2837 = scmp.lt.s32.totalorder %s23, 0
      %s2838 = scalar_select %p2837, %s23, 0
      %s2839 = smul.addr %s2838, 8
      %s2840 = scalar_lea.vmem %s5, %s2839
      %p2841 = scmp.lt.s32.totalorder %s23, 0
      %s2842 = scalar_select %p2841, %s23, 0
      %s2843 = smul.addr %s2842, 8
      %s2844 = scalar_lea.vmem %s6, %s2843
      // Predicated region
      $region60: #{lstm_encoder_forward.1} parent=27 // pred_check
        %p2845 = pneg %p105
      $region61: #{lstm_encoder_forward.1} parent=27 // pred_check_branch
        %2847 = sbr.rel (%p2845) target = $region63
      $region62: #{lstm_encoder_forward.1} parent=27 // pred_region
        %s2848 = smul.u32 16, %s24
      $region63: #{lstm_encoder_forward.1} parent=27 // pred_fallthru
        _
      // Predicated region
      $region64: #{lstm_encoder_forward.1} parent=27 // pred_check
        %p2849 = pneg %p131
      $region65: #{lstm_encoder_forward.1} parent=27 // pred_check_branch
        %2851 = sbr.rel (%p2849) target = $region67
      $region66: #{lstm_encoder_forward.1} parent=27 // pred_region
        _
      $region67: #{lstm_encoder_forward.1} parent=27 // pred_fallthru
        _
      // Predicated region
      $region68: #{lstm_encoder_forward.1} parent=27 // pred_check
        %p2852 = pneg %p157
      $region69: #{lstm_encoder_forward.1} parent=27 // pred_check_branch
        %2854 = sbr.rel (%p2852) target = $region71
      $region70: #{lstm_encoder_forward.1} parent=27 // pred_region
        _
      $region71: #{lstm_encoder_forward.1} parent=27 // pred_fallthru
        _
      // Predicated region
      $region72: #{lstm_encoder_forward.1} parent=27 // pred_check
        %p2855 = pneg %p131
      $region73: #{lstm_encoder_forward.1} parent=27 // pred_check_branch
        %2857 = sbr.rel (%p2855) target = $region75
      $region74: #{lstm_encoder_forward.1} parent=27 // pred_region
        %p2858 = scmp.lt.s32.totalorder %s23, 0
        %s2859 = scalar_select %p2858, %s23, 0
        %s2860 = smul.addr %s2859, 8
        %s2861 = scalar_lea.vmem %s5, %s2860
      $region75: #{lstm_encoder_forward.1} parent=27 // pred_fallthru
        _
      // Predicated region
      $region76: #{lstm_encoder_forward.1} parent=27 // pred_check
        %p2862 = pneg %p157
      $region77: #{lstm_encoder_forward.1} parent=27 // pred_check_branch
        %2864 = sbr.rel (%p2862) target = $region79
      $region78: #{lstm_encoder_forward.1} parent=27 // pred_region
        %p2865 = scmp.lt.s32.totalorder %s23, 0
        %s2866 = scalar_select %p2865, %s23, 0
        %s2867 = smul.addr %s2866, 8
        %s2868 = scalar_lea.vmem %s6, %s2867
      $region79: #{lstm_encoder_forward.1} parent=27 // pred_fallthru
        _
    $region28: #{lstm_encoder_forward.1} parent=5 // pred_fallthru
      _
    %p2869 = scmp.le.s32.totalorder 2, %s14
    // Predicated region
    $region80: #{lstm_encoder_forward.1} parent=5 // pred_check
      %p2870 = pneg %p2869
    $region81: #{lstm_encoder_forward.1} parent=5 // pred_check_branch
      %2872 = sbr.rel (%p2870) target = $region83
    $region82: #{lstm_encoder_forward.1} parent=5 // pred_region
      %s2873 = ssub.s32 %s14, 2
      // Predicated region
      $region84: #{lstm_encoder_forward.1} parent=82 // pred_check
        %p2874 = pneg %p111
      $region85: #{lstm_encoder_forward.1} parent=82 // pred_check_branch
        %2876 = sbr.rel (%p2874) target = $region87
      $region86: #{lstm_encoder_forward.1} parent=82 // pred_region
        %s2877 = smul.u32 16, %s26
        %p2878 = scmp.lt.s32.totalorder %s2877, 31
        %s2879 = scalar_select %p2878, %s2877, 31
        %p2880 = scmp.lt.s32.totalorder %s25, 0
        %s2881 = scalar_select %p2880, %s25, 0
        %s2882 = sadd.s32 %s2881, %s2879
        %s2883 = smul.addr %s2882, 8
        %s2884 = scalar_lea.vmem %s4, %s2883
      $region87: #{lstm_encoder_forward.1} parent=82 // pred_fallthru
        _
    $region83: #{lstm_encoder_forward.1} parent=5 // pred_fallthru
      _
  $region6: #{lstm_encoder_forward.1} parent=0 // loop_footer
    %s18 = sadd.s32 1, %s14
  $region7: #{lstm_encoder_forward.1} parent=0 // loop_footer_branch
    %13 = sbr.rel target = $region3
  $region8: #{lstm_encoder_forward.1} parent=0 // loop_exit
    _
  %2885 = vsyncmov [#allocation3]
  %s2886 = vpop.sfrf %2885
  %p2887 = scmp.eq.s32.totalorder %s2886, 0
  %p2888 = pneg %p2887
  %2890 = shalt.err (%p2888)

</llo_original>
